<compile_context>
chip_gen: v7x
topology: tpu7x:2x2x1
jax: 0.10.0
libtpu: 0.0.40
codegen_flags: <defaults>
</compile_context>

<pallas_src>
import numpy as np
import jax
import jax.numpy as jnp
from jax import lax
from jax.experimental import pallas as pl
from jax.experimental.pallas import tpu as pltpu


def _round_up(x, m):
    return (x + m - 1) // m * m


def global_block(nodes, edges, globals_, node_graph_ids, edge_graph_ids,
                 params, *, tile_rows=4096):
    """GlobalBlock forward. Returns updated globals [B, out_dim] (f32)."""
    w1e, w1n, w1g, b1, w2, b2 = params
    B, Dg = globals_.shape
    N, Dn = nodes.shape
    E, De = edges.shape
    H = w1e.shape[1]
    Dout = w2.shape[1]

    # Row tile: when a stream is tiled, the tile must be a multiple of 128
    # (lane constraint from the [1, rows] id arrays); when a stream fits in a
    # single tile we use its exact row count (block dim == full dim is legal).
    tile_rows = max(128, _round_up(tile_rows, 128))
    tile_e = E if E <= tile_rows else tile_rows
    tile_n = N if N <= tile_rows else tile_rows
    Ke = pl.cdiv(E, tile_e)
    Kn = pl.cdiv(N, tile_n)
    K = max(Ke, Kn)

    hiprec = lax.Precision.HIGHEST

    def kernel(eid_ref, nid_ref, edges_ref, nodes_ref, g_ref,
               w1e_ref, w1n_ref, w1g_ref, b1_ref, w2_ref, b2_ref,
               out_ref, eacc_ref, nacc_ref):
        k = pl.program_id(0)

        @pl.when(k == 0)
        def _init():
            eacc_ref[...] = jnp.zeros_like(eacc_ref)
            nacc_ref[...] = jnp.zeros_like(nacc_ref)

        def _accum(acc_ref, id_ref, feat_ref, tile, count):
            # unsorted_segment_sum of this row tile as a one-hot MXU matmul.
            feats = feat_ref[...]
            if count % tile != 0:
                # Partial last block: the overhang rows hold stale VMEM (can
                # be NaN/Inf), so mask the data by row index, not by id.
                rows = k * tile + lax.broadcasted_iota(jnp.int32, (tile, 1), 0)
                feats = jnp.where(rows < count, feats, 0.0)
            seg = lax.broadcasted_iota(jnp.int32, (B, tile), 0)
            oh = (seg == id_ref[...]).astype(jnp.float32)
            acc_ref[...] += jnp.dot(oh, feats,
                                    preferred_element_type=jnp.float32,
                                    precision=hiprec)

        def _edge_step():
            _accum(eacc_ref, eid_ref, edges_ref, tile_e, E)

        def _node_step():
            _accum(nacc_ref, nid_ref, nodes_ref, tile_n, N)

        # Decoupled trip counts: skip the exhausted stream's work.
        if Ke == K:
            _edge_step()
        else:
            pl.when(k < Ke)(_edge_step)
        if Kn == K:
            _node_step()
        else:
            pl.when(k < Kn)(_node_step)

        @pl.when(k == K - 1)
        def _epilogue():
            # collected_globals @ W1 + b1, with W1 pre-split along the concat
            # axis (edges | nodes | globals) so no in-kernel concat is needed.
            h = (jnp.dot(eacc_ref[...], w1e_ref[...],
                         preferred_element_type=jnp.float32, precision=hiprec)
                 + jnp.dot(nacc_ref[...], w1n_ref[...],
                           preferred_element_type=jnp.float32, precision=hiprec)
                 + jnp.dot(g_ref[...], w1g_ref[...],
                           preferred_element_type=jnp.float32, precision=hiprec)
                 + b1_ref[...])
            h = jnp.maximum(h, 0.0)  # ReLU
            out_ref[...] = (jnp.dot(h, w2_ref[...],
                                    preferred_element_type=jnp.float32,
                                    precision=hiprec)
                            + b2_ref[...])

    # Ids as [1, rows] int32 (tiny; no feature-stream copies are made).
    eid = edge_graph_ids.astype(jnp.int32).reshape(1, E)
    nid = node_graph_ids.astype(jnp.int32).reshape(1, N)

    def _const(shape):
        return pl.BlockSpec(shape, lambda k, _s=shape: (0,) * len(_s))

    # Clamp the exhausted stream's block index so Pallas skips the re-DMA.
    grid_spec = pltpu.PrefetchScalarGridSpec(
        num_scalar_prefetch=0,
        grid=(K,),
        in_specs=[
            pl.BlockSpec((1, tile_e), lambda k: (0, jnp.minimum(k, Ke - 1))),
            pl.BlockSpec((1, tile_n), lambda k: (0, jnp.minimum(k, Kn - 1))),
            pl.BlockSpec((tile_e, De), lambda k: (jnp.minimum(k, Ke - 1), 0)),
            pl.BlockSpec((tile_n, Dn), lambda k: (jnp.minimum(k, Kn - 1), 0)),
            _const((B, Dg)),                              # globals
            _const((De, H)), _const((Dn, H)),             # w1e, w1n
            _const((Dg, H)), _const((1, H)),              # w1g, b1
            _const((H, Dout)), _const((1, Dout)),         # w2, b2
        ],
        out_specs=pl.BlockSpec((B, Dout), lambda k: (0, 0)),
        scratch_shapes=[
            pltpu.VMEM((B, De), jnp.float32),   # edge aggregate
            pltpu.VMEM((B, Dn), jnp.float32),   # node aggregate
        ],
    )

    flops = (2 * B * (Ke * tile_e * De + Kn * tile_n * Dn)
             + 2 * B * ((De + Dn + Dg) * H + H * Dout))
    bytes_accessed = 4 * (E * De + N * Dn + E + N + B * Dg
                          + (De + Dn + Dg) * H + H + H * Dout + Dout
                          + B * Dout)

    return pl.pallas_call(
        kernel,
        out_shape=jax.ShapeDtypeStruct((B, Dout), jnp.float32),
        grid_spec=grid_spec,
        compiler_params=pltpu.CompilerParams(
            dimension_semantics=("arbitrary",),
            vmem_limit_bytes=32 * 1024 * 1024,
        ),
        cost_estimate=pl.CostEstimate(flops=int(flops), transcendentals=0,
                                      bytes_accessed=int(bytes_accessed)),
    )(eid, nid, edges, nodes, globals_,
      w1e, w1n, w1g, b1, w2, b2)


def _reference(nodes, edges, globals_, node_graph_ids, edge_graph_ids, params):
    B = globals_.shape[0]
    hiprec = lax.Precision.HIGHEST
    edge_agg = jax.ops.segment_sum(edges, edge_graph_ids, num_segments=B)
    node_agg = jax.ops.segment_sum(nodes, node_graph_ids, num_segments=B)
    collected = jnp.concatenate([edge_agg, node_agg, globals_], axis=-1)
    w1e, w1n, w1g, b1, w2, b2 = params
    w1 = jnp.concatenate([w1e, w1n, w1g], axis=0)
    h = jnp.maximum(jnp.dot(collected, w1, precision=hiprec) + b1, 0.0)
    return jnp.dot(h, w2, precision=hiprec) + b2


if __name__ == "__main__":
    # Small synthetic hypergraph batch.
    B = 4                 # number of graphs
    node_dim = 16
    edge_dim = 12
    global_dim = 8
    hidden_dim = 32
    out_dim = 32
    n_node = np.array([83, 77, 81, 79], dtype=np.int32)   # 320 nodes
    n_edge = np.array([52, 49, 55, 44], dtype=np.int32)   # 200 edges
    N_total = int(n_node.sum())
    E_total = int(n_edge.sum())

    key = jax.random.PRNGKey(0)
    k_nodes, k_edges, k_glob, k_w1, k_b1, k_w2, k_b2 = jax.random.split(key, 7)

    nodes = jax.random.normal(k_nodes, (N_total, node_dim), dtype=jnp.float32)
    edges = jax.random.normal(k_edges, (E_total, edge_dim), dtype=jnp.float32)
    globals_ = jax.random.normal(k_glob, (B, global_dim), dtype=jnp.float32)

    node_graph_ids = jnp.asarray(np.repeat(np.arange(B), n_node), dtype=jnp.int32)
    edge_graph_ids = jnp.asarray(np.repeat(np.arange(B), n_edge), dtype=jnp.int32)

    # Deterministic global_model params: Linear(edge+node+global -> hidden),
    # ReLU, Linear(hidden -> out).  First weight pre-split along the concat
    # axis (edges | nodes | globals ordering matches the forward pass).
    in_dim = edge_dim + node_dim + global_dim
    w1 = jax.random.normal(k_w1, (in_dim, hidden_dim), dtype=jnp.float32) * 0.1
    b1 = jax.random.normal(k_b1, (1, hidden_dim), dtype=jnp.float32) * 0.1
    w2 = jax.random.normal(k_w2, (hidden_dim, out_dim), dtype=jnp.float32) * 0.1
    b2 = jax.random.normal(k_b2, (1, out_dim), dtype=jnp.float32) * 0.1
    params = (w1[:edge_dim], w1[edge_dim:edge_dim + node_dim],
              w1[edge_dim + node_dim:], b1, w2, b2)

    ref = _reference(nodes, edges, globals_, node_graph_ids, edge_graph_ids,
                     params)

    # 1) Default tile (single-block path: full-dim blocks, no masking).
    out_single = jax.block_until_ready(
        global_block(nodes, edges, globals_, node_graph_ids, edge_graph_ids,
                     params))
    # 2) Small tile (multi-block path: partial last blocks, row masking,
    #    decoupled edge/node trip counts with clamped index_maps).
    out_tiled = jax.block_until_ready(
        global_block(nodes, edges, globals_, node_graph_ids, edge_graph_ids,
                     params, tile_rows=128))

    np.testing.assert_allclose(np.asarray(out_single), np.asarray(ref),
                               rtol=1e-4, atol=1e-4)
    np.testing.assert_allclose(np.asarray(out_tiled), np.asarray(ref),
                               rtol=1e-4, atol=1e-4)
    print("KERNEL_OK")
</pallas_src>

<mosaic_0001>
module attributes {stable_mosaic.version = 11 : i64} {
  func.func @kernel(%arg0: i32, %arg1: memref<1x200xi32, #tpu.memory_space<vmem>>, %arg2: memref<1x320xi32, #tpu.memory_space<vmem>>, %arg3: memref<200x12xf32, #tpu.memory_space<vmem>>, %arg4: memref<320x16xf32, #tpu.memory_space<vmem>>, %arg5: memref<4x8xf32, #tpu.memory_space<vmem>>, %arg6: memref<12x32xf32, #tpu.memory_space<vmem>>, %arg7: memref<16x32xf32, #tpu.memory_space<vmem>>, %arg8: memref<8x32xf32, #tpu.memory_space<vmem>>, %arg9: memref<1x32xf32, #tpu.memory_space<vmem>>, %arg10: memref<32x32xf32, #tpu.memory_space<vmem>>, %arg11: memref<1x32xf32, #tpu.memory_space<vmem>>, %arg12: memref<4x32xf32, #tpu.memory_space<vmem>>, %arg13: memref<4x12xf32, #tpu.memory_space<vmem>>, %arg14: memref<4x16xf32, #tpu.memory_space<vmem>>) attributes {dimension_semantics = [#tpu.dimension_semantics<arbitrary>], iteration_bounds = array<i64: 1>, scalar_prefetch = 0 : i64, scratch_operands = 2 : i64, tpu.core_type = #tpu.core_type<tc>, window_params = [{transform_indices = @transform_0, window_bounds = array<i64: 1, 200>}, {transform_indices = @transform_1, window_bounds = array<i64: 1, 320>}, {transform_indices = @transform_2, window_bounds = array<i64: 200, 12>}, {transform_indices = @transform_3, window_bounds = array<i64: 320, 16>}, {pipeline_mode = #tpu.pipeline_mode<synchronous>, transform_indices = @transform_4, window_bounds = array<i64: 4, 8>}, {pipeline_mode = #tpu.pipeline_mode<synchronous>, transform_indices = @transform_5, window_bounds = array<i64: 12, 32>}, {pipeline_mode = #tpu.pipeline_mode<synchronous>, transform_indices = @transform_6, window_bounds = array<i64: 16, 32>}, {pipeline_mode = #tpu.pipeline_mode<synchronous>, transform_indices = @transform_7, window_bounds = array<i64: 8, 32>}, {pipeline_mode = #tpu.pipeline_mode<synchronous>, transform_indices = @transform_8, window_bounds = array<i64: 1, 32>}, {pipeline_mode = #tpu.pipeline_mode<synchronous>, transform_indices = @transform_9, window_bounds = array<i64: 32, 32>}, {pipeline_mode = #tpu.pipeline_mode<synchronous>, transform_indices = @transform_10, window_bounds = array<i64: 1, 32>}, {pipeline_mode = #tpu.pipeline_mode<synchronous>, transform_indices = @transform_11, window_bounds = array<i64: 4, 32>}]} {
    %c0_i32 = arith.constant 0 : i32
    %0 = arith.cmpi eq, %arg0, %c0_i32 : i32
    %1 = arith.extui %0 : i1 to i32
    %c0_i32_0 = arith.constant 0 : i32
    %2 = arith.cmpi ne, %1, %c0_i32_0 : i32
    scf.if %2 {
      %cst_19 = arith.constant 0.000000e+00 : f32
      %28 = vector.broadcast %cst_19 : f32 to vector<4x12xf32>
      %c0_20 = arith.constant 0 : index
      %c0_21 = arith.constant 0 : index
      %29 = vector.load %arg13[%c0_20, %c0_21] : memref<4x12xf32, #tpu.memory_space<vmem>>, vector<4x12xf32>
      tpu.vector_store %arg13[%c0_20, %c0_21], %28 {strides = array<i32>} : memref<4x12xf32, #tpu.memory_space<vmem>>, vector<4x12xf32>,
      %cst_22 = arith.constant 0.000000e+00 : f32
      %30 = vector.broadcast %cst_22 : f32 to vector<4x16xf32>
      %c0_23 = arith.constant 0 : index
      %c0_24 = arith.constant 0 : index
      %31 = vector.load %arg14[%c0_23, %c0_24] : memref<4x16xf32, #tpu.memory_space<vmem>>, vector<4x16xf32>
      tpu.vector_store %arg14[%c0_23, %c0_24], %30 {strides = array<i32>} : memref<4x16xf32, #tpu.memory_space<vmem>>, vector<4x16xf32>,
    } else {
    }
    %c0 = arith.constant 0 : index
    %c0_1 = arith.constant 0 : index
    %3 = vector.load %arg3[%c0, %c0_1] : memref<200x12xf32, #tpu.memory_space<vmem>>, vector<200x12xf32>
    %4 = tpu.iota {dimensions = array<i32: 0>} : vector<4x200xi32>
    %c0_2 = arith.constant 0 : index
    %c0_3 = arith.constant 0 : index
    %5 = vector.load %arg1[%c0_2, %c0_3] : memref<1x200xi32, #tpu.memory_space<vmem>>, vector<1x200xi32>
    %6 = vector.broadcast %5 : vector<1x200xi32> to vector<4x200xi32>
    %7 = arith.cmpi eq, %4, %6 : vector<4x200xi32>
    %8 = arith.extui %7 : vector<4x200xi1> to vector<4x200xi32>
    %9 = arith.sitofp %8 : vector<4x200xi32> to vector<4x200xf32>
    %c0_4 = arith.constant 0 : index
    %c0_5 = arith.constant 0 : index
    %10 = vector.load %arg13[%c0_4, %c0_5] : memref<4x12xf32, #tpu.memory_space<vmem>>, vector<4x12xf32>
    %cst = arith.constant dense<0.000000e+00> : vector<4x12xf32>
    %11 = tpu.matmul %9, %3, %cst {dimension_numbers = #tpu.dot_dimension_numbers<[1], [0], [0], [1], [0, 0, 1, 1], [], []>, precision = #tpu.contract_precision<fp32>} : vector<4x200xf32>, vector<200x12xf32>, vector<4x12xf32> -> vector<4x12xf32>
    %12 = arith.addf %10, %11 : vector<4x12xf32>
    %c0_6 = arith.constant 0 : index
    %c0_7 = arith.constant 0 : index
    %13 = vector.load %arg13[%c0_6, %c0_7] : memref<4x12xf32, #tpu.memory_space<vmem>>, vector<4x12xf32>
    tpu.vector_store %arg13[%c0_6, %c0_7], %12 {strides = array<i32>} : memref<4x12xf32, #tpu.memory_space<vmem>>, vector<4x12xf32>,
    %c0_8 = arith.constant 0 : index
    %c0_9 = arith.constant 0 : index
    %14 = vector.load %arg4[%c0_8, %c0_9] : memref<320x16xf32, #tpu.memory_space<vmem>>, vector<320x16xf32>
    %15 = tpu.iota {dimensions = array<i32: 0>} : vector<4x320xi32>
    %c0_10 = arith.constant 0 : index
    %c0_11 = arith.constant 0 : index
    %16 = vector.load %arg2[%c0_10, %c0_11] : memref<1x320xi32, #tpu.memory_space<vmem>>, vector<1x320xi32>
    %17 = vector.broadcast %16 : vector<1x320xi32> to vector<4x320xi32>
    %18 = arith.cmpi eq, %15, %17 : vector<4x320xi32>
    %19 = arith.extui %18 : vector<4x320xi1> to vector<4x320xi32>
    %20 = arith.sitofp %19 : vector<4x320xi32> to vector<4x320xf32>
    %c0_12 = arith.constant 0 : index
    %c0_13 = arith.constant 0 : index
    %21 = vector.load %arg14[%c0_12, %c0_13] : memref<4x16xf32, #tpu.memory_space<vmem>>, vector<4x16xf32>
    %cst_14 = arith.constant dense<0.000000e+00> : vector<4x16xf32>
    %22 = tpu.matmul %20, %14, %cst_14 {dimension_numbers = #tpu.dot_dimension_numbers<[1], [0], [0], [1], [0, 0, 1, 1], [], []>, precision = #tpu.contract_precision<fp32>} : vector<4x320xf32>, vector<320x16xf32>, vector<4x16xf32> -> vector<4x16xf32>
    %23 = arith.addf %21, %22 : vector<4x16xf32>
    %c0_15 = arith.constant 0 : index
    %c0_16 = arith.constant 0 : index
    %24 = vector.load %arg14[%c0_15, %c0_16] : memref<4x16xf32, #tpu.memory_space<vmem>>, vector<4x16xf32>
    tpu.vector_store %arg14[%c0_15, %c0_16], %23 {strides = array<i32>} : memref<4x16xf32, #tpu.memory_space<vmem>>, vector<4x16xf32>,
    %c0_i32_17 = arith.constant 0 : i32
    %25 = arith.cmpi eq, %arg0, %c0_i32_17 : i32
    %26 = arith.extui %25 : i1 to i32
    %c0_i32_18 = arith.constant 0 : i32
    %27 = arith.cmpi ne, %26, %c0_i32_18 : i32
    scf.if %27 {
      %c0_19 = arith.constant 0 : index
      %c0_20 = arith.constant 0 : index
      %28 = vector.load %arg13[%c0_19, %c0_20] : memref<4x12xf32, #tpu.memory_space<vmem>>, vector<4x12xf32>
      %c0_21 = arith.constant 0 : index
      %c0_22 = arith.constant 0 : index
      %29 = vector.load %arg6[%c0_21, %c0_22] : memref<12x32xf32, #tpu.memory_space<vmem>>, vector<12x32xf32>
      %cst_23 = arith.constant dense<0.000000e+00> : vector<4x32xf32>
      %30 = tpu.matmul %28, %29, %cst_23 {dimension_numbers = #tpu.dot_dimension_numbers<[1], [0], [0], [1], [0, 0, 1, 1], [], []>, precision = #tpu.contract_precision<fp32>} : vector<4x12xf32>, vector<12x32xf32>, vector<4x32xf32> -> vector<4x32xf32>
      %c0_24 = arith.constant 0 : index
      %c0_25 = arith.constant 0 : index
      %31 = vector.load %arg14[%c0_24, %c0_25] : memref<4x16xf32, #tpu.memory_space<vmem>>, vector<4x16xf32>
      %c0_26 = arith.constant 0 : index
      %c0_27 = arith.constant 0 : index
      %32 = vector.load %arg7[%c0_26, %c0_27] : memref<16x32xf32, #tpu.memory_space<vmem>>, vector<16x32xf32>
      %cst_28 = arith.constant dense<0.000000e+00> : vector<4x32xf32>
      %33 = tpu.matmul %31, %32, %cst_28 {dimension_numbers = #tpu.dot_dimension_numbers<[1], [0], [0], [1], [0, 0, 1, 1], [], []>, precision = #tpu.contract_precision<fp32>} : vector<4x16xf32>, vector<16x32xf32>, vector<4x32xf32> -> vector<4x32xf32>
      %34 = arith.addf %30, %33 : vector<4x32xf32>
      %c0_29 = arith.constant 0 : index
      %c0_30 = arith.constant 0 : index
      %35 = vector.load %arg5[%c0_29, %c0_30] : memref<4x8xf32, #tpu.memory_space<vmem>>, vector<4x8xf32>
      %c0_31 = arith.constant 0 : index
      %c0_32 = arith.constant 0 : index
      %36 = vector.load %arg8[%c0_31, %c0_32] : memref<8x32xf32, #tpu.memory_space<vmem>>, vector<8x32xf32>
      %cst_33 = arith.constant dense<0.000000e+00> : vector<4x32xf32>
      %37 = tpu.matmul %35, %36, %cst_33 {dimension_numbers = #tpu.dot_dimension_numbers<[1], [0], [0], [1], [0, 0, 1, 1], [], []>, precision = #tpu.contract_precision<fp32>} : vector<4x8xf32>, vector<8x32xf32>, vector<4x32xf32> -> vector<4x32xf32>
      %38 = arith.addf %34, %37 : vector<4x32xf32>
      %c0_34 = arith.constant 0 : index
      %c0_35 = arith.constant 0 : index
      %39 = vector.load %arg9[%c0_34, %c0_35] : memref<1x32xf32, #tpu.memory_space<vmem>>, vector<1x32xf32>
      %40 = vector.broadcast %39 : vector<1x32xf32> to vector<4x32xf32>
      %41 = arith.addf %38, %40 : vector<4x32xf32>
      %cst_36 = arith.constant 0.000000e+00 : f32
      %42 = vector.broadcast %cst_36 : f32 to vector<4x32xf32>
      %43 = arith.maximumf %41, %42 : vector<4x32xf32>
      %c0_37 = arith.constant 0 : index
      %c0_38 = arith.constant 0 : index
      %44 = vector.load %arg10[%c0_37, %c0_38] : memref<32x32xf32, #tpu.memory_space<vmem>>, vector<32x32xf32>
      %cst_39 = arith.constant dense<0.000000e+00> : vector<4x32xf32>
      %45 = tpu.matmul %43, %44, %cst_39 {dimension_numbers = #tpu.dot_dimension_numbers<[1], [0], [0], [1], [0, 0, 1, 1], [], []>, precision = #tpu.contract_precision<fp32>} : vector<4x32xf32>, vector<32x32xf32>, vector<4x32xf32> -> vector<4x32xf32>
      %c0_40 = arith.constant 0 : index
      %c0_41 = arith.constant 0 : index
      %46 = vector.load %arg11[%c0_40, %c0_41] : memref<1x32xf32, #tpu.memory_space<vmem>>, vector<1x32xf32>
      %47 = vector.broadcast %46 : vector<1x32xf32> to vector<4x32xf32>
      %48 = arith.addf %45, %47 : vector<4x32xf32>
      %c0_42 = arith.constant 0 : index
      %c0_43 = arith.constant 0 : index
      %49 = vector.load %arg12[%c0_42, %c0_43] : memref<4x32xf32, #tpu.memory_space<vmem>>, vector<4x32xf32>
      tpu.vector_store %arg12[%c0_42, %c0_43], %48 {strides = array<i32>} : memref<4x32xf32, #tpu.memory_space<vmem>>, vector<4x32xf32>,
    } else {
    }
    return
  }
  func.func @transform_0(%arg0: i32) -> (i32, i32) {
    %c0_i32 = arith.constant 0 : i32
    %0 = arith.minsi %arg0, %c0_i32 : i32
    %c0_i32_0 = arith.constant 0 : i32
    %c0_i32_1 = arith.constant 0 : i32
    return %c0_i32_0, %0 : i32, i32
  }
  func.func @transform_1(%arg0: i32) -> (i32, i32) {
    %c0_i32 = arith.constant 0 : i32
    %0 = arith.minsi %arg0, %c0_i32 : i32
    %c0_i32_0 = arith.constant 0 : i32
    %c0_i32_1 = arith.constant 0 : i32
    return %c0_i32_0, %0 : i32, i32
  }
  func.func @transform_2(%arg0: i32) -> (i32, i32) {
    %c0_i32 = arith.constant 0 : i32
    %0 = arith.minsi %arg0, %c0_i32 : i32
    %c0_i32_0 = arith.constant 0 : i32
    %c0_i32_1 = arith.constant 0 : i32
    return %0, %c0_i32_0 : i32, i32
  }
  func.func @transform_3(%arg0: i32) -> (i32, i32) {
    %c0_i32 = arith.constant 0 : i32
    %0 = arith.minsi %arg0, %c0_i32 : i32
    %c0_i32_0 = arith.constant 0 : i32
    %c0_i32_1 = arith.constant 0 : i32
    return %0, %c0_i32_0 : i32, i32
  }
  func.func @transform_4(%arg0: i32) -> (i32, i32) {
    %c0_i32 = arith.constant 0 : i32
    %c0_i32_0 = arith.constant 0 : i32
    %c0_i32_1 = arith.constant 0 : i32
    return %c0_i32, %c0_i32_0 : i32, i32
  }
  func.func @transform_5(%arg0: i32) -> (i32, i32) {
    %c0_i32 = arith.constant 0 : i32
    %c0_i32_0 = arith.constant 0 : i32
    %c0_i32_1 = arith.constant 0 : i32
    return %c0_i32, %c0_i32_0 : i32, i32
  }
  func.func @transform_6(%arg0: i32) -> (i32, i32) {
    %c0_i32 = arith.constant 0 : i32
    %c0_i32_0 = arith.constant 0 : i32
    %c0_i32_1 = arith.constant 0 : i32
    return %c0_i32, %c0_i32_0 : i32, i32
  }
  func.func @transform_7(%arg0: i32) -> (i32, i32) {
    %c0_i32 = arith.constant 0 : i32
    %c0_i32_0 = arith.constant 0 : i32
    %c0_i32_1 = arith.constant 0 : i32
    return %c0_i32, %c0_i32_0 : i32, i32
  }
  func.func @transform_8(%arg0: i32) -> (i32, i32) {
    %c0_i32 = arith.constant 0 : i32
    %c0_i32_0 = arith.constant 0 : i32
    %c0_i32_1 = arith.constant 0 : i32
    return %c0_i32, %c0_i32_0 : i32, i32
  }
  func.func @transform_9(%arg0: i32) -> (i32, i32) {
    %c0_i32 = arith.constant 0 : i32
    %c0_i32_0 = arith.constant 0 : i32
    %c0_i32_1 = arith.constant 0 : i32
    return %c0_i32, %c0_i32_0 : i32, i32
  }
  func.func @transform_10(%arg0: i32) -> (i32, i32) {
    %c0_i32 = arith.constant 0 : i32
    %c0_i32_0 = arith.constant 0 : i32
    %c0_i32_1 = arith.constant 0 : i32
    return %c0_i32, %c0_i32_0 : i32, i32
  }
  func.func @transform_11(%arg0: i32) -> (i32, i32) {
    %c0_i32 = arith.constant 0 : i32
    %c0_i32_0 = arith.constant 0 : i32
    %c0_i32_1 = arith.constant 0 : i32
    return %c0_i32, %c0_i32_0 : i32, i32
  }
}

</mosaic_0001>

<llo_original>
// kernel: tpu_custom_call.1
$region0: #{tpu_custom_call.1}
  #allocation0 [shape = 'u32[]', space=smem, size = 0x4, offset = 0x4, fixed_abs, tag = 'smem constant byte address 0x4 - core index']
  #allocation1 [shape = 'u32[144,128]{1,0:T(1,128)}', space=vmem, size = 0x12000, scoped, tag = 'internal scratch']
  #allocation2 [shape = 'f32[4,12]{1,0:T(4,128)}', space=vmem, size = 0x800, scoped, tag = 'scratch operand']
  #allocation3 [shape = 'f32[4,16]{1,0:T(4,128)}', space=vmem, size = 0x800, scoped, tag = 'scratch operand']
  %s0 = inlined_call_operand.vmem [shape: s32[1,200], index: 0, kind: input, shape index: {}]
  %s1 = inlined_call_operand.vmem [shape: s32[1,320], index: 1, kind: input, shape index: {}]
  %s2 = inlined_call_operand.vmem [shape: f32[200,12], index: 2, kind: input, shape index: {}]
  %s3 = inlined_call_operand.vmem [shape: f32[320,16], index: 3, kind: input, shape index: {}]
  %s4 = inlined_call_operand.vmem [shape: f32[4,8], index: 4, kind: input, shape index: {}]
  %s5 = inlined_call_operand.vmem [shape: f32[12,32], index: 5, kind: input, shape index: {}]
  %s6 = inlined_call_operand.vmem [shape: f32[16,32], index: 6, kind: input, shape index: {}]
  %s7 = inlined_call_operand.vmem [shape: f32[8,32], index: 7, kind: input, shape index: {}]
  %s8 = inlined_call_operand.vmem [shape: f32[1,32], index: 8, kind: input, shape index: {}]
  %s9 = inlined_call_operand.vmem [shape: f32[32,32], index: 9, kind: input, shape index: {}]
  %s10 = inlined_call_operand.vmem [shape: f32[1,32], index: 10, kind: input, shape index: {}]
  %s11 = inlined_call_operand.hbm [shape: f32[4,32], index: 11, kind: output, shape index: {}]
  %s12 = sld [smem:[#allocation0]]
  $region62: #{tpu_custom_call.1} parent=0
    _
  %s14 = ssub.s32 1, %s12
  %s15 = scalar_select 0, %s14, %s12
  $region1: #{tpu_custom_call.1} parent=0
    #allocation4 [shape = 'u8[2048]{0}', space=vmem, size = 0x800, scoped, tag = 'output window, operand 0, single buffered']
    #allocation5 [shape = 's32[1]{0}', space=sflag, size = 0x4, scoped, tag = 'scoped memory for tpu_custom_call.1']
    %16 = vsyncpa [#allocation5], 0
    // Predicated region
    $region2: #{tpu_custom_call.1} parent=1 // pred_check
      _
    $region3: #{tpu_custom_call.1} parent=1 // pred_check_branch
      %18 = sbr.rel (0) target = $region5
    $region4: #{tpu_custom_call.1} parent=1 // pred_region
      _
    $region5: #{tpu_custom_call.1} parent=1 // pred_fallthru
      _
    // Predicated region
    $region6: #{tpu_custom_call.1} parent=1 // pred_check
      _
    $region7: #{tpu_custom_call.1} parent=1 // pred_check_branch
      %20 = sbr.rel (0) target = $region9
    $region8: #{tpu_custom_call.1} parent=1 // pred_region
      _
    $region9: #{tpu_custom_call.1} parent=1 // pred_fallthru
      _
    // Predicated region
    $region10: #{tpu_custom_call.1} parent=1 // pred_check
      _
    $region11: #{tpu_custom_call.1} parent=1 // pred_check_branch
      %22 = sbr.rel (0) target = $region13
    $region12: #{tpu_custom_call.1} parent=1 // pred_region
      _
    $region13: #{tpu_custom_call.1} parent=1 // pred_fallthru
      _
    // Predicated region
    $region14: #{tpu_custom_call.1} parent=1 // pred_check
      _
    $region15: #{tpu_custom_call.1} parent=1 // pred_check_branch
      %24 = sbr.rel (0) target = $region17
    $region16: #{tpu_custom_call.1} parent=1 // pred_region
      _
    $region17: #{tpu_custom_call.1} parent=1 // pred_fallthru
      _
    // Predicated region
    $region18: #{tpu_custom_call.1} parent=1 // pred_check
      _
    $region19: #{tpu_custom_call.1} parent=1 // pred_check_branch
      %26 = sbr.rel (0) target = $region21
    $region20: #{tpu_custom_call.1} parent=1 // pred_region
      _
    $region21: #{tpu_custom_call.1} parent=1 // pred_fallthru
      _
    // Predicated region
    $region22: #{tpu_custom_call.1} parent=1 // pred_check
      _
    $region23: #{tpu_custom_call.1} parent=1 // pred_check_branch
      %28 = sbr.rel (0) target = $region25
    $region24: #{tpu_custom_call.1} parent=1 // pred_region
      _
    $region25: #{tpu_custom_call.1} parent=1 // pred_fallthru
      _
    // Predicated region
    $region26: #{tpu_custom_call.1} parent=1 // pred_check
      _
    $region27: #{tpu_custom_call.1} parent=1 // pred_check_branch
      %30 = sbr.rel (0) target = $region29
    $region28: #{tpu_custom_call.1} parent=1 // pred_region
      _
    $region29: #{tpu_custom_call.1} parent=1 // pred_fallthru
      _
    // Predicated region
    $region30: #{tpu_custom_call.1} parent=1 // pred_check
      _
    $region31: #{tpu_custom_call.1} parent=1 // pred_check_branch
      %32 = sbr.rel (0) target = $region33
    $region32: #{tpu_custom_call.1} parent=1 // pred_region
      _
    $region33: #{tpu_custom_call.1} parent=1 // pred_fallthru
      _
    // Predicated region
    $region34: #{tpu_custom_call.1} parent=1 // pred_check
      _
    $region35: #{tpu_custom_call.1} parent=1 // pred_check_branch
      %34 = sbr.rel (0) target = $region37
    $region36: #{tpu_custom_call.1} parent=1 // pred_region
      _
    $region37: #{tpu_custom_call.1} parent=1 // pred_fallthru
      _
    // Predicated region
    $region38: #{tpu_custom_call.1} parent=1 // pred_check
      _
    $region39: #{tpu_custom_call.1} parent=1 // pred_check_branch
      %36 = sbr.rel (0) target = $region41
    $region40: #{tpu_custom_call.1} parent=1 // pred_region
      _
    $region41: #{tpu_custom_call.1} parent=1 // pred_fallthru
      _
    // Predicated region
    $region42: #{tpu_custom_call.1} parent=1 // pred_check
      _
    $region43: #{tpu_custom_call.1} parent=1 // pred_check_branch
      %38 = sbr.rel (0) target = $region45
    $region44: #{tpu_custom_call.1} parent=1 // pred_region
      _
    $region45: #{tpu_custom_call.1} parent=1 // pred_fallthru
      _
    %p39 = scmp.eq.s32.totalorder 0, 0
    // Predicated region
    $region46: #{tpu_custom_call.1} parent=1 // pred_check
      %p40 = pneg %p39
    $region47: #{tpu_custom_call.1} parent=1 // pred_check_branch
      %42 = sbr.rel (%p40) target = $region49
    $region48: #{tpu_custom_call.1} parent=1 // pred_region
      %vm43 = vcmask 93184
      %44 = vst.msk [vmem:[#allocation2] sm:$0xf] %vm43, 0.0
      %vm45 = vcmask 125952
      %46 = vst.msk [vmem:[#allocation3] sm:$0xf] %vm45, 0.0
    $region49: #{tpu_custom_call.1} parent=1 // pred_fallthru
      _
    %v47 = vld [vmem:[%s2] sm:$0xff]
    %v48 = vld [vmem:[%s2 + $0x8] sm:$0xff]
    %v49 = vld [vmem:[%s2 + $0x10] sm:$0xff]
    %v50 = vld [vmem:[%s2 + $0x18] sm:$0xff]
    %v51 = vld [vmem:[%s2 + $0x20] sm:$0xff]
    %v52 = vld [vmem:[%s2 + $0x28] sm:$0xff]
    %v53 = vld [vmem:[%s2 + $0x30] sm:$0xff]
    %v54 = vld [vmem:[%s2 + $0x38] sm:$0xff]
    %v55 = vld [vmem:[%s2 + $0x40] sm:$0xff]
    %v56 = vld [vmem:[%s2 + $0x48] sm:$0xff]
    %v57 = vld [vmem:[%s2 + $0x50] sm:$0xff]
    %v58 = vld [vmem:[%s2 + $0x58] sm:$0xff]
    %v59 = vld [vmem:[%s2 + $0x60] sm:$0xff]
    %v60 = vld [vmem:[%s2 + $0x68] sm:$0xff]
    %v61 = vld [vmem:[%s2 + $0x70] sm:$0xff]
    %v62 = vld [vmem:[%s2 + $0x78] sm:$0xff]
    %v63 = vld [vmem:[%s2 + $0x80] sm:$0xff]
    %v64 = vld [vmem:[%s2 + $0x88] sm:$0xff]
    %v65 = vld [vmem:[%s2 + $0x90] sm:$0xff]
    %v66 = vld [vmem:[%s2 + $0x98] sm:$0xff]
    %v67 = vld [vmem:[%s2 + $0xa0] sm:$0xff]
    %v68 = vld [vmem:[%s2 + $0xa8] sm:$0xff]
    %v69 = vld [vmem:[%s2 + $0xb0] sm:$0xff]
    %v70 = vld [vmem:[%s2 + $0xb8] sm:$0xff]
    %v71 = vld [vmem:[%s2 + $0xc0] sm:$0xff]
    %v72 = vlaneseq
    %v73 = vshrl.u32 %v72, 7
    %v74 = vld [vmem:[%s0] sm:$0x3]
    %v75 = vlaneseq
    %v76 = vshrl.u32 %v75, 7
    %v77 = vsub.s32 0, %v76
    %v78 = vrot.slane %v74, %v77
    %v79 = vlaneseq
    %v80 = vshrl.u32 %v79, 7
    %v81 = vsub.s32 1, %v80
    %v82 = vrot.slane %v74, %v81
    %vm83 = vcmp.eq.s32.totalorder %v73, %v78
    %vm84 = vcmp.eq.s32.totalorder %v73, %v82
    %v85 = vsel %vm83, 1, 0
    %v86 = vsel %vm84, 1, 0
    %v87 = vcvt.s32.f32 %v85
    %v88 = vcvt.s32.f32 %v86
    %v89 = vld [vmem:[#allocation2] sm:$0xf]
    %vm90 = vcmask 588800
    %v92 = vsel %vm90, %v88, 0
    %94 = vmatprep.subr.mxu0 0.0
    %v95 = vand.u32 %v47, 4294901760
    %96 = vmatpush1.msra.mxu0 %v95
    %97 = vmatprep.subr.mxu0 0.0
    %v98 = vand.u32 %v48, 4294901760
    %99 = vmatpush1.msra.mxu0 %v98
    %100 = vmatprep.subr.mxu0 0.0
    %v101 = vand.u32 %v49, 4294901760
    %102 = vmatpush1.msra.mxu0 %v101
    %103 = vmatprep.subr.mxu0 0.0
    %v104 = vand.u32 %v50, 4294901760
    %105 = vmatpush1.msra.mxu0 %v104
    %106 = vmatprep.subr.mxu0 0.0
    %v107 = vand.u32 %v51, 4294901760
    %108 = vmatpush1.msra.mxu0 %v107
    %109 = vmatprep.subr.mxu0 0.0
    %v110 = vand.u32 %v52, 4294901760
    %111 = vmatpush1.msra.mxu0 %v110
    %112 = vmatprep.subr.mxu0 0.0
    %v113 = vand.u32 %v53, 4294901760
    %114 = vmatpush1.msra.mxu0 %v113
    %115 = vmatprep.subr.mxu0 0.0
    %v116 = vand.u32 %v54, 4294901760
    %117 = vmatpush1.msra.mxu0 %v116
    %118 = vmatprep.subr.mxu0 0.0
    %v119 = vand.u32 %v55, 4294901760
    %120 = vmatpush1.msra.mxu0 %v119
    %121 = vmatprep.subr.mxu0 0.0
    %v122 = vand.u32 %v56, 4294901760
    %123 = vmatpush1.msra.mxu0 %v122
    %124 = vmatprep.subr.mxu0 0.0
    %v125 = vand.u32 %v57, 4294901760
    %126 = vmatpush1.msra.mxu0 %v125
    %127 = vmatprep.subr.mxu0 0.0
    %v128 = vand.u32 %v58, 4294901760
    %129 = vmatpush1.msra.mxu0 %v128
    %130 = vmatprep.subr.mxu0 0.0
    %v131 = vand.u32 %v59, 4294901760
    %132 = vmatpush1.msra.mxu0 %v131
    %133 = vmatprep.subr.mxu0 0.0
    %v134 = vand.u32 %v60, 4294901760
    %135 = vmatpush1.msra.mxu0 %v134
    %136 = vmatprep.subr.mxu0 0.0
    %v137 = vand.u32 %v61, 4294901760
    %138 = vmatpush1.msra.mxu0 %v137
    %139 = vmatprep.subr.mxu0 0.0
    %v140 = vand.u32 %v62, 4294901760
    %141 = vmatpush1.msra.mxu0 %v140
    %142 = vmatprep.subr.mxu0 0.0
    %v143 = vand.u32 %v63, 4294901760
    %144 = vmatpush1.msra.mxu0 %v143
    %145 = vmatprep.subr.mxu0 0.0
    %v146 = vand.u32 %v64, 4294901760
    %147 = vmatpush1.msra.mxu0 %v146
    %148 = vmatprep.subr.mxu0 0.0
    %v149 = vand.u32 %v65, 4294901760
    %150 = vmatpush1.msra.mxu0 %v149
    %151 = vmatprep.subr.mxu0 0.0
    %v152 = vand.u32 %v66, 4294901760
    %153 = vmatpush1.msra.mxu0 %v152
    %154 = vmatprep.subr.mxu0 0.0
    %v155 = vand.u32 %v67, 4294901760
    %156 = vmatpush1.msra.mxu0 %v155
    %157 = vmatprep.subr.mxu0 0.0
    %v158 = vand.u32 %v68, 4294901760
    %159 = vmatpush1.msra.mxu0 %v158
    %160 = vmatprep.subr.mxu0 0.0
    %v161 = vand.u32 %v69, 4294901760
    %162 = vmatpush1.msra.mxu0 %v161
    %163 = vmatprep.subr.mxu0 0.0
    %v164 = vand.u32 %v70, 4294901760
    %165 = vmatpush1.msra.mxu0 %v164
    %166 = vmatprep.subr.mxu0 0.0
    %v167 = vand.u32 %v71, 4294901760
    %168 = vmatpush1.msra.mxu0 %v167
    %169 = vmatprep.subr.mxu0 0.0
    %170 = vmatpush1.msra.mxu0 0.0
    %171 = vmatprep.subr.mxu0 0.0
    %172 = vmatpush1.msra.mxu0 0.0
    %173 = vmatprep.subr.mxu0 0.0
    %174 = vmatpush1.msra.mxu0 0.0
    %175 = vmatprep.subr.mxu0 0.0
    %176 = vmatpush1.msra.mxu0 0.0
    %177 = vmatprep.subr.mxu0 0.0
    %178 = vmatpush1.msra.mxu0 0.0
    %179 = vmatprep.subr.mxu0 0.0
    %180 = vmatpush1.msra.mxu0 0.0
    %181 = vmatprep.subr.mxu0 0.0
    %182 = vmatpush1.msra.mxu0 0.0
    %v183 = vand.u32 %v92, 4294901760
    %v184 = vsub.f32 %v92, %v183
    %v185 = vand.u32 %v184, 4294901760
    %v186 = vsub.f32 %v184, %v185
    %v187 = vand.u32 %v186, 4294901760
    %188 = vmatprep.mubr.f32.mxu0 %v187
    %v189 = vand.u32 %v87, 4294901760
    %v190 = vsub.f32 %v87, %v189
    %v191 = vand.u32 %v190, 4294901760
    %v192 = vsub.f32 %v190, %v191
    %v193 = vand.u32 %v192, 4294901760
    %194 = vmatmul.mubr.f32.gmra.mrb[0].mxu0 %v193
    %v195 = vpop.f32.mrb[0].mxu0
    %v196 = vadd.f32 0.0, %v195
    %v197 = vpop.f32.mrb[0].mxu0
    %198 = vdwg.mxu0
    %199 = vmatprep.subr.mxu0 0.0
    %v200 = vand.u32 %v47, 4294901760
    %v201 = vsub.f32 %v47, %v200
    %v202 = vand.u32 %v201, 4294901760
    %v203 = vsub.f32 %v201, %v202
    %v204 = vand.u32 %v203, 4294901760
    %205 = vmatpush1.msra.mxu0 %v204
    %206 = vmatprep.subr.mxu0 0.0
    %v207 = vand.u32 %v48, 4294901760
    %v208 = vsub.f32 %v48, %v207
    %v209 = vand.u32 %v208, 4294901760
    %v210 = vsub.f32 %v208, %v209
    %v211 = vand.u32 %v210, 4294901760
    %212 = vmatpush1.msra.mxu0 %v211
    %213 = vmatprep.subr.mxu0 0.0
    %v214 = vand.u32 %v49, 4294901760
    %v215 = vsub.f32 %v49, %v214
    %v216 = vand.u32 %v215, 4294901760
    %v217 = vsub.f32 %v215, %v216
    %v218 = vand.u32 %v217, 4294901760
    %219 = vmatpush1.msra.mxu0 %v218
    %220 = vmatprep.subr.mxu0 0.0
    %v221 = vand.u32 %v50, 4294901760
    %v222 = vsub.f32 %v50, %v221
    %v223 = vand.u32 %v222, 4294901760
    %v224 = vsub.f32 %v222, %v223
    %v225 = vand.u32 %v224, 4294901760
    %226 = vmatpush1.msra.mxu0 %v225
    %227 = vmatprep.subr.mxu0 0.0
    %v228 = vand.u32 %v51, 4294901760
    %v229 = vsub.f32 %v51, %v228
    %v230 = vand.u32 %v229, 4294901760
    %v231 = vsub.f32 %v229, %v230
    %v232 = vand.u32 %v231, 4294901760
    %233 = vmatpush1.msra.mxu0 %v232
    %234 = vmatprep.subr.mxu0 0.0
    %v235 = vand.u32 %v52, 4294901760
    %v236 = vsub.f32 %v52, %v235
    %v237 = vand.u32 %v236, 4294901760
    %v238 = vsub.f32 %v236, %v237
    %v239 = vand.u32 %v238, 4294901760
    %240 = vmatpush1.msra.mxu0 %v239
    %241 = vmatprep.subr.mxu0 0.0
    %v242 = vand.u32 %v53, 4294901760
    %v243 = vsub.f32 %v53, %v242
    %v244 = vand.u32 %v243, 4294901760
    %v245 = vsub.f32 %v243, %v244
    %v246 = vand.u32 %v245, 4294901760
    %247 = vmatpush1.msra.mxu0 %v246
    %248 = vmatprep.subr.mxu0 0.0
    %v249 = vand.u32 %v54, 4294901760
    %v250 = vsub.f32 %v54, %v249
    %v251 = vand.u32 %v250, 4294901760
    %v252 = vsub.f32 %v250, %v251
    %v253 = vand.u32 %v252, 4294901760
    %254 = vmatpush1.msra.mxu0 %v253
    %255 = vmatprep.subr.mxu0 0.0
    %v256 = vand.u32 %v55, 4294901760
    %v257 = vsub.f32 %v55, %v256
    %v258 = vand.u32 %v257, 4294901760
    %v259 = vsub.f32 %v257, %v258
    %v260 = vand.u32 %v259, 4294901760
    %261 = vmatpush1.msra.mxu0 %v260
    %262 = vmatprep.subr.mxu0 0.0
    %v263 = vand.u32 %v56, 4294901760
    %v264 = vsub.f32 %v56, %v263
    %v265 = vand.u32 %v264, 4294901760
    %v266 = vsub.f32 %v264, %v265
    %v267 = vand.u32 %v266, 4294901760
    %268 = vmatpush1.msra.mxu0 %v267
    %269 = vmatprep.subr.mxu0 0.0
    %v270 = vand.u32 %v57, 4294901760
    %v271 = vsub.f32 %v57, %v270
    %v272 = vand.u32 %v271, 4294901760
    %v273 = vsub.f32 %v271, %v272
    %v274 = vand.u32 %v273, 4294901760
    %275 = vmatpush1.msra.mxu0 %v274
    %276 = vmatprep.subr.mxu0 0.0
    %v277 = vand.u32 %v58, 4294901760
    %v278 = vsub.f32 %v58, %v277
    %v279 = vand.u32 %v278, 4294901760
    %v280 = vsub.f32 %v278, %v279
    %v281 = vand.u32 %v280, 4294901760
    %282 = vmatpush1.msra.mxu0 %v281
    %283 = vmatprep.subr.mxu0 0.0
    %v284 = vand.u32 %v59, 4294901760
    %v285 = vsub.f32 %v59, %v284
    %v286 = vand.u32 %v285, 4294901760
    %v287 = vsub.f32 %v285, %v286
    %v288 = vand.u32 %v287, 4294901760
    %289 = vmatpush1.msra.mxu0 %v288
    %290 = vmatprep.subr.mxu0 0.0
    %v291 = vand.u32 %v60, 4294901760
    %v292 = vsub.f32 %v60, %v291
    %v293 = vand.u32 %v292, 4294901760
    %v294 = vsub.f32 %v292, %v293
    %v295 = vand.u32 %v294, 4294901760
    %296 = vmatpush1.msra.mxu0 %v295
    %297 = vmatprep.subr.mxu0 0.0
    %v298 = vand.u32 %v61, 4294901760
    %v299 = vsub.f32 %v61, %v298
    %v300 = vand.u32 %v299, 4294901760
    %v301 = vsub.f32 %v299, %v300
    %v302 = vand.u32 %v301, 4294901760
    %303 = vmatpush1.msra.mxu0 %v302
    %304 = vmatprep.subr.mxu0 0.0
    %v305 = vand.u32 %v62, 4294901760
    %v306 = vsub.f32 %v62, %v305
    %v307 = vand.u32 %v306, 4294901760
    %v308 = vsub.f32 %v306, %v307
    %v309 = vand.u32 %v308, 4294901760
    %310 = vmatpush1.msra.mxu0 %v309
    %311 = vmatprep.subr.mxu0 0.0
    %v312 = vand.u32 %v63, 4294901760
    %v313 = vsub.f32 %v63, %v312
    %v314 = vand.u32 %v313, 4294901760
    %v315 = vsub.f32 %v313, %v314
    %v316 = vand.u32 %v315, 4294901760
    %317 = vmatpush1.msra.mxu0 %v316
    %318 = vmatprep.subr.mxu0 0.0
    %v319 = vand.u32 %v64, 4294901760
    %v320 = vsub.f32 %v64, %v319
    %v321 = vand.u32 %v320, 4294901760
    %v322 = vsub.f32 %v320, %v321
    %v323 = vand.u32 %v322, 4294901760
    %324 = vmatpush1.msra.mxu0 %v323
    %325 = vmatprep.subr.mxu0 0.0
    %v326 = vand.u32 %v65, 4294901760
    %v327 = vsub.f32 %v65, %v326
    %v328 = vand.u32 %v327, 4294901760
    %v329 = vsub.f32 %v327, %v328
    %v330 = vand.u32 %v329, 4294901760
    %331 = vmatpush1.msra.mxu0 %v330
    %332 = vmatprep.subr.mxu0 0.0
    %v333 = vand.u32 %v66, 4294901760
    %v334 = vsub.f32 %v66, %v333
    %v335 = vand.u32 %v334, 4294901760
    %v336 = vsub.f32 %v334, %v335
    %v337 = vand.u32 %v336, 4294901760
    %338 = vmatpush1.msra.mxu0 %v337
    %339 = vmatprep.subr.mxu0 0.0
    %v340 = vand.u32 %v67, 4294901760
    %v341 = vsub.f32 %v67, %v340
    %v342 = vand.u32 %v341, 4294901760
    %v343 = vsub.f32 %v341, %v342
    %v344 = vand.u32 %v343, 4294901760
    %345 = vmatpush1.msra.mxu0 %v344
    %346 = vmatprep.subr.mxu0 0.0
    %v347 = vand.u32 %v68, 4294901760
    %v348 = vsub.f32 %v68, %v347
    %v349 = vand.u32 %v348, 4294901760
    %v350 = vsub.f32 %v348, %v349
    %v351 = vand.u32 %v350, 4294901760
    %352 = vmatpush1.msra.mxu0 %v351
    %353 = vmatprep.subr.mxu0 0.0
    %v354 = vand.u32 %v69, 4294901760
    %v355 = vsub.f32 %v69, %v354
    %v356 = vand.u32 %v355, 4294901760
    %v357 = vsub.f32 %v355, %v356
    %v358 = vand.u32 %v357, 4294901760
    %359 = vmatpush1.msra.mxu0 %v358
    %360 = vmatprep.subr.mxu0 0.0
    %v361 = vand.u32 %v70, 4294901760
    %v362 = vsub.f32 %v70, %v361
    %v363 = vand.u32 %v362, 4294901760
    %v364 = vsub.f32 %v362, %v363
    %v365 = vand.u32 %v364, 4294901760
    %366 = vmatpush1.msra.mxu0 %v365
    %367 = vmatprep.subr.mxu0 0.0
    %v368 = vand.u32 %v71, 4294901760
    %v369 = vsub.f32 %v71, %v368
    %v370 = vand.u32 %v369, 4294901760
    %v371 = vsub.f32 %v369, %v370
    %v372 = vand.u32 %v371, 4294901760
    %373 = vmatpush1.msra.mxu0 %v372
    %374 = vmatprep.subr.mxu0 0.0
    %375 = vmatpush1.msra.mxu0 0.0
    %376 = vmatprep.subr.mxu0 0.0
    %377 = vmatpush1.msra.mxu0 0.0
    %378 = vmatprep.subr.mxu0 0.0
    %379 = vmatpush1.msra.mxu0 0.0
    %380 = vmatprep.subr.mxu0 0.0
    %381 = vmatpush1.msra.mxu0 0.0
    %382 = vmatprep.subr.mxu0 0.0
    %383 = vmatpush1.msra.mxu0 0.0
    %384 = vmatprep.subr.mxu0 0.0
    %385 = vmatpush1.msra.mxu0 0.0
    %386 = vmatprep.subr.mxu0 0.0
    %387 = vmatpush1.msra.mxu0 0.0
    %v388 = vand.u32 %v92, 4294901760
    %389 = vmatprep.mubr.f32.mxu0 %v388
    %v390 = vand.u32 %v87, 4294901760
    %391 = vmatmul.mubr.f32.gmra.mrb[0].mxu0 %v390
    %v392 = vpop.f32.mrb[0].mxu0
    %v393 = vadd.f32 %v196, %v392
    %v394 = vpop.f32.mrb[0].mxu0
    %395 = vdwg.mxu0
    %396 = vmatprep.subr.mxu0 0.0
    %v397 = vand.u32 %v47, 4294901760
    %v398 = vsub.f32 %v47, %v397
    %399 = vmatpush1.msra.mxu0 %v398
    %400 = vmatprep.subr.mxu0 0.0
    %v401 = vand.u32 %v48, 4294901760
    %v402 = vsub.f32 %v48, %v401
    %403 = vmatpush1.msra.mxu0 %v402
    %404 = vmatprep.subr.mxu0 0.0
    %v405 = vand.u32 %v49, 4294901760
    %v406 = vsub.f32 %v49, %v405
    %407 = vmatpush1.msra.mxu0 %v406
    %408 = vmatprep.subr.mxu0 0.0
    %v409 = vand.u32 %v50, 4294901760
    %v410 = vsub.f32 %v50, %v409
    %411 = vmatpush1.msra.mxu0 %v410
    %412 = vmatprep.subr.mxu0 0.0
    %v413 = vand.u32 %v51, 4294901760
    %v414 = vsub.f32 %v51, %v413
    %415 = vmatpush1.msra.mxu0 %v414
    %416 = vmatprep.subr.mxu0 0.0
    %v417 = vand.u32 %v52, 4294901760
    %v418 = vsub.f32 %v52, %v417
    %419 = vmatpush1.msra.mxu0 %v418
    %420 = vmatprep.subr.mxu0 0.0
    %v421 = vand.u32 %v53, 4294901760
    %v422 = vsub.f32 %v53, %v421
    %423 = vmatpush1.msra.mxu0 %v422
    %424 = vmatprep.subr.mxu0 0.0
    %v425 = vand.u32 %v54, 4294901760
    %v426 = vsub.f32 %v54, %v425
    %427 = vmatpush1.msra.mxu0 %v426
    %428 = vmatprep.subr.mxu0 0.0
    %v429 = vand.u32 %v55, 4294901760
    %v430 = vsub.f32 %v55, %v429
    %431 = vmatpush1.msra.mxu0 %v430
    %432 = vmatprep.subr.mxu0 0.0
    %v433 = vand.u32 %v56, 4294901760
    %v434 = vsub.f32 %v56, %v433
    %435 = vmatpush1.msra.mxu0 %v434
    %436 = vmatprep.subr.mxu0 0.0
    %v437 = vand.u32 %v57, 4294901760
    %v438 = vsub.f32 %v57, %v437
    %439 = vmatpush1.msra.mxu0 %v438
    %440 = vmatprep.subr.mxu0 0.0
    %v441 = vand.u32 %v58, 4294901760
    %v442 = vsub.f32 %v58, %v441
    %443 = vmatpush1.msra.mxu0 %v442
    %444 = vmatprep.subr.mxu0 0.0
    %v445 = vand.u32 %v59, 4294901760
    %v446 = vsub.f32 %v59, %v445
    %447 = vmatpush1.msra.mxu0 %v446
    %448 = vmatprep.subr.mxu0 0.0
    %v449 = vand.u32 %v60, 4294901760
    %v450 = vsub.f32 %v60, %v449
    %451 = vmatpush1.msra.mxu0 %v450
    %452 = vmatprep.subr.mxu0 0.0
    %v453 = vand.u32 %v61, 4294901760
    %v454 = vsub.f32 %v61, %v453
    %455 = vmatpush1.msra.mxu0 %v454
    %456 = vmatprep.subr.mxu0 0.0
    %v457 = vand.u32 %v62, 4294901760
    %v458 = vsub.f32 %v62, %v457
    %459 = vmatpush1.msra.mxu0 %v458
    %460 = vmatprep.subr.mxu0 0.0
    %v461 = vand.u32 %v63, 4294901760
    %v462 = vsub.f32 %v63, %v461
    %463 = vmatpush1.msra.mxu0 %v462
    %464 = vmatprep.subr.mxu0 0.0
    %v465 = vand.u32 %v64, 4294901760
    %v466 = vsub.f32 %v64, %v465
    %467 = vmatpush1.msra.mxu0 %v466
    %468 = vmatprep.subr.mxu0 0.0
    %v469 = vand.u32 %v65, 4294901760
    %v470 = vsub.f32 %v65, %v469
    %471 = vmatpush1.msra.mxu0 %v470
    %472 = vmatprep.subr.mxu0 0.0
    %v473 = vand.u32 %v66, 4294901760
    %v474 = vsub.f32 %v66, %v473
    %475 = vmatpush1.msra.mxu0 %v474
    %476 = vmatprep.subr.mxu0 0.0
    %v477 = vand.u32 %v67, 4294901760
    %v478 = vsub.f32 %v67, %v477
    %479 = vmatpush1.msra.mxu0 %v478
    %480 = vmatprep.subr.mxu0 0.0
    %v481 = vand.u32 %v68, 4294901760
    %v482 = vsub.f32 %v68, %v481
    %483 = vmatpush1.msra.mxu0 %v482
    %484 = vmatprep.subr.mxu0 0.0
    %v485 = vand.u32 %v69, 4294901760
    %v486 = vsub.f32 %v69, %v485
    %487 = vmatpush1.msra.mxu0 %v486
    %488 = vmatprep.subr.mxu0 0.0
    %v489 = vand.u32 %v70, 4294901760
    %v490 = vsub.f32 %v70, %v489
    %491 = vmatpush1.msra.mxu0 %v490
    %492 = vmatprep.subr.mxu0 0.0
    %v493 = vand.u32 %v71, 4294901760
    %v494 = vsub.f32 %v71, %v493
    %495 = vmatpush1.msra.mxu0 %v494
    %496 = vmatprep.subr.mxu0 0.0
    %497 = vmatpush1.msra.mxu0 0.0
    %498 = vmatprep.subr.mxu0 0.0
    %499 = vmatpush1.msra.mxu0 0.0
    %500 = vmatprep.subr.mxu0 0.0
    %501 = vmatpush1.msra.mxu0 0.0
    %502 = vmatprep.subr.mxu0 0.0
    %503 = vmatpush1.msra.mxu0 0.0
    %504 = vmatprep.subr.mxu0 0.0
    %505 = vmatpush1.msra.mxu0 0.0
    %506 = vmatprep.subr.mxu0 0.0
    %507 = vmatpush1.msra.mxu0 0.0
    %508 = vmatprep.subr.mxu0 0.0
    %509 = vmatpush1.msra.mxu0 0.0
    %v510 = vand.u32 %v92, 4294901760
    %v511 = vsub.f32 %v92, %v510
    %512 = vmatprep.mubr.f32.mxu0 %v511
    %v513 = vand.u32 %v87, 4294901760
    %v514 = vsub.f32 %v87, %v513
    %515 = vmatmul.mubr.f32.gmra.mrb[0].mxu0 %v514
    %v516 = vpop.f32.mrb[0].mxu0
    %v517 = vadd.f32 %v393, %v516
    %v518 = vpop.f32.mrb[0].mxu0
    %519 = vdwg.mxu0
    %520 = vmatprep.subr.mxu0 0.0
    %v521 = vand.u32 %v47, 4294901760
    %522 = vmatpush1.msra.mxu0 %v521
    %523 = vmatprep.subr.mxu0 0.0
    %v524 = vand.u32 %v48, 4294901760
    %525 = vmatpush1.msra.mxu0 %v524
    %526 = vmatprep.subr.mxu0 0.0
    %v527 = vand.u32 %v49, 4294901760
    %528 = vmatpush1.msra.mxu0 %v527
    %529 = vmatprep.subr.mxu0 0.0
    %v530 = vand.u32 %v50, 4294901760
    %531 = vmatpush1.msra.mxu0 %v530
    %532 = vmatprep.subr.mxu0 0.0
    %v533 = vand.u32 %v51, 4294901760
    %534 = vmatpush1.msra.mxu0 %v533
    %535 = vmatprep.subr.mxu0 0.0
    %v536 = vand.u32 %v52, 4294901760
    %537 = vmatpush1.msra.mxu0 %v536
    %538 = vmatprep.subr.mxu0 0.0
    %v539 = vand.u32 %v53, 4294901760
    %540 = vmatpush1.msra.mxu0 %v539
    %541 = vmatprep.subr.mxu0 0.0
    %v542 = vand.u32 %v54, 4294901760
    %543 = vmatpush1.msra.mxu0 %v542
    %544 = vmatprep.subr.mxu0 0.0
    %v545 = vand.u32 %v55, 4294901760
    %546 = vmatpush1.msra.mxu0 %v545
    %547 = vmatprep.subr.mxu0 0.0
    %v548 = vand.u32 %v56, 4294901760
    %549 = vmatpush1.msra.mxu0 %v548
    %550 = vmatprep.subr.mxu0 0.0
    %v551 = vand.u32 %v57, 4294901760
    %552 = vmatpush1.msra.mxu0 %v551
    %553 = vmatprep.subr.mxu0 0.0
    %v554 = vand.u32 %v58, 4294901760
    %555 = vmatpush1.msra.mxu0 %v554
    %556 = vmatprep.subr.mxu0 0.0
    %v557 = vand.u32 %v59, 4294901760
    %558 = vmatpush1.msra.mxu0 %v557
    %559 = vmatprep.subr.mxu0 0.0
    %v560 = vand.u32 %v60, 4294901760
    %561 = vmatpush1.msra.mxu0 %v560
    %562 = vmatprep.subr.mxu0 0.0
    %v563 = vand.u32 %v61, 4294901760
    %564 = vmatpush1.msra.mxu0 %v563
    %565 = vmatprep.subr.mxu0 0.0
    %v566 = vand.u32 %v62, 4294901760
    %567 = vmatpush1.msra.mxu0 %v566
    %568 = vmatprep.subr.mxu0 0.0
    %v569 = vand.u32 %v63, 4294901760
    %570 = vmatpush1.msra.mxu0 %v569
    %571 = vmatprep.subr.mxu0 0.0
    %v572 = vand.u32 %v64, 4294901760
    %573 = vmatpush1.msra.mxu0 %v572
    %574 = vmatprep.subr.mxu0 0.0
    %v575 = vand.u32 %v65, 4294901760
    %576 = vmatpush1.msra.mxu0 %v575
    %577 = vmatprep.subr.mxu0 0.0
    %v578 = vand.u32 %v66, 4294901760
    %579 = vmatpush1.msra.mxu0 %v578
    %580 = vmatprep.subr.mxu0 0.0
    %v581 = vand.u32 %v67, 4294901760
    %582 = vmatpush1.msra.mxu0 %v581
    %583 = vmatprep.subr.mxu0 0.0
    %v584 = vand.u32 %v68, 4294901760
    %585 = vmatpush1.msra.mxu0 %v584
    %586 = vmatprep.subr.mxu0 0.0
    %v587 = vand.u32 %v69, 4294901760
    %588 = vmatpush1.msra.mxu0 %v587
    %589 = vmatprep.subr.mxu0 0.0
    %v590 = vand.u32 %v70, 4294901760
    %591 = vmatpush1.msra.mxu0 %v590
    %592 = vmatprep.subr.mxu0 0.0
    %v593 = vand.u32 %v71, 4294901760
    %594 = vmatpush1.msra.mxu0 %v593
    %595 = vmatprep.subr.mxu0 0.0
    %596 = vmatpush1.msra.mxu0 0.0
    %597 = vmatprep.subr.mxu0 0.0
    %598 = vmatpush1.msra.mxu0 0.0
    %599 = vmatprep.subr.mxu0 0.0
    %600 = vmatpush1.msra.mxu0 0.0
    %601 = vmatprep.subr.mxu0 0.0
    %602 = vmatpush1.msra.mxu0 0.0
    %603 = vmatprep.subr.mxu0 0.0
    %604 = vmatpush1.msra.mxu0 0.0
    %605 = vmatprep.subr.mxu0 0.0
    %606 = vmatpush1.msra.mxu0 0.0
    %607 = vmatprep.subr.mxu0 0.0
    %608 = vmatpush1.msra.mxu0 0.0
    %v609 = vand.u32 %v92, 4294901760
    %v610 = vsub.f32 %v92, %v609
    %v611 = vand.u32 %v610, 4294901760
    %612 = vmatprep.mubr.f32.mxu0 %v611
    %v613 = vand.u32 %v87, 4294901760
    %v614 = vsub.f32 %v87, %v613
    %v615 = vand.u32 %v614, 4294901760
    %616 = vmatmul.mubr.f32.gmra.mrb[0].mxu0 %v615
    %v617 = vpop.f32.mrb[0].mxu0
    %v618 = vadd.f32 %v517, %v617
    %v619 = vpop.f32.mrb[0].mxu0
    %620 = vdwg.mxu0
    %621 = vmatprep.subr.mxu0 0.0
    %v622 = vand.u32 %v47, 4294901760
    %v623 = vsub.f32 %v47, %v622
    %v624 = vand.u32 %v623, 4294901760
    %625 = vmatpush1.msra.mxu0 %v624
    %626 = vmatprep.subr.mxu0 0.0
    %v627 = vand.u32 %v48, 4294901760
    %v628 = vsub.f32 %v48, %v627
    %v629 = vand.u32 %v628, 4294901760
    %630 = vmatpush1.msra.mxu0 %v629
    %631 = vmatprep.subr.mxu0 0.0
    %v632 = vand.u32 %v49, 4294901760
    %v633 = vsub.f32 %v49, %v632
    %v634 = vand.u32 %v633, 4294901760
    %635 = vmatpush1.msra.mxu0 %v634
    %636 = vmatprep.subr.mxu0 0.0
    %v637 = vand.u32 %v50, 4294901760
    %v638 = vsub.f32 %v50, %v637
    %v639 = vand.u32 %v638, 4294901760
    %640 = vmatpush1.msra.mxu0 %v639
    %641 = vmatprep.subr.mxu0 0.0
    %v642 = vand.u32 %v51, 4294901760
    %v643 = vsub.f32 %v51, %v642
    %v644 = vand.u32 %v643, 4294901760
    %645 = vmatpush1.msra.mxu0 %v644
    %646 = vmatprep.subr.mxu0 0.0
    %v647 = vand.u32 %v52, 4294901760
    %v648 = vsub.f32 %v52, %v647
    %v649 = vand.u32 %v648, 4294901760
    %650 = vmatpush1.msra.mxu0 %v649
    %651 = vmatprep.subr.mxu0 0.0
    %v652 = vand.u32 %v53, 4294901760
    %v653 = vsub.f32 %v53, %v652
    %v654 = vand.u32 %v653, 4294901760
    %655 = vmatpush1.msra.mxu0 %v654
    %656 = vmatprep.subr.mxu0 0.0
    %v657 = vand.u32 %v54, 4294901760
    %v658 = vsub.f32 %v54, %v657
    %v659 = vand.u32 %v658, 4294901760
    %660 = vmatpush1.msra.mxu0 %v659
    %661 = vmatprep.subr.mxu0 0.0
    %v662 = vand.u32 %v55, 4294901760
    %v663 = vsub.f32 %v55, %v662
    %v664 = vand.u32 %v663, 4294901760
    %665 = vmatpush1.msra.mxu0 %v664
    %666 = vmatprep.subr.mxu0 0.0
    %v667 = vand.u32 %v56, 4294901760
    %v668 = vsub.f32 %v56, %v667
    %v669 = vand.u32 %v668, 4294901760
    %670 = vmatpush1.msra.mxu0 %v669
    %671 = vmatprep.subr.mxu0 0.0
    %v672 = vand.u32 %v57, 4294901760
    %v673 = vsub.f32 %v57, %v672
    %v674 = vand.u32 %v673, 4294901760
    %675 = vmatpush1.msra.mxu0 %v674
    %676 = vmatprep.subr.mxu0 0.0
    %v677 = vand.u32 %v58, 4294901760
    %v678 = vsub.f32 %v58, %v677
    %v679 = vand.u32 %v678, 4294901760
    %680 = vmatpush1.msra.mxu0 %v679
    %681 = vmatprep.subr.mxu0 0.0
    %v682 = vand.u32 %v59, 4294901760
    %v683 = vsub.f32 %v59, %v682
    %v684 = vand.u32 %v683, 4294901760
    %685 = vmatpush1.msra.mxu0 %v684
    %686 = vmatprep.subr.mxu0 0.0
    %v687 = vand.u32 %v60, 4294901760
    %v688 = vsub.f32 %v60, %v687
    %v689 = vand.u32 %v688, 4294901760
    %690 = vmatpush1.msra.mxu0 %v689
    %691 = vmatprep.subr.mxu0 0.0
    %v692 = vand.u32 %v61, 4294901760
    %v693 = vsub.f32 %v61, %v692
    %v694 = vand.u32 %v693, 4294901760
    %695 = vmatpush1.msra.mxu0 %v694
    %696 = vmatprep.subr.mxu0 0.0
    %v697 = vand.u32 %v62, 4294901760
    %v698 = vsub.f32 %v62, %v697
    %v699 = vand.u32 %v698, 4294901760
    %700 = vmatpush1.msra.mxu0 %v699
    %701 = vmatprep.subr.mxu0 0.0
    %v702 = vand.u32 %v63, 4294901760
    %v703 = vsub.f32 %v63, %v702
    %v704 = vand.u32 %v703, 4294901760
    %705 = vmatpush1.msra.mxu0 %v704
    %706 = vmatprep.subr.mxu0 0.0
    %v707 = vand.u32 %v64, 4294901760
    %v708 = vsub.f32 %v64, %v707
    %v709 = vand.u32 %v708, 4294901760
    %710 = vmatpush1.msra.mxu0 %v709
    %711 = vmatprep.subr.mxu0 0.0
    %v712 = vand.u32 %v65, 4294901760
    %v713 = vsub.f32 %v65, %v712
    %v714 = vand.u32 %v713, 4294901760
    %715 = vmatpush1.msra.mxu0 %v714
    %716 = vmatprep.subr.mxu0 0.0
    %v717 = vand.u32 %v66, 4294901760
    %v718 = vsub.f32 %v66, %v717
    %v719 = vand.u32 %v718, 4294901760
    %720 = vmatpush1.msra.mxu0 %v719
    %721 = vmatprep.subr.mxu0 0.0
    %v722 = vand.u32 %v67, 4294901760
    %v723 = vsub.f32 %v67, %v722
    %v724 = vand.u32 %v723, 4294901760
    %725 = vmatpush1.msra.mxu0 %v724
    %726 = vmatprep.subr.mxu0 0.0
    %v727 = vand.u32 %v68, 4294901760
    %v728 = vsub.f32 %v68, %v727
    %v729 = vand.u32 %v728, 4294901760
    %730 = vmatpush1.msra.mxu0 %v729
    %731 = vmatprep.subr.mxu0 0.0
    %v732 = vand.u32 %v69, 4294901760
    %v733 = vsub.f32 %v69, %v732
    %v734 = vand.u32 %v733, 4294901760
    %735 = vmatpush1.msra.mxu0 %v734
    %736 = vmatprep.subr.mxu0 0.0
    %v737 = vand.u32 %v70, 4294901760
    %v738 = vsub.f32 %v70, %v737
    %v739 = vand.u32 %v738, 4294901760
    %740 = vmatpush1.msra.mxu0 %v739
    %741 = vmatprep.subr.mxu0 0.0
    %v742 = vand.u32 %v71, 4294901760
    %v743 = vsub.f32 %v71, %v742
    %v744 = vand.u32 %v743, 4294901760
    %745 = vmatpush1.msra.mxu0 %v744
    %746 = vmatprep.subr.mxu0 0.0
    %747 = vmatpush1.msra.mxu0 0.0
    %748 = vmatprep.subr.mxu0 0.0
    %749 = vmatpush1.msra.mxu0 0.0
    %750 = vmatprep.subr.mxu0 0.0
    %751 = vmatpush1.msra.mxu0 0.0
    %752 = vmatprep.subr.mxu0 0.0
    %753 = vmatpush1.msra.mxu0 0.0
    %754 = vmatprep.subr.mxu0 0.0
    %755 = vmatpush1.msra.mxu0 0.0
    %756 = vmatprep.subr.mxu0 0.0
    %757 = vmatpush1.msra.mxu0 0.0
    %758 = vmatprep.subr.mxu0 0.0
    %759 = vmatpush1.msra.mxu0 0.0
    %v760 = vand.u32 %v92, 4294901760
    %761 = vmatprep.mubr.f32.mxu0 %v760
    %v762 = vand.u32 %v87, 4294901760
    %763 = vmatmul.mubr.f32.gmra.mrb[0].mxu0 %v762
    %v764 = vpop.f32.mrb[0].mxu0
    %v765 = vadd.f32 %v618, %v764
    %v766 = vpop.f32.mrb[0].mxu0
    %767 = vdwg.mxu0
    %768 = vmatprep.subr.mxu0 0.0
    %v769 = vand.u32 %v47, 4294901760
    %770 = vmatpush1.msra.mxu0 %v769
    %771 = vmatprep.subr.mxu0 0.0
    %v772 = vand.u32 %v48, 4294901760
    %773 = vmatpush1.msra.mxu0 %v772
    %774 = vmatprep.subr.mxu0 0.0
    %v775 = vand.u32 %v49, 4294901760
    %776 = vmatpush1.msra.mxu0 %v775
    %777 = vmatprep.subr.mxu0 0.0
    %v778 = vand.u32 %v50, 4294901760
    %779 = vmatpush1.msra.mxu0 %v778
    %780 = vmatprep.subr.mxu0 0.0
    %v781 = vand.u32 %v51, 4294901760
    %782 = vmatpush1.msra.mxu0 %v781
    %783 = vmatprep.subr.mxu0 0.0
    %v784 = vand.u32 %v52, 4294901760
    %785 = vmatpush1.msra.mxu0 %v784
    %786 = vmatprep.subr.mxu0 0.0
    %v787 = vand.u32 %v53, 4294901760
    %788 = vmatpush1.msra.mxu0 %v787
    %789 = vmatprep.subr.mxu0 0.0
    %v790 = vand.u32 %v54, 4294901760
    %791 = vmatpush1.msra.mxu0 %v790
    %792 = vmatprep.subr.mxu0 0.0
    %v793 = vand.u32 %v55, 4294901760
    %794 = vmatpush1.msra.mxu0 %v793
    %795 = vmatprep.subr.mxu0 0.0
    %v796 = vand.u32 %v56, 4294901760
    %797 = vmatpush1.msra.mxu0 %v796
    %798 = vmatprep.subr.mxu0 0.0
    %v799 = vand.u32 %v57, 4294901760
    %800 = vmatpush1.msra.mxu0 %v799
    %801 = vmatprep.subr.mxu0 0.0
    %v802 = vand.u32 %v58, 4294901760
    %803 = vmatpush1.msra.mxu0 %v802
    %804 = vmatprep.subr.mxu0 0.0
    %v805 = vand.u32 %v59, 4294901760
    %806 = vmatpush1.msra.mxu0 %v805
    %807 = vmatprep.subr.mxu0 0.0
    %v808 = vand.u32 %v60, 4294901760
    %809 = vmatpush1.msra.mxu0 %v808
    %810 = vmatprep.subr.mxu0 0.0
    %v811 = vand.u32 %v61, 4294901760
    %812 = vmatpush1.msra.mxu0 %v811
    %813 = vmatprep.subr.mxu0 0.0
    %v814 = vand.u32 %v62, 4294901760
    %815 = vmatpush1.msra.mxu0 %v814
    %816 = vmatprep.subr.mxu0 0.0
    %v817 = vand.u32 %v63, 4294901760
    %818 = vmatpush1.msra.mxu0 %v817
    %819 = vmatprep.subr.mxu0 0.0
    %v820 = vand.u32 %v64, 4294901760
    %821 = vmatpush1.msra.mxu0 %v820
    %822 = vmatprep.subr.mxu0 0.0
    %v823 = vand.u32 %v65, 4294901760
    %824 = vmatpush1.msra.mxu0 %v823
    %825 = vmatprep.subr.mxu0 0.0
    %v826 = vand.u32 %v66, 4294901760
    %827 = vmatpush1.msra.mxu0 %v826
    %828 = vmatprep.subr.mxu0 0.0
    %v829 = vand.u32 %v67, 4294901760
    %830 = vmatpush1.msra.mxu0 %v829
    %831 = vmatprep.subr.mxu0 0.0
    %v832 = vand.u32 %v68, 4294901760
    %833 = vmatpush1.msra.mxu0 %v832
    %834 = vmatprep.subr.mxu0 0.0
    %v835 = vand.u32 %v69, 4294901760
    %836 = vmatpush1.msra.mxu0 %v835
    %837 = vmatprep.subr.mxu0 0.0
    %v838 = vand.u32 %v70, 4294901760
    %839 = vmatpush1.msra.mxu0 %v838
    %840 = vmatprep.subr.mxu0 0.0
    %v841 = vand.u32 %v71, 4294901760
    %842 = vmatpush1.msra.mxu0 %v841
    %843 = vmatprep.subr.mxu0 0.0
    %844 = vmatpush1.msra.mxu0 0.0
    %845 = vmatprep.subr.mxu0 0.0
    %846 = vmatpush1.msra.mxu0 0.0
    %847 = vmatprep.subr.mxu0 0.0
    %848 = vmatpush1.msra.mxu0 0.0
    %849 = vmatprep.subr.mxu0 0.0
    %850 = vmatpush1.msra.mxu0 0.0
    %851 = vmatprep.subr.mxu0 0.0
    %852 = vmatpush1.msra.mxu0 0.0
    %853 = vmatprep.subr.mxu0 0.0
    %854 = vmatpush1.msra.mxu0 0.0
    %855 = vmatprep.subr.mxu0 0.0
    %856 = vmatpush1.msra.mxu0 0.0
    %v857 = vand.u32 %v92, 4294901760
    %858 = vmatprep.mubr.f32.mxu0 %v857
    %v859 = vand.u32 %v87, 4294901760
    %860 = vmatmul.mubr.f32.gmra.mrb[0].mxu0 %v859
    %v861 = vpop.f32.mrb[0].mxu0
    %v862 = vadd.f32 %v765, %v861
    %v863 = vpop.f32.mrb[0].mxu0
    %864 = vdwg.mxu0
    %v865 = vadd.f32 %v89, %v862
    %vm866 = vcmask 93184
    %867 = vst.msk [vmem:[#allocation2] sm:$0xf] %vm866, %v865
    %v868 = vld [vmem:[%s3] sm:$0xff]
    %v869 = vld [vmem:[%s3 + $0x8] sm:$0xff]
    %v870 = vld [vmem:[%s3 + $0x10] sm:$0xff]
    %v871 = vld [vmem:[%s3 + $0x18] sm:$0xff]
    %v872 = vld [vmem:[%s3 + $0x20] sm:$0xff]
    %v873 = vld [vmem:[%s3 + $0x28] sm:$0xff]
    %v874 = vld [vmem:[%s3 + $0x30] sm:$0xff]
    %v875 = vld [vmem:[%s3 + $0x38] sm:$0xff]
    %v876 = vld [vmem:[%s3 + $0x40] sm:$0xff]
    %v877 = vld [vmem:[%s3 + $0x48] sm:$0xff]
    %v878 = vld [vmem:[%s3 + $0x50] sm:$0xff]
    %v879 = vld [vmem:[%s3 + $0x58] sm:$0xff]
    %v880 = vld [vmem:[%s3 + $0x60] sm:$0xff]
    %v881 = vld [vmem:[%s3 + $0x68] sm:$0xff]
    %v882 = vld [vmem:[%s3 + $0x70] sm:$0xff]
    %v883 = vld [vmem:[%s3 + $0x78] sm:$0xff]
    %v884 = vld [vmem:[%s3 + $0x80] sm:$0xff]
    %v885 = vld [vmem:[%s3 + $0x88] sm:$0xff]
    %v886 = vld [vmem:[%s3 + $0x90] sm:$0xff]
    %v887 = vld [vmem:[%s3 + $0x98] sm:$0xff]
    %v888 = vld [vmem:[%s3 + $0xa0] sm:$0xff]
    %v889 = vld [vmem:[%s3 + $0xa8] sm:$0xff]
    %v890 = vld [vmem:[%s3 + $0xb0] sm:$0xff]
    %v891 = vld [vmem:[%s3 + $0xb8] sm:$0xff]
    %v892 = vld [vmem:[%s3 + $0xc0] sm:$0xff]
    %v893 = vld [vmem:[%s3 + $0xc8] sm:$0xff]
    %v894 = vld [vmem:[%s3 + $0xd0] sm:$0xff]
    %v895 = vld [vmem:[%s3 + $0xd8] sm:$0xff]
    %v896 = vld [vmem:[%s3 + $0xe0] sm:$0xff]
    %v897 = vld [vmem:[%s3 + $0xe8] sm:$0xff]
    %v898 = vld [vmem:[%s3 + $0xf0] sm:$0xff]
    %v899 = vld [vmem:[%s3 + $0xf8] sm:$0xff]
    %v900 = vld [vmem:[%s3 + $0x100] sm:$0xff]
    %v901 = vld [vmem:[%s3 + $0x108] sm:$0xff]
    %v902 = vld [vmem:[%s3 + $0x110] sm:$0xff]
    %v903 = vld [vmem:[%s3 + $0x118] sm:$0xff]
    %v904 = vld [vmem:[%s3 + $0x120] sm:$0xff]
    %v905 = vld [vmem:[%s3 + $0x128] sm:$0xff]
    %v906 = vld [vmem:[%s3 + $0x130] sm:$0xff]
    %v907 = vld [vmem:[%s3 + $0x138] sm:$0xff]
    %v908 = vld [vmem:[%s1] sm:$0x7]
    %v909 = vlaneseq
    %v910 = vshrl.u32 %v909, 7
    %v911 = vsub.s32 0, %v910
    %v912 = vrot.slane %v908, %v911
    %v913 = vlaneseq
    %v914 = vshrl.u32 %v913, 7
    %v915 = vsub.s32 1, %v914
    %v916 = vrot.slane %v908, %v915
    %v917 = vlaneseq
    %v918 = vshrl.u32 %v917, 7
    %v919 = vsub.s32 2, %v918
    %v920 = vrot.slane %v908, %v919
    %vm921 = vcmp.eq.s32.totalorder %v73, %v912
    %vm922 = vcmp.eq.s32.totalorder %v73, %v916
    %vm923 = vcmp.eq.s32.totalorder %v73, %v920
    %v924 = vsel %vm921, 1, 0
    %v925 = vsel %vm922, 1, 0
    %v926 = vsel %vm923, 1, 0
    %v927 = vcvt.s32.f32 %v924
    %v928 = vcvt.s32.f32 %v925
    %v929 = vcvt.s32.f32 %v926
    %v930 = vld [vmem:[#allocation3] sm:$0xf]
    %vm931 = vcmask 523264
    %v933 = vsel %vm931, %v929, 0
    %935 = vmatprep.subr.mxu0 0.0
    %v936 = vand.u32 %v868, 4294901760
    %937 = vmatpush1.msra.mxu0 %v936
    %938 = vmatprep.subr.mxu0 0.0
    %v939 = vand.u32 %v869, 4294901760
    %940 = vmatpush1.msra.mxu0 %v939
    %941 = vmatprep.subr.mxu0 0.0
    %v942 = vand.u32 %v870, 4294901760
    %943 = vmatpush1.msra.mxu0 %v942
    %944 = vmatprep.subr.mxu0 0.0
    %v945 = vand.u32 %v871, 4294901760
    %946 = vmatpush1.msra.mxu0 %v945
    %947 = vmatprep.subr.mxu0 0.0
    %v948 = vand.u32 %v872, 4294901760
    %949 = vmatpush1.msra.mxu0 %v948
    %950 = vmatprep.subr.mxu0 0.0
    %v951 = vand.u32 %v873, 4294901760
    %952 = vmatpush1.msra.mxu0 %v951
    %953 = vmatprep.subr.mxu0 0.0
    %v954 = vand.u32 %v874, 4294901760
    %955 = vmatpush1.msra.mxu0 %v954
    %956 = vmatprep.subr.mxu0 0.0
    %v957 = vand.u32 %v875, 4294901760
    %958 = vmatpush1.msra.mxu0 %v957
    %959 = vmatprep.subr.mxu0 0.0
    %v960 = vand.u32 %v876, 4294901760
    %961 = vmatpush1.msra.mxu0 %v960
    %962 = vmatprep.subr.mxu0 0.0
    %v963 = vand.u32 %v877, 4294901760
    %964 = vmatpush1.msra.mxu0 %v963
    %965 = vmatprep.subr.mxu0 0.0
    %v966 = vand.u32 %v878, 4294901760
    %967 = vmatpush1.msra.mxu0 %v966
    %968 = vmatprep.subr.mxu0 0.0
    %v969 = vand.u32 %v879, 4294901760
    %970 = vmatpush1.msra.mxu0 %v969
    %971 = vmatprep.subr.mxu0 0.0
    %v972 = vand.u32 %v880, 4294901760
    %973 = vmatpush1.msra.mxu0 %v972
    %974 = vmatprep.subr.mxu0 0.0
    %v975 = vand.u32 %v881, 4294901760
    %976 = vmatpush1.msra.mxu0 %v975
    %977 = vmatprep.subr.mxu0 0.0
    %v978 = vand.u32 %v882, 4294901760
    %979 = vmatpush1.msra.mxu0 %v978
    %980 = vmatprep.subr.mxu0 0.0
    %v981 = vand.u32 %v883, 4294901760
    %982 = vmatpush1.msra.mxu0 %v981
    %983 = vmatprep.subr.mxu0 0.0
    %v984 = vand.u32 %v884, 4294901760
    %985 = vmatpush1.msra.mxu0 %v984
    %986 = vmatprep.subr.mxu0 0.0
    %v987 = vand.u32 %v885, 4294901760
    %988 = vmatpush1.msra.mxu0 %v987
    %989 = vmatprep.subr.mxu0 0.0
    %v990 = vand.u32 %v886, 4294901760
    %991 = vmatpush1.msra.mxu0 %v990
    %992 = vmatprep.subr.mxu0 0.0
    %v993 = vand.u32 %v887, 4294901760
    %994 = vmatpush1.msra.mxu0 %v993
    %995 = vmatprep.subr.mxu0 0.0
    %v996 = vand.u32 %v888, 4294901760
    %997 = vmatpush1.msra.mxu0 %v996
    %998 = vmatprep.subr.mxu0 0.0
    %v999 = vand.u32 %v889, 4294901760
    %1000 = vmatpush1.msra.mxu0 %v999
    %1001 = vmatprep.subr.mxu0 0.0
    %v1002 = vand.u32 %v890, 4294901760
    %1003 = vmatpush1.msra.mxu0 %v1002
    %1004 = vmatprep.subr.mxu0 0.0
    %v1005 = vand.u32 %v891, 4294901760
    %1006 = vmatpush1.msra.mxu0 %v1005
    %1007 = vmatprep.subr.mxu0 0.0
    %v1008 = vand.u32 %v892, 4294901760
    %1009 = vmatpush1.msra.mxu0 %v1008
    %1010 = vmatprep.subr.mxu0 0.0
    %v1011 = vand.u32 %v893, 4294901760
    %1012 = vmatpush1.msra.mxu0 %v1011
    %1013 = vmatprep.subr.mxu0 0.0
    %v1014 = vand.u32 %v894, 4294901760
    %1015 = vmatpush1.msra.mxu0 %v1014
    %1016 = vmatprep.subr.mxu0 0.0
    %v1017 = vand.u32 %v895, 4294901760
    %1018 = vmatpush1.msra.mxu0 %v1017
    %1019 = vmatprep.subr.mxu0 0.0
    %v1020 = vand.u32 %v896, 4294901760
    %1021 = vmatpush1.msra.mxu0 %v1020
    %1022 = vmatprep.subr.mxu0 0.0
    %v1023 = vand.u32 %v897, 4294901760
    %1024 = vmatpush1.msra.mxu0 %v1023
    %1025 = vmatprep.subr.mxu0 0.0
    %v1026 = vand.u32 %v898, 4294901760
    %1027 = vmatpush1.msra.mxu0 %v1026
    %1028 = vmatprep.subr.mxu0 0.0
    %v1029 = vand.u32 %v899, 4294901760
    %1030 = vmatpush1.msra.mxu0 %v1029
    %v1031 = vand.u32 %v928, 4294901760
    %v1032 = vsub.f32 %v928, %v1031
    %v1033 = vand.u32 %v1032, 4294901760
    %v1034 = vsub.f32 %v1032, %v1033
    %v1035 = vand.u32 %v1034, 4294901760
    %1036 = vmatprep.mubr.f32.mxu0 %v1035
    %v1037 = vand.u32 %v927, 4294901760
    %v1038 = vsub.f32 %v927, %v1037
    %v1039 = vand.u32 %v1038, 4294901760
    %v1040 = vsub.f32 %v1038, %v1039
    %v1041 = vand.u32 %v1040, 4294901760
    %1042 = vmatmul.mubr.f32.gmra.mrb[0].mxu0 %v1041
    %v1043 = vpop.f32.mrb[0].mxu0
    %v1044 = vadd.f32 0.0, %v1043
    %v1045 = vpop.f32.mrb[0].mxu0
    %1046 = vdwg.mxu0
    %1047 = vmatprep.subr.mxu0 0.0
    %v1048 = vand.u32 %v868, 4294901760
    %v1049 = vsub.f32 %v868, %v1048
    %v1050 = vand.u32 %v1049, 4294901760
    %v1051 = vsub.f32 %v1049, %v1050
    %v1052 = vand.u32 %v1051, 4294901760
    %1053 = vmatpush1.msra.mxu0 %v1052
    %1054 = vmatprep.subr.mxu0 0.0
    %v1055 = vand.u32 %v869, 4294901760
    %v1056 = vsub.f32 %v869, %v1055
    %v1057 = vand.u32 %v1056, 4294901760
    %v1058 = vsub.f32 %v1056, %v1057
    %v1059 = vand.u32 %v1058, 4294901760
    %1060 = vmatpush1.msra.mxu0 %v1059
    %1061 = vmatprep.subr.mxu0 0.0
    %v1062 = vand.u32 %v870, 4294901760
    %v1063 = vsub.f32 %v870, %v1062
    %v1064 = vand.u32 %v1063, 4294901760
    %v1065 = vsub.f32 %v1063, %v1064
    %v1066 = vand.u32 %v1065, 4294901760
    %1067 = vmatpush1.msra.mxu0 %v1066
    %1068 = vmatprep.subr.mxu0 0.0
    %v1069 = vand.u32 %v871, 4294901760
    %v1070 = vsub.f32 %v871, %v1069
    %v1071 = vand.u32 %v1070, 4294901760
    %v1072 = vsub.f32 %v1070, %v1071
    %v1073 = vand.u32 %v1072, 4294901760
    %1074 = vmatpush1.msra.mxu0 %v1073
    %1075 = vmatprep.subr.mxu0 0.0
    %v1076 = vand.u32 %v872, 4294901760
    %v1077 = vsub.f32 %v872, %v1076
    %v1078 = vand.u32 %v1077, 4294901760
    %v1079 = vsub.f32 %v1077, %v1078
    %v1080 = vand.u32 %v1079, 4294901760
    %1081 = vmatpush1.msra.mxu0 %v1080
    %1082 = vmatprep.subr.mxu0 0.0
    %v1083 = vand.u32 %v873, 4294901760
    %v1084 = vsub.f32 %v873, %v1083
    %v1085 = vand.u32 %v1084, 4294901760
    %v1086 = vsub.f32 %v1084, %v1085
    %v1087 = vand.u32 %v1086, 4294901760
    %1088 = vmatpush1.msra.mxu0 %v1087
    %1089 = vmatprep.subr.mxu0 0.0
    %v1090 = vand.u32 %v874, 4294901760
    %v1091 = vsub.f32 %v874, %v1090
    %v1092 = vand.u32 %v1091, 4294901760
    %v1093 = vsub.f32 %v1091, %v1092
    %v1094 = vand.u32 %v1093, 4294901760
    %1095 = vmatpush1.msra.mxu0 %v1094
    %1096 = vmatprep.subr.mxu0 0.0
    %v1097 = vand.u32 %v875, 4294901760
    %v1098 = vsub.f32 %v875, %v1097
    %v1099 = vand.u32 %v1098, 4294901760
    %v1100 = vsub.f32 %v1098, %v1099
    %v1101 = vand.u32 %v1100, 4294901760
    %1102 = vmatpush1.msra.mxu0 %v1101
    %1103 = vmatprep.subr.mxu0 0.0
    %v1104 = vand.u32 %v876, 4294901760
    %v1105 = vsub.f32 %v876, %v1104
    %v1106 = vand.u32 %v1105, 4294901760
    %v1107 = vsub.f32 %v1105, %v1106
    %v1108 = vand.u32 %v1107, 4294901760
    %1109 = vmatpush1.msra.mxu0 %v1108
    %1110 = vmatprep.subr.mxu0 0.0
    %v1111 = vand.u32 %v877, 4294901760
    %v1112 = vsub.f32 %v877, %v1111
    %v1113 = vand.u32 %v1112, 4294901760
    %v1114 = vsub.f32 %v1112, %v1113
    %v1115 = vand.u32 %v1114, 4294901760
    %1116 = vmatpush1.msra.mxu0 %v1115
    %1117 = vmatprep.subr.mxu0 0.0
    %v1118 = vand.u32 %v878, 4294901760
    %v1119 = vsub.f32 %v878, %v1118
    %v1120 = vand.u32 %v1119, 4294901760
    %v1121 = vsub.f32 %v1119, %v1120
    %v1122 = vand.u32 %v1121, 4294901760
    %1123 = vmatpush1.msra.mxu0 %v1122
    %1124 = vmatprep.subr.mxu0 0.0
    %v1125 = vand.u32 %v879, 4294901760
    %v1126 = vsub.f32 %v879, %v1125
    %v1127 = vand.u32 %v1126, 4294901760
    %v1128 = vsub.f32 %v1126, %v1127
    %v1129 = vand.u32 %v1128, 4294901760
    %1130 = vmatpush1.msra.mxu0 %v1129
    %1131 = vmatprep.subr.mxu0 0.0
    %v1132 = vand.u32 %v880, 4294901760
    %v1133 = vsub.f32 %v880, %v1132
    %v1134 = vand.u32 %v1133, 4294901760
    %v1135 = vsub.f32 %v1133, %v1134
    %v1136 = vand.u32 %v1135, 4294901760
    %1137 = vmatpush1.msra.mxu0 %v1136
    %1138 = vmatprep.subr.mxu0 0.0
    %v1139 = vand.u32 %v881, 4294901760
    %v1140 = vsub.f32 %v881, %v1139
    %v1141 = vand.u32 %v1140, 4294901760
    %v1142 = vsub.f32 %v1140, %v1141
    %v1143 = vand.u32 %v1142, 4294901760
    %1144 = vmatpush1.msra.mxu0 %v1143
    %1145 = vmatprep.subr.mxu0 0.0
    %v1146 = vand.u32 %v882, 4294901760
    %v1147 = vsub.f32 %v882, %v1146
    %v1148 = vand.u32 %v1147, 4294901760
    %v1149 = vsub.f32 %v1147, %v1148
    %v1150 = vand.u32 %v1149, 4294901760
    %1151 = vmatpush1.msra.mxu0 %v1150
    %1152 = vmatprep.subr.mxu0 0.0
    %v1153 = vand.u32 %v883, 4294901760
    %v1154 = vsub.f32 %v883, %v1153
    %v1155 = vand.u32 %v1154, 4294901760
    %v1156 = vsub.f32 %v1154, %v1155
    %v1157 = vand.u32 %v1156, 4294901760
    %1158 = vmatpush1.msra.mxu0 %v1157
    %1159 = vmatprep.subr.mxu0 0.0
    %v1160 = vand.u32 %v884, 4294901760
    %v1161 = vsub.f32 %v884, %v1160
    %v1162 = vand.u32 %v1161, 4294901760
    %v1163 = vsub.f32 %v1161, %v1162
    %v1164 = vand.u32 %v1163, 4294901760
    %1165 = vmatpush1.msra.mxu0 %v1164
    %1166 = vmatprep.subr.mxu0 0.0
    %v1167 = vand.u32 %v885, 4294901760
    %v1168 = vsub.f32 %v885, %v1167
    %v1169 = vand.u32 %v1168, 4294901760
    %v1170 = vsub.f32 %v1168, %v1169
    %v1171 = vand.u32 %v1170, 4294901760
    %1172 = vmatpush1.msra.mxu0 %v1171
    %1173 = vmatprep.subr.mxu0 0.0
    %v1174 = vand.u32 %v886, 4294901760
    %v1175 = vsub.f32 %v886, %v1174
    %v1176 = vand.u32 %v1175, 4294901760
    %v1177 = vsub.f32 %v1175, %v1176
    %v1178 = vand.u32 %v1177, 4294901760
    %1179 = vmatpush1.msra.mxu0 %v1178
    %1180 = vmatprep.subr.mxu0 0.0
    %v1181 = vand.u32 %v887, 4294901760
    %v1182 = vsub.f32 %v887, %v1181
    %v1183 = vand.u32 %v1182, 4294901760
    %v1184 = vsub.f32 %v1182, %v1183
    %v1185 = vand.u32 %v1184, 4294901760
    %1186 = vmatpush1.msra.mxu0 %v1185
    %1187 = vmatprep.subr.mxu0 0.0
    %v1188 = vand.u32 %v888, 4294901760
    %v1189 = vsub.f32 %v888, %v1188
    %v1190 = vand.u32 %v1189, 4294901760
    %v1191 = vsub.f32 %v1189, %v1190
    %v1192 = vand.u32 %v1191, 4294901760
    %1193 = vmatpush1.msra.mxu0 %v1192
    %1194 = vmatprep.subr.mxu0 0.0
    %v1195 = vand.u32 %v889, 4294901760
    %v1196 = vsub.f32 %v889, %v1195
    %v1197 = vand.u32 %v1196, 4294901760
    %v1198 = vsub.f32 %v1196, %v1197
    %v1199 = vand.u32 %v1198, 4294901760
    %1200 = vmatpush1.msra.mxu0 %v1199
    %1201 = vmatprep.subr.mxu0 0.0
    %v1202 = vand.u32 %v890, 4294901760
    %v1203 = vsub.f32 %v890, %v1202
    %v1204 = vand.u32 %v1203, 4294901760
    %v1205 = vsub.f32 %v1203, %v1204
    %v1206 = vand.u32 %v1205, 4294901760
    %1207 = vmatpush1.msra.mxu0 %v1206
    %1208 = vmatprep.subr.mxu0 0.0
    %v1209 = vand.u32 %v891, 4294901760
    %v1210 = vsub.f32 %v891, %v1209
    %v1211 = vand.u32 %v1210, 4294901760
    %v1212 = vsub.f32 %v1210, %v1211
    %v1213 = vand.u32 %v1212, 4294901760
    %1214 = vmatpush1.msra.mxu0 %v1213
    %1215 = vmatprep.subr.mxu0 0.0
    %v1216 = vand.u32 %v892, 4294901760
    %v1217 = vsub.f32 %v892, %v1216
    %v1218 = vand.u32 %v1217, 4294901760
    %v1219 = vsub.f32 %v1217, %v1218
    %v1220 = vand.u32 %v1219, 4294901760
    %1221 = vmatpush1.msra.mxu0 %v1220
    %1222 = vmatprep.subr.mxu0 0.0
    %v1223 = vand.u32 %v893, 4294901760
    %v1224 = vsub.f32 %v893, %v1223
    %v1225 = vand.u32 %v1224, 4294901760
    %v1226 = vsub.f32 %v1224, %v1225
    %v1227 = vand.u32 %v1226, 4294901760
    %1228 = vmatpush1.msra.mxu0 %v1227
    %1229 = vmatprep.subr.mxu0 0.0
    %v1230 = vand.u32 %v894, 4294901760
    %v1231 = vsub.f32 %v894, %v1230
    %v1232 = vand.u32 %v1231, 4294901760
    %v1233 = vsub.f32 %v1231, %v1232
    %v1234 = vand.u32 %v1233, 4294901760
    %1235 = vmatpush1.msra.mxu0 %v1234
    %1236 = vmatprep.subr.mxu0 0.0
    %v1237 = vand.u32 %v895, 4294901760
    %v1238 = vsub.f32 %v895, %v1237
    %v1239 = vand.u32 %v1238, 4294901760
    %v1240 = vsub.f32 %v1238, %v1239
    %v1241 = vand.u32 %v1240, 4294901760
    %1242 = vmatpush1.msra.mxu0 %v1241
    %1243 = vmatprep.subr.mxu0 0.0
    %v1244 = vand.u32 %v896, 4294901760
    %v1245 = vsub.f32 %v896, %v1244
    %v1246 = vand.u32 %v1245, 4294901760
    %v1247 = vsub.f32 %v1245, %v1246
    %v1248 = vand.u32 %v1247, 4294901760
    %1249 = vmatpush1.msra.mxu0 %v1248
    %1250 = vmatprep.subr.mxu0 0.0
    %v1251 = vand.u32 %v897, 4294901760
    %v1252 = vsub.f32 %v897, %v1251
    %v1253 = vand.u32 %v1252, 4294901760
    %v1254 = vsub.f32 %v1252, %v1253
    %v1255 = vand.u32 %v1254, 4294901760
    %1256 = vmatpush1.msra.mxu0 %v1255
    %1257 = vmatprep.subr.mxu0 0.0
    %v1258 = vand.u32 %v898, 4294901760
    %v1259 = vsub.f32 %v898, %v1258
    %v1260 = vand.u32 %v1259, 4294901760
    %v1261 = vsub.f32 %v1259, %v1260
    %v1262 = vand.u32 %v1261, 4294901760
    %1263 = vmatpush1.msra.mxu0 %v1262
    %1264 = vmatprep.subr.mxu0 0.0
    %v1265 = vand.u32 %v899, 4294901760
    %v1266 = vsub.f32 %v899, %v1265
    %v1267 = vand.u32 %v1266, 4294901760
    %v1268 = vsub.f32 %v1266, %v1267
    %v1269 = vand.u32 %v1268, 4294901760
    %1270 = vmatpush1.msra.mxu0 %v1269
    %v1271 = vand.u32 %v928, 4294901760
    %1272 = vmatprep.mubr.f32.mxu0 %v1271
    %v1273 = vand.u32 %v927, 4294901760
    %1274 = vmatmul.mubr.f32.gmra.mrb[0].mxu0 %v1273
    %v1275 = vpop.f32.mrb[0].mxu0
    %v1276 = vadd.f32 %v1044, %v1275
    %v1277 = vpop.f32.mrb[0].mxu0
    %1278 = vdwg.mxu0
    %1279 = vmatprep.subr.mxu0 0.0
    %v1280 = vand.u32 %v868, 4294901760
    %v1281 = vsub.f32 %v868, %v1280
    %1282 = vmatpush1.msra.mxu0 %v1281
    %1283 = vmatprep.subr.mxu0 0.0
    %v1284 = vand.u32 %v869, 4294901760
    %v1285 = vsub.f32 %v869, %v1284
    %1286 = vmatpush1.msra.mxu0 %v1285
    %1287 = vmatprep.subr.mxu0 0.0
    %v1288 = vand.u32 %v870, 4294901760
    %v1289 = vsub.f32 %v870, %v1288
    %1290 = vmatpush1.msra.mxu0 %v1289
    %1291 = vmatprep.subr.mxu0 0.0
    %v1292 = vand.u32 %v871, 4294901760
    %v1293 = vsub.f32 %v871, %v1292
    %1294 = vmatpush1.msra.mxu0 %v1293
    %1295 = vmatprep.subr.mxu0 0.0
    %v1296 = vand.u32 %v872, 4294901760
    %v1297 = vsub.f32 %v872, %v1296
    %1298 = vmatpush1.msra.mxu0 %v1297
    %1299 = vmatprep.subr.mxu0 0.0
    %v1300 = vand.u32 %v873, 4294901760
    %v1301 = vsub.f32 %v873, %v1300
    %1302 = vmatpush1.msra.mxu0 %v1301
    %1303 = vmatprep.subr.mxu0 0.0
    %v1304 = vand.u32 %v874, 4294901760
    %v1305 = vsub.f32 %v874, %v1304
    %1306 = vmatpush1.msra.mxu0 %v1305
    %1307 = vmatprep.subr.mxu0 0.0
    %v1308 = vand.u32 %v875, 4294901760
    %v1309 = vsub.f32 %v875, %v1308
    %1310 = vmatpush1.msra.mxu0 %v1309
    %1311 = vmatprep.subr.mxu0 0.0
    %v1312 = vand.u32 %v876, 4294901760
    %v1313 = vsub.f32 %v876, %v1312
    %1314 = vmatpush1.msra.mxu0 %v1313
    %1315 = vmatprep.subr.mxu0 0.0
    %v1316 = vand.u32 %v877, 4294901760
    %v1317 = vsub.f32 %v877, %v1316
    %1318 = vmatpush1.msra.mxu0 %v1317
    %1319 = vmatprep.subr.mxu0 0.0
    %v1320 = vand.u32 %v878, 4294901760
    %v1321 = vsub.f32 %v878, %v1320
    %1322 = vmatpush1.msra.mxu0 %v1321
    %1323 = vmatprep.subr.mxu0 0.0
    %v1324 = vand.u32 %v879, 4294901760
    %v1325 = vsub.f32 %v879, %v1324
    %1326 = vmatpush1.msra.mxu0 %v1325
    %1327 = vmatprep.subr.mxu0 0.0
    %v1328 = vand.u32 %v880, 4294901760
    %v1329 = vsub.f32 %v880, %v1328
    %1330 = vmatpush1.msra.mxu0 %v1329
    %1331 = vmatprep.subr.mxu0 0.0
    %v1332 = vand.u32 %v881, 4294901760
    %v1333 = vsub.f32 %v881, %v1332
    %1334 = vmatpush1.msra.mxu0 %v1333
    %1335 = vmatprep.subr.mxu0 0.0
    %v1336 = vand.u32 %v882, 4294901760
    %v1337 = vsub.f32 %v882, %v1336
    %1338 = vmatpush1.msra.mxu0 %v1337
    %1339 = vmatprep.subr.mxu0 0.0
    %v1340 = vand.u32 %v883, 4294901760
    %v1341 = vsub.f32 %v883, %v1340
    %1342 = vmatpush1.msra.mxu0 %v1341
    %1343 = vmatprep.subr.mxu0 0.0
    %v1344 = vand.u32 %v884, 4294901760
    %v1345 = vsub.f32 %v884, %v1344
    %1346 = vmatpush1.msra.mxu0 %v1345
    %1347 = vmatprep.subr.mxu0 0.0
    %v1348 = vand.u32 %v885, 4294901760
    %v1349 = vsub.f32 %v885, %v1348
    %1350 = vmatpush1.msra.mxu0 %v1349
    %1351 = vmatprep.subr.mxu0 0.0
    %v1352 = vand.u32 %v886, 4294901760
    %v1353 = vsub.f32 %v886, %v1352
    %1354 = vmatpush1.msra.mxu0 %v1353
    %1355 = vmatprep.subr.mxu0 0.0
    %v1356 = vand.u32 %v887, 4294901760
    %v1357 = vsub.f32 %v887, %v1356
    %1358 = vmatpush1.msra.mxu0 %v1357
    %1359 = vmatprep.subr.mxu0 0.0
    %v1360 = vand.u32 %v888, 4294901760
    %v1361 = vsub.f32 %v888, %v1360
    %1362 = vmatpush1.msra.mxu0 %v1361
    %1363 = vmatprep.subr.mxu0 0.0
    %v1364 = vand.u32 %v889, 4294901760
    %v1365 = vsub.f32 %v889, %v1364
    %1366 = vmatpush1.msra.mxu0 %v1365
    %1367 = vmatprep.subr.mxu0 0.0
    %v1368 = vand.u32 %v890, 4294901760
    %v1369 = vsub.f32 %v890, %v1368
    %1370 = vmatpush1.msra.mxu0 %v1369
    %1371 = vmatprep.subr.mxu0 0.0
    %v1372 = vand.u32 %v891, 4294901760
    %v1373 = vsub.f32 %v891, %v1372
    %1374 = vmatpush1.msra.mxu0 %v1373
    %1375 = vmatprep.subr.mxu0 0.0
    %v1376 = vand.u32 %v892, 4294901760
    %v1377 = vsub.f32 %v892, %v1376
    %1378 = vmatpush1.msra.mxu0 %v1377
    %1379 = vmatprep.subr.mxu0 0.0
    %v1380 = vand.u32 %v893, 4294901760
    %v1381 = vsub.f32 %v893, %v1380
    %1382 = vmatpush1.msra.mxu0 %v1381
    %1383 = vmatprep.subr.mxu0 0.0
    %v1384 = vand.u32 %v894, 4294901760
    %v1385 = vsub.f32 %v894, %v1384
    %1386 = vmatpush1.msra.mxu0 %v1385
    %1387 = vmatprep.subr.mxu0 0.0
    %v1388 = vand.u32 %v895, 4294901760
    %v1389 = vsub.f32 %v895, %v1388
    %1390 = vmatpush1.msra.mxu0 %v1389
    %1391 = vmatprep.subr.mxu0 0.0
    %v1392 = vand.u32 %v896, 4294901760
    %v1393 = vsub.f32 %v896, %v1392
    %1394 = vmatpush1.msra.mxu0 %v1393
    %1395 = vmatprep.subr.mxu0 0.0
    %v1396 = vand.u32 %v897, 4294901760
    %v1397 = vsub.f32 %v897, %v1396
    %1398 = vmatpush1.msra.mxu0 %v1397
    %1399 = vmatprep.subr.mxu0 0.0
    %v1400 = vand.u32 %v898, 4294901760
    %v1401 = vsub.f32 %v898, %v1400
    %1402 = vmatpush1.msra.mxu0 %v1401
    %1403 = vmatprep.subr.mxu0 0.0
    %v1404 = vand.u32 %v899, 4294901760
    %v1405 = vsub.f32 %v899, %v1404
    %1406 = vmatpush1.msra.mxu0 %v1405
    %v1407 = vand.u32 %v928, 4294901760
    %v1408 = vsub.f32 %v928, %v1407
    %1409 = vmatprep.mubr.f32.mxu0 %v1408
    %v1410 = vand.u32 %v927, 4294901760
    %v1411 = vsub.f32 %v927, %v1410
    %1412 = vmatmul.mubr.f32.gmra.mrb[0].mxu0 %v1411
    %v1413 = vpop.f32.mrb[0].mxu0
    %v1414 = vadd.f32 %v1276, %v1413
    %v1415 = vpop.f32.mrb[0].mxu0
    %1416 = vdwg.mxu0
    %1417 = vmatprep.subr.mxu0 0.0
    %v1418 = vand.u32 %v868, 4294901760
    %1419 = vmatpush1.msra.mxu0 %v1418
    %1420 = vmatprep.subr.mxu0 0.0
    %v1421 = vand.u32 %v869, 4294901760
    %1422 = vmatpush1.msra.mxu0 %v1421
    %1423 = vmatprep.subr.mxu0 0.0
    %v1424 = vand.u32 %v870, 4294901760
    %1425 = vmatpush1.msra.mxu0 %v1424
    %1426 = vmatprep.subr.mxu0 0.0
    %v1427 = vand.u32 %v871, 4294901760
    %1428 = vmatpush1.msra.mxu0 %v1427
    %1429 = vmatprep.subr.mxu0 0.0
    %v1430 = vand.u32 %v872, 4294901760
    %1431 = vmatpush1.msra.mxu0 %v1430
    %1432 = vmatprep.subr.mxu0 0.0
    %v1433 = vand.u32 %v873, 4294901760
    %1434 = vmatpush1.msra.mxu0 %v1433
    %1435 = vmatprep.subr.mxu0 0.0
    %v1436 = vand.u32 %v874, 4294901760
    %1437 = vmatpush1.msra.mxu0 %v1436
    %1438 = vmatprep.subr.mxu0 0.0
    %v1439 = vand.u32 %v875, 4294901760
    %1440 = vmatpush1.msra.mxu0 %v1439
    %1441 = vmatprep.subr.mxu0 0.0
    %v1442 = vand.u32 %v876, 4294901760
    %1443 = vmatpush1.msra.mxu0 %v1442
    %1444 = vmatprep.subr.mxu0 0.0
    %v1445 = vand.u32 %v877, 4294901760
    %1446 = vmatpush1.msra.mxu0 %v1445
    %1447 = vmatprep.subr.mxu0 0.0
    %v1448 = vand.u32 %v878, 4294901760
    %1449 = vmatpush1.msra.mxu0 %v1448
    %1450 = vmatprep.subr.mxu0 0.0
    %v1451 = vand.u32 %v879, 4294901760
    %1452 = vmatpush1.msra.mxu0 %v1451
    %1453 = vmatprep.subr.mxu0 0.0
    %v1454 = vand.u32 %v880, 4294901760
    %1455 = vmatpush1.msra.mxu0 %v1454
    %1456 = vmatprep.subr.mxu0 0.0
    %v1457 = vand.u32 %v881, 4294901760
    %1458 = vmatpush1.msra.mxu0 %v1457
    %1459 = vmatprep.subr.mxu0 0.0
    %v1460 = vand.u32 %v882, 4294901760
    %1461 = vmatpush1.msra.mxu0 %v1460
    %1462 = vmatprep.subr.mxu0 0.0
    %v1463 = vand.u32 %v883, 4294901760
    %1464 = vmatpush1.msra.mxu0 %v1463
    %1465 = vmatprep.subr.mxu0 0.0
    %v1466 = vand.u32 %v884, 4294901760
    %1467 = vmatpush1.msra.mxu0 %v1466
    %1468 = vmatprep.subr.mxu0 0.0
    %v1469 = vand.u32 %v885, 4294901760
    %1470 = vmatpush1.msra.mxu0 %v1469
    %1471 = vmatprep.subr.mxu0 0.0
    %v1472 = vand.u32 %v886, 4294901760
    %1473 = vmatpush1.msra.mxu0 %v1472
    %1474 = vmatprep.subr.mxu0 0.0
    %v1475 = vand.u32 %v887, 4294901760
    %1476 = vmatpush1.msra.mxu0 %v1475
    %1477 = vmatprep.subr.mxu0 0.0
    %v1478 = vand.u32 %v888, 4294901760
    %1479 = vmatpush1.msra.mxu0 %v1478
    %1480 = vmatprep.subr.mxu0 0.0
    %v1481 = vand.u32 %v889, 4294901760
    %1482 = vmatpush1.msra.mxu0 %v1481
    %1483 = vmatprep.subr.mxu0 0.0
    %v1484 = vand.u32 %v890, 4294901760
    %1485 = vmatpush1.msra.mxu0 %v1484
    %1486 = vmatprep.subr.mxu0 0.0
    %v1487 = vand.u32 %v891, 4294901760
    %1488 = vmatpush1.msra.mxu0 %v1487
    %1489 = vmatprep.subr.mxu0 0.0
    %v1490 = vand.u32 %v892, 4294901760
    %1491 = vmatpush1.msra.mxu0 %v1490
    %1492 = vmatprep.subr.mxu0 0.0
    %v1493 = vand.u32 %v893, 4294901760
    %1494 = vmatpush1.msra.mxu0 %v1493
    %1495 = vmatprep.subr.mxu0 0.0
    %v1496 = vand.u32 %v894, 4294901760
    %1497 = vmatpush1.msra.mxu0 %v1496
    %1498 = vmatprep.subr.mxu0 0.0
    %v1499 = vand.u32 %v895, 4294901760
    %1500 = vmatpush1.msra.mxu0 %v1499
    %1501 = vmatprep.subr.mxu0 0.0
    %v1502 = vand.u32 %v896, 4294901760
    %1503 = vmatpush1.msra.mxu0 %v1502
    %1504 = vmatprep.subr.mxu0 0.0
    %v1505 = vand.u32 %v897, 4294901760
    %1506 = vmatpush1.msra.mxu0 %v1505
    %1507 = vmatprep.subr.mxu0 0.0
    %v1508 = vand.u32 %v898, 4294901760
    %1509 = vmatpush1.msra.mxu0 %v1508
    %1510 = vmatprep.subr.mxu0 0.0
    %v1511 = vand.u32 %v899, 4294901760
    %1512 = vmatpush1.msra.mxu0 %v1511
    %v1513 = vand.u32 %v928, 4294901760
    %v1514 = vsub.f32 %v928, %v1513
    %v1515 = vand.u32 %v1514, 4294901760
    %1516 = vmatprep.mubr.f32.mxu0 %v1515
    %v1517 = vand.u32 %v927, 4294901760
    %v1518 = vsub.f32 %v927, %v1517
    %v1519 = vand.u32 %v1518, 4294901760
    %1520 = vmatmul.mubr.f32.gmra.mrb[0].mxu0 %v1519
    %v1521 = vpop.f32.mrb[0].mxu0
    %v1522 = vadd.f32 %v1414, %v1521
    %v1523 = vpop.f32.mrb[0].mxu0
    %1524 = vdwg.mxu0
    %1525 = vmatprep.subr.mxu0 0.0
    %v1526 = vand.u32 %v868, 4294901760
    %v1527 = vsub.f32 %v868, %v1526
    %v1528 = vand.u32 %v1527, 4294901760
    %1529 = vmatpush1.msra.mxu0 %v1528
    %1530 = vmatprep.subr.mxu0 0.0
    %v1531 = vand.u32 %v869, 4294901760
    %v1532 = vsub.f32 %v869, %v1531
    %v1533 = vand.u32 %v1532, 4294901760
    %1534 = vmatpush1.msra.mxu0 %v1533
    %1535 = vmatprep.subr.mxu0 0.0
    %v1536 = vand.u32 %v870, 4294901760
    %v1537 = vsub.f32 %v870, %v1536
    %v1538 = vand.u32 %v1537, 4294901760
    %1539 = vmatpush1.msra.mxu0 %v1538
    %1540 = vmatprep.subr.mxu0 0.0
    %v1541 = vand.u32 %v871, 4294901760
    %v1542 = vsub.f32 %v871, %v1541
    %v1543 = vand.u32 %v1542, 4294901760
    %1544 = vmatpush1.msra.mxu0 %v1543
    %1545 = vmatprep.subr.mxu0 0.0
    %v1546 = vand.u32 %v872, 4294901760
    %v1547 = vsub.f32 %v872, %v1546
    %v1548 = vand.u32 %v1547, 4294901760
    %1549 = vmatpush1.msra.mxu0 %v1548
    %1550 = vmatprep.subr.mxu0 0.0
    %v1551 = vand.u32 %v873, 4294901760
    %v1552 = vsub.f32 %v873, %v1551
    %v1553 = vand.u32 %v1552, 4294901760
    %1554 = vmatpush1.msra.mxu0 %v1553
    %1555 = vmatprep.subr.mxu0 0.0
    %v1556 = vand.u32 %v874, 4294901760
    %v1557 = vsub.f32 %v874, %v1556
    %v1558 = vand.u32 %v1557, 4294901760
    %1559 = vmatpush1.msra.mxu0 %v1558
    %1560 = vmatprep.subr.mxu0 0.0
    %v1561 = vand.u32 %v875, 4294901760
    %v1562 = vsub.f32 %v875, %v1561
    %v1563 = vand.u32 %v1562, 4294901760
    %1564 = vmatpush1.msra.mxu0 %v1563
    %1565 = vmatprep.subr.mxu0 0.0
    %v1566 = vand.u32 %v876, 4294901760
    %v1567 = vsub.f32 %v876, %v1566
    %v1568 = vand.u32 %v1567, 4294901760
    %1569 = vmatpush1.msra.mxu0 %v1568
    %1570 = vmatprep.subr.mxu0 0.0
    %v1571 = vand.u32 %v877, 4294901760
    %v1572 = vsub.f32 %v877, %v1571
    %v1573 = vand.u32 %v1572, 4294901760
    %1574 = vmatpush1.msra.mxu0 %v1573
    %1575 = vmatprep.subr.mxu0 0.0
    %v1576 = vand.u32 %v878, 4294901760
    %v1577 = vsub.f32 %v878, %v1576
    %v1578 = vand.u32 %v1577, 4294901760
    %1579 = vmatpush1.msra.mxu0 %v1578
    %1580 = vmatprep.subr.mxu0 0.0
    %v1581 = vand.u32 %v879, 4294901760
    %v1582 = vsub.f32 %v879, %v1581
    %v1583 = vand.u32 %v1582, 4294901760
    %1584 = vmatpush1.msra.mxu0 %v1583
    %1585 = vmatprep.subr.mxu0 0.0
    %v1586 = vand.u32 %v880, 4294901760
    %v1587 = vsub.f32 %v880, %v1586
    %v1588 = vand.u32 %v1587, 4294901760
    %1589 = vmatpush1.msra.mxu0 %v1588
    %1590 = vmatprep.subr.mxu0 0.0
    %v1591 = vand.u32 %v881, 4294901760
    %v1592 = vsub.f32 %v881, %v1591
    %v1593 = vand.u32 %v1592, 4294901760
    %1594 = vmatpush1.msra.mxu0 %v1593
    %1595 = vmatprep.subr.mxu0 0.0
    %v1596 = vand.u32 %v882, 4294901760
    %v1597 = vsub.f32 %v882, %v1596
    %v1598 = vand.u32 %v1597, 4294901760
    %1599 = vmatpush1.msra.mxu0 %v1598
    %1600 = vmatprep.subr.mxu0 0.0
    %v1601 = vand.u32 %v883, 4294901760
    %v1602 = vsub.f32 %v883, %v1601
    %v1603 = vand.u32 %v1602, 4294901760
    %1604 = vmatpush1.msra.mxu0 %v1603
    %1605 = vmatprep.subr.mxu0 0.0
    %v1606 = vand.u32 %v884, 4294901760
    %v1607 = vsub.f32 %v884, %v1606
    %v1608 = vand.u32 %v1607, 4294901760
    %1609 = vmatpush1.msra.mxu0 %v1608
    %1610 = vmatprep.subr.mxu0 0.0
    %v1611 = vand.u32 %v885, 4294901760
    %v1612 = vsub.f32 %v885, %v1611
    %v1613 = vand.u32 %v1612, 4294901760
    %1614 = vmatpush1.msra.mxu0 %v1613
    %1615 = vmatprep.subr.mxu0 0.0
    %v1616 = vand.u32 %v886, 4294901760
    %v1617 = vsub.f32 %v886, %v1616
    %v1618 = vand.u32 %v1617, 4294901760
    %1619 = vmatpush1.msra.mxu0 %v1618
    %1620 = vmatprep.subr.mxu0 0.0
    %v1621 = vand.u32 %v887, 4294901760
    %v1622 = vsub.f32 %v887, %v1621
    %v1623 = vand.u32 %v1622, 4294901760
    %1624 = vmatpush1.msra.mxu0 %v1623
    %1625 = vmatprep.subr.mxu0 0.0
    %v1626 = vand.u32 %v888, 4294901760
    %v1627 = vsub.f32 %v888, %v1626
    %v1628 = vand.u32 %v1627, 4294901760
    %1629 = vmatpush1.msra.mxu0 %v1628
    %1630 = vmatprep.subr.mxu0 0.0
    %v1631 = vand.u32 %v889, 4294901760
    %v1632 = vsub.f32 %v889, %v1631
    %v1633 = vand.u32 %v1632, 4294901760
    %1634 = vmatpush1.msra.mxu0 %v1633
    %1635 = vmatprep.subr.mxu0 0.0
    %v1636 = vand.u32 %v890, 4294901760
    %v1637 = vsub.f32 %v890, %v1636
    %v1638 = vand.u32 %v1637, 4294901760
    %1639 = vmatpush1.msra.mxu0 %v1638
    %1640 = vmatprep.subr.mxu0 0.0
    %v1641 = vand.u32 %v891, 4294901760
    %v1642 = vsub.f32 %v891, %v1641
    %v1643 = vand.u32 %v1642, 4294901760
    %1644 = vmatpush1.msra.mxu0 %v1643
    %1645 = vmatprep.subr.mxu0 0.0
    %v1646 = vand.u32 %v892, 4294901760
    %v1647 = vsub.f32 %v892, %v1646
    %v1648 = vand.u32 %v1647, 4294901760
    %1649 = vmatpush1.msra.mxu0 %v1648
    %1650 = vmatprep.subr.mxu0 0.0
    %v1651 = vand.u32 %v893, 4294901760
    %v1652 = vsub.f32 %v893, %v1651
    %v1653 = vand.u32 %v1652, 4294901760
    %1654 = vmatpush1.msra.mxu0 %v1653
    %1655 = vmatprep.subr.mxu0 0.0
    %v1656 = vand.u32 %v894, 4294901760
    %v1657 = vsub.f32 %v894, %v1656
    %v1658 = vand.u32 %v1657, 4294901760
    %1659 = vmatpush1.msra.mxu0 %v1658
    %1660 = vmatprep.subr.mxu0 0.0
    %v1661 = vand.u32 %v895, 4294901760
    %v1662 = vsub.f32 %v895, %v1661
    %v1663 = vand.u32 %v1662, 4294901760
    %1664 = vmatpush1.msra.mxu0 %v1663
    %1665 = vmatprep.subr.mxu0 0.0
    %v1666 = vand.u32 %v896, 4294901760
    %v1667 = vsub.f32 %v896, %v1666
    %v1668 = vand.u32 %v1667, 4294901760
    %1669 = vmatpush1.msra.mxu0 %v1668
    %1670 = vmatprep.subr.mxu0 0.0
    %v1671 = vand.u32 %v897, 4294901760
    %v1672 = vsub.f32 %v897, %v1671
    %v1673 = vand.u32 %v1672, 4294901760
    %1674 = vmatpush1.msra.mxu0 %v1673
    %1675 = vmatprep.subr.mxu0 0.0
    %v1676 = vand.u32 %v898, 4294901760
    %v1677 = vsub.f32 %v898, %v1676
    %v1678 = vand.u32 %v1677, 4294901760
    %1679 = vmatpush1.msra.mxu0 %v1678
    %1680 = vmatprep.subr.mxu0 0.0
    %v1681 = vand.u32 %v899, 4294901760
    %v1682 = vsub.f32 %v899, %v1681
    %v1683 = vand.u32 %v1682, 4294901760
    %1684 = vmatpush1.msra.mxu0 %v1683
    %v1685 = vand.u32 %v928, 4294901760
    %1686 = vmatprep.mubr.f32.mxu0 %v1685
    %v1687 = vand.u32 %v927, 4294901760
    %1688 = vmatmul.mubr.f32.gmra.mrb[0].mxu0 %v1687
    %v1689 = vpop.f32.mrb[0].mxu0
    %v1690 = vadd.f32 %v1522, %v1689
    %v1691 = vpop.f32.mrb[0].mxu0
    %1692 = vdwg.mxu0
    %1693 = vmatprep.subr.mxu0 0.0
    %v1694 = vand.u32 %v868, 4294901760
    %1695 = vmatpush1.msra.mxu0 %v1694
    %1696 = vmatprep.subr.mxu0 0.0
    %v1697 = vand.u32 %v869, 4294901760
    %1698 = vmatpush1.msra.mxu0 %v1697
    %1699 = vmatprep.subr.mxu0 0.0
    %v1700 = vand.u32 %v870, 4294901760
    %1701 = vmatpush1.msra.mxu0 %v1700
    %1702 = vmatprep.subr.mxu0 0.0
    %v1703 = vand.u32 %v871, 4294901760
    %1704 = vmatpush1.msra.mxu0 %v1703
    %1705 = vmatprep.subr.mxu0 0.0
    %v1706 = vand.u32 %v872, 4294901760
    %1707 = vmatpush1.msra.mxu0 %v1706
    %1708 = vmatprep.subr.mxu0 0.0
    %v1709 = vand.u32 %v873, 4294901760
    %1710 = vmatpush1.msra.mxu0 %v1709
    %1711 = vmatprep.subr.mxu0 0.0
    %v1712 = vand.u32 %v874, 4294901760
    %1713 = vmatpush1.msra.mxu0 %v1712
    %1714 = vmatprep.subr.mxu0 0.0
    %v1715 = vand.u32 %v875, 4294901760
    %1716 = vmatpush1.msra.mxu0 %v1715
    %1717 = vmatprep.subr.mxu0 0.0
    %v1718 = vand.u32 %v876, 4294901760
    %1719 = vmatpush1.msra.mxu0 %v1718
    %1720 = vmatprep.subr.mxu0 0.0
    %v1721 = vand.u32 %v877, 4294901760
    %1722 = vmatpush1.msra.mxu0 %v1721
    %1723 = vmatprep.subr.mxu0 0.0
    %v1724 = vand.u32 %v878, 4294901760
    %1725 = vmatpush1.msra.mxu0 %v1724
    %1726 = vmatprep.subr.mxu0 0.0
    %v1727 = vand.u32 %v879, 4294901760
    %1728 = vmatpush1.msra.mxu0 %v1727
    %1729 = vmatprep.subr.mxu0 0.0
    %v1730 = vand.u32 %v880, 4294901760
    %1731 = vmatpush1.msra.mxu0 %v1730
    %1732 = vmatprep.subr.mxu0 0.0
    %v1733 = vand.u32 %v881, 4294901760
    %1734 = vmatpush1.msra.mxu0 %v1733
    %1735 = vmatprep.subr.mxu0 0.0
    %v1736 = vand.u32 %v882, 4294901760
    %1737 = vmatpush1.msra.mxu0 %v1736
    %1738 = vmatprep.subr.mxu0 0.0
    %v1739 = vand.u32 %v883, 4294901760
    %1740 = vmatpush1.msra.mxu0 %v1739
    %1741 = vmatprep.subr.mxu0 0.0
    %v1742 = vand.u32 %v884, 4294901760
    %1743 = vmatpush1.msra.mxu0 %v1742
    %1744 = vmatprep.subr.mxu0 0.0
    %v1745 = vand.u32 %v885, 4294901760
    %1746 = vmatpush1.msra.mxu0 %v1745
    %1747 = vmatprep.subr.mxu0 0.0
    %v1748 = vand.u32 %v886, 4294901760
    %1749 = vmatpush1.msra.mxu0 %v1748
    %1750 = vmatprep.subr.mxu0 0.0
    %v1751 = vand.u32 %v887, 4294901760
    %1752 = vmatpush1.msra.mxu0 %v1751
    %1753 = vmatprep.subr.mxu0 0.0
    %v1754 = vand.u32 %v888, 4294901760
    %1755 = vmatpush1.msra.mxu0 %v1754
    %1756 = vmatprep.subr.mxu0 0.0
    %v1757 = vand.u32 %v889, 4294901760
    %1758 = vmatpush1.msra.mxu0 %v1757
    %1759 = vmatprep.subr.mxu0 0.0
    %v1760 = vand.u32 %v890, 4294901760
    %1761 = vmatpush1.msra.mxu0 %v1760
    %1762 = vmatprep.subr.mxu0 0.0
    %v1763 = vand.u32 %v891, 4294901760
    %1764 = vmatpush1.msra.mxu0 %v1763
    %1765 = vmatprep.subr.mxu0 0.0
    %v1766 = vand.u32 %v892, 4294901760
    %1767 = vmatpush1.msra.mxu0 %v1766
    %1768 = vmatprep.subr.mxu0 0.0
    %v1769 = vand.u32 %v893, 4294901760
    %1770 = vmatpush1.msra.mxu0 %v1769
    %1771 = vmatprep.subr.mxu0 0.0
    %v1772 = vand.u32 %v894, 4294901760
    %1773 = vmatpush1.msra.mxu0 %v1772
    %1774 = vmatprep.subr.mxu0 0.0
    %v1775 = vand.u32 %v895, 4294901760
    %1776 = vmatpush1.msra.mxu0 %v1775
    %1777 = vmatprep.subr.mxu0 0.0
    %v1778 = vand.u32 %v896, 4294901760
    %1779 = vmatpush1.msra.mxu0 %v1778
    %1780 = vmatprep.subr.mxu0 0.0
    %v1781 = vand.u32 %v897, 4294901760
    %1782 = vmatpush1.msra.mxu0 %v1781
    %1783 = vmatprep.subr.mxu0 0.0
    %v1784 = vand.u32 %v898, 4294901760
    %1785 = vmatpush1.msra.mxu0 %v1784
    %1786 = vmatprep.subr.mxu0 0.0
    %v1787 = vand.u32 %v899, 4294901760
    %1788 = vmatpush1.msra.mxu0 %v1787
    %v1789 = vand.u32 %v928, 4294901760
    %1790 = vmatprep.mubr.f32.mxu0 %v1789
    %v1791 = vand.u32 %v927, 4294901760
    %1792 = vmatmul.mubr.f32.gmra.mrb[0].mxu0 %v1791
    %v1793 = vpop.f32.mrb[0].mxu0
    %v1794 = vadd.f32 %v1690, %v1793
    %v1795 = vpop.f32.mrb[0].mxu0
    %1796 = vdwg.mxu0
    %1797 = vmatprep.subr.mxu0 0.0
    %v1798 = vand.u32 %v900, 4294901760
    %1799 = vmatpush1.msra.mxu0 %v1798
    %1800 = vmatprep.subr.mxu0 0.0
    %v1801 = vand.u32 %v901, 4294901760
    %1802 = vmatpush1.msra.mxu0 %v1801
    %1803 = vmatprep.subr.mxu0 0.0
    %v1804 = vand.u32 %v902, 4294901760
    %1805 = vmatpush1.msra.mxu0 %v1804
    %1806 = vmatprep.subr.mxu0 0.0
    %v1807 = vand.u32 %v903, 4294901760
    %1808 = vmatpush1.msra.mxu0 %v1807
    %1809 = vmatprep.subr.mxu0 0.0
    %v1810 = vand.u32 %v904, 4294901760
    %1811 = vmatpush1.msra.mxu0 %v1810
    %1812 = vmatprep.subr.mxu0 0.0
    %v1813 = vand.u32 %v905, 4294901760
    %1814 = vmatpush1.msra.mxu0 %v1813
    %1815 = vmatprep.subr.mxu0 0.0
    %v1816 = vand.u32 %v906, 4294901760
    %1817 = vmatpush1.msra.mxu0 %v1816
    %1818 = vmatprep.subr.mxu0 0.0
    %v1819 = vand.u32 %v907, 4294901760
    %1820 = vmatpush1.msra.mxu0 %v1819
    %1821 = vmatprep.subr.mxu0 0.0
    %1822 = vmatpush1.msra.mxu0 0.0
    %1823 = vmatprep.subr.mxu0 0.0
    %1824 = vmatpush1.msra.mxu0 0.0
    %1825 = vmatprep.subr.mxu0 0.0
    %1826 = vmatpush1.msra.mxu0 0.0
    %1827 = vmatprep.subr.mxu0 0.0
    %1828 = vmatpush1.msra.mxu0 0.0
    %1829 = vmatprep.subr.mxu0 0.0
    %1830 = vmatpush1.msra.mxu0 0.0
    %1831 = vmatprep.subr.mxu0 0.0
    %1832 = vmatpush1.msra.mxu0 0.0
    %1833 = vmatprep.subr.mxu0 0.0
    %1834 = vmatpush1.msra.mxu0 0.0
    %1835 = vmatprep.subr.mxu0 0.0
    %1836 = vmatpush1.msra.mxu0 0.0
    %1837 = vmatprep.subr.mxu0 0.0
    %1838 = vmatpush1.msra.mxu0 0.0
    %1839 = vmatprep.subr.mxu0 0.0
    %1840 = vmatpush1.msra.mxu0 0.0
    %1841 = vmatprep.subr.mxu0 0.0
    %1842 = vmatpush1.msra.mxu0 0.0
    %1843 = vmatprep.subr.mxu0 0.0
    %1844 = vmatpush1.msra.mxu0 0.0
    %1845 = vmatprep.subr.mxu0 0.0
    %1846 = vmatpush1.msra.mxu0 0.0
    %1847 = vmatprep.subr.mxu0 0.0
    %1848 = vmatpush1.msra.mxu0 0.0
    %1849 = vmatprep.subr.mxu0 0.0
    %1850 = vmatpush1.msra.mxu0 0.0
    %1851 = vmatprep.subr.mxu0 0.0
    %1852 = vmatpush1.msra.mxu0 0.0
    %1853 = vmatprep.subr.mxu0 0.0
    %1854 = vmatpush1.msra.mxu0 0.0
    %1855 = vmatprep.subr.mxu0 0.0
    %1856 = vmatpush1.msra.mxu0 0.0
    %1857 = vmatprep.subr.mxu0 0.0
    %1858 = vmatpush1.msra.mxu0 0.0
    %1859 = vmatprep.subr.mxu0 0.0
    %1860 = vmatpush1.msra.mxu0 0.0
    %1861 = vmatprep.subr.mxu0 0.0
    %1862 = vmatpush1.msra.mxu0 0.0
    %1863 = vmatprep.subr.mxu0 0.0
    %1864 = vmatpush1.msra.mxu0 0.0
    %1865 = vmatprep.subr.mxu0 0.0
    %1866 = vmatpush1.msra.mxu0 0.0
    %1867 = vmatprep.subr.mxu0 0.0
    %1868 = vmatpush1.msra.mxu0 0.0
    %1869 = vmatprep.mubr.f32.mxu0 0.0
    %v1870 = vand.u32 %v933, 4294901760
    %v1871 = vsub.f32 %v933, %v1870
    %v1872 = vand.u32 %v1871, 4294901760
    %v1873 = vsub.f32 %v1871, %v1872
    %v1874 = vand.u32 %v1873, 4294901760
    %1875 = vmatmul.mubr.f32.gmra.mrb[0].mxu0 %v1874
    %v1876 = vpop.f32.mrb[0].mxu0
    %v1877 = vadd.f32 %v1794, %v1876
    %v1878 = vpop.f32.mrb[0].mxu0
    %1879 = vdwg.mxu0
    %1880 = vmatprep.subr.mxu0 0.0
    %v1881 = vand.u32 %v900, 4294901760
    %v1882 = vsub.f32 %v900, %v1881
    %v1883 = vand.u32 %v1882, 4294901760
    %v1884 = vsub.f32 %v1882, %v1883
    %v1885 = vand.u32 %v1884, 4294901760
    %1886 = vmatpush1.msra.mxu0 %v1885
    %1887 = vmatprep.subr.mxu0 0.0
    %v1888 = vand.u32 %v901, 4294901760
    %v1889 = vsub.f32 %v901, %v1888
    %v1890 = vand.u32 %v1889, 4294901760
    %v1891 = vsub.f32 %v1889, %v1890
    %v1892 = vand.u32 %v1891, 4294901760
    %1893 = vmatpush1.msra.mxu0 %v1892
    %1894 = vmatprep.subr.mxu0 0.0
    %v1895 = vand.u32 %v902, 4294901760
    %v1896 = vsub.f32 %v902, %v1895
    %v1897 = vand.u32 %v1896, 4294901760
    %v1898 = vsub.f32 %v1896, %v1897
    %v1899 = vand.u32 %v1898, 4294901760
    %1900 = vmatpush1.msra.mxu0 %v1899
    %1901 = vmatprep.subr.mxu0 0.0
    %v1902 = vand.u32 %v903, 4294901760
    %v1903 = vsub.f32 %v903, %v1902
    %v1904 = vand.u32 %v1903, 4294901760
    %v1905 = vsub.f32 %v1903, %v1904
    %v1906 = vand.u32 %v1905, 4294901760
    %1907 = vmatpush1.msra.mxu0 %v1906
    %1908 = vmatprep.subr.mxu0 0.0
    %v1909 = vand.u32 %v904, 4294901760
    %v1910 = vsub.f32 %v904, %v1909
    %v1911 = vand.u32 %v1910, 4294901760
    %v1912 = vsub.f32 %v1910, %v1911
    %v1913 = vand.u32 %v1912, 4294901760
    %1914 = vmatpush1.msra.mxu0 %v1913
    %1915 = vmatprep.subr.mxu0 0.0
    %v1916 = vand.u32 %v905, 4294901760
    %v1917 = vsub.f32 %v905, %v1916
    %v1918 = vand.u32 %v1917, 4294901760
    %v1919 = vsub.f32 %v1917, %v1918
    %v1920 = vand.u32 %v1919, 4294901760
    %1921 = vmatpush1.msra.mxu0 %v1920
    %1922 = vmatprep.subr.mxu0 0.0
    %v1923 = vand.u32 %v906, 4294901760
    %v1924 = vsub.f32 %v906, %v1923
    %v1925 = vand.u32 %v1924, 4294901760
    %v1926 = vsub.f32 %v1924, %v1925
    %v1927 = vand.u32 %v1926, 4294901760
    %1928 = vmatpush1.msra.mxu0 %v1927
    %1929 = vmatprep.subr.mxu0 0.0
    %v1930 = vand.u32 %v907, 4294901760
    %v1931 = vsub.f32 %v907, %v1930
    %v1932 = vand.u32 %v1931, 4294901760
    %v1933 = vsub.f32 %v1931, %v1932
    %v1934 = vand.u32 %v1933, 4294901760
    %1935 = vmatpush1.msra.mxu0 %v1934
    %1936 = vmatprep.subr.mxu0 0.0
    %1937 = vmatpush1.msra.mxu0 0.0
    %1938 = vmatprep.subr.mxu0 0.0
    %1939 = vmatpush1.msra.mxu0 0.0
    %1940 = vmatprep.subr.mxu0 0.0
    %1941 = vmatpush1.msra.mxu0 0.0
    %1942 = vmatprep.subr.mxu0 0.0
    %1943 = vmatpush1.msra.mxu0 0.0
    %1944 = vmatprep.subr.mxu0 0.0
    %1945 = vmatpush1.msra.mxu0 0.0
    %1946 = vmatprep.subr.mxu0 0.0
    %1947 = vmatpush1.msra.mxu0 0.0
    %1948 = vmatprep.subr.mxu0 0.0
    %1949 = vmatpush1.msra.mxu0 0.0
    %1950 = vmatprep.subr.mxu0 0.0
    %1951 = vmatpush1.msra.mxu0 0.0
    %1952 = vmatprep.subr.mxu0 0.0
    %1953 = vmatpush1.msra.mxu0 0.0
    %1954 = vmatprep.subr.mxu0 0.0
    %1955 = vmatpush1.msra.mxu0 0.0
    %1956 = vmatprep.subr.mxu0 0.0
    %1957 = vmatpush1.msra.mxu0 0.0
    %1958 = vmatprep.subr.mxu0 0.0
    %1959 = vmatpush1.msra.mxu0 0.0
    %1960 = vmatprep.subr.mxu0 0.0
    %1961 = vmatpush1.msra.mxu0 0.0
    %1962 = vmatprep.subr.mxu0 0.0
    %1963 = vmatpush1.msra.mxu0 0.0
    %1964 = vmatprep.subr.mxu0 0.0
    %1965 = vmatpush1.msra.mxu0 0.0
    %1966 = vmatprep.subr.mxu0 0.0
    %1967 = vmatpush1.msra.mxu0 0.0
    %1968 = vmatprep.subr.mxu0 0.0
    %1969 = vmatpush1.msra.mxu0 0.0
    %1970 = vmatprep.subr.mxu0 0.0
    %1971 = vmatpush1.msra.mxu0 0.0
    %1972 = vmatprep.subr.mxu0 0.0
    %1973 = vmatpush1.msra.mxu0 0.0
    %1974 = vmatprep.subr.mxu0 0.0
    %1975 = vmatpush1.msra.mxu0 0.0
    %1976 = vmatprep.subr.mxu0 0.0
    %1977 = vmatpush1.msra.mxu0 0.0
    %1978 = vmatprep.subr.mxu0 0.0
    %1979 = vmatpush1.msra.mxu0 0.0
    %1980 = vmatprep.subr.mxu0 0.0
    %1981 = vmatpush1.msra.mxu0 0.0
    %1982 = vmatprep.subr.mxu0 0.0
    %1983 = vmatpush1.msra.mxu0 0.0
    %1984 = vmatprep.mubr.f32.mxu0 0.0
    %v1985 = vand.u32 %v933, 4294901760
    %1986 = vmatmul.mubr.f32.gmra.mrb[0].mxu0 %v1985
    %v1987 = vpop.f32.mrb[0].mxu0
    %v1988 = vadd.f32 %v1877, %v1987
    %v1989 = vpop.f32.mrb[0].mxu0
    %1990 = vdwg.mxu0
    %1991 = vmatprep.subr.mxu0 0.0
    %v1992 = vand.u32 %v900, 4294901760
    %v1993 = vsub.f32 %v900, %v1992
    %1994 = vmatpush1.msra.mxu0 %v1993
    %1995 = vmatprep.subr.mxu0 0.0
    %v1996 = vand.u32 %v901, 4294901760
    %v1997 = vsub.f32 %v901, %v1996
    %1998 = vmatpush1.msra.mxu0 %v1997
    %1999 = vmatprep.subr.mxu0 0.0
    %v2000 = vand.u32 %v902, 4294901760
    %v2001 = vsub.f32 %v902, %v2000
    %2002 = vmatpush1.msra.mxu0 %v2001
    %2003 = vmatprep.subr.mxu0 0.0
    %v2004 = vand.u32 %v903, 4294901760
    %v2005 = vsub.f32 %v903, %v2004
    %2006 = vmatpush1.msra.mxu0 %v2005
    %2007 = vmatprep.subr.mxu0 0.0
    %v2008 = vand.u32 %v904, 4294901760
    %v2009 = vsub.f32 %v904, %v2008
    %2010 = vmatpush1.msra.mxu0 %v2009
    %2011 = vmatprep.subr.mxu0 0.0
    %v2012 = vand.u32 %v905, 4294901760
    %v2013 = vsub.f32 %v905, %v2012
    %2014 = vmatpush1.msra.mxu0 %v2013
    %2015 = vmatprep.subr.mxu0 0.0
    %v2016 = vand.u32 %v906, 4294901760
    %v2017 = vsub.f32 %v906, %v2016
    %2018 = vmatpush1.msra.mxu0 %v2017
    %2019 = vmatprep.subr.mxu0 0.0
    %v2020 = vand.u32 %v907, 4294901760
    %v2021 = vsub.f32 %v907, %v2020
    %2022 = vmatpush1.msra.mxu0 %v2021
    %2023 = vmatprep.subr.mxu0 0.0
    %2024 = vmatpush1.msra.mxu0 0.0
    %2025 = vmatprep.subr.mxu0 0.0
    %2026 = vmatpush1.msra.mxu0 0.0
    %2027 = vmatprep.subr.mxu0 0.0
    %2028 = vmatpush1.msra.mxu0 0.0
    %2029 = vmatprep.subr.mxu0 0.0
    %2030 = vmatpush1.msra.mxu0 0.0
    %2031 = vmatprep.subr.mxu0 0.0
    %2032 = vmatpush1.msra.mxu0 0.0
    %2033 = vmatprep.subr.mxu0 0.0
    %2034 = vmatpush1.msra.mxu0 0.0
    %2035 = vmatprep.subr.mxu0 0.0
    %2036 = vmatpush1.msra.mxu0 0.0
    %2037 = vmatprep.subr.mxu0 0.0
    %2038 = vmatpush1.msra.mxu0 0.0
    %2039 = vmatprep.subr.mxu0 0.0
    %2040 = vmatpush1.msra.mxu0 0.0
    %2041 = vmatprep.subr.mxu0 0.0
    %2042 = vmatpush1.msra.mxu0 0.0
    %2043 = vmatprep.subr.mxu0 0.0
    %2044 = vmatpush1.msra.mxu0 0.0
    %2045 = vmatprep.subr.mxu0 0.0
    %2046 = vmatpush1.msra.mxu0 0.0
    %2047 = vmatprep.subr.mxu0 0.0
    %2048 = vmatpush1.msra.mxu0 0.0
    %2049 = vmatprep.subr.mxu0 0.0
    %2050 = vmatpush1.msra.mxu0 0.0
    %2051 = vmatprep.subr.mxu0 0.0
    %2052 = vmatpush1.msra.mxu0 0.0
    %2053 = vmatprep.subr.mxu0 0.0
    %2054 = vmatpush1.msra.mxu0 0.0
    %2055 = vmatprep.subr.mxu0 0.0
    %2056 = vmatpush1.msra.mxu0 0.0
    %2057 = vmatprep.subr.mxu0 0.0
    %2058 = vmatpush1.msra.mxu0 0.0
    %2059 = vmatprep.subr.mxu0 0.0
    %2060 = vmatpush1.msra.mxu0 0.0
    %2061 = vmatprep.subr.mxu0 0.0
    %2062 = vmatpush1.msra.mxu0 0.0
    %2063 = vmatprep.subr.mxu0 0.0
    %2064 = vmatpush1.msra.mxu0 0.0
    %2065 = vmatprep.subr.mxu0 0.0
    %2066 = vmatpush1.msra.mxu0 0.0
    %2067 = vmatprep.subr.mxu0 0.0
    %2068 = vmatpush1.msra.mxu0 0.0
    %2069 = vmatprep.subr.mxu0 0.0
    %2070 = vmatpush1.msra.mxu0 0.0
    %2071 = vmatprep.mubr.f32.mxu0 0.0
    %v2072 = vand.u32 %v933, 4294901760
    %v2073 = vsub.f32 %v933, %v2072
    %2074 = vmatmul.mubr.f32.gmra.mrb[0].mxu0 %v2073
    %v2075 = vpop.f32.mrb[0].mxu0
    %v2076 = vadd.f32 %v1988, %v2075
    %v2077 = vpop.f32.mrb[0].mxu0
    %2078 = vdwg.mxu0
    %2079 = vmatprep.subr.mxu0 0.0
    %v2080 = vand.u32 %v900, 4294901760
    %2081 = vmatpush1.msra.mxu0 %v2080
    %2082 = vmatprep.subr.mxu0 0.0
    %v2083 = vand.u32 %v901, 4294901760
    %2084 = vmatpush1.msra.mxu0 %v2083
    %2085 = vmatprep.subr.mxu0 0.0
    %v2086 = vand.u32 %v902, 4294901760
    %2087 = vmatpush1.msra.mxu0 %v2086
    %2088 = vmatprep.subr.mxu0 0.0
    %v2089 = vand.u32 %v903, 4294901760
    %2090 = vmatpush1.msra.mxu0 %v2089
    %2091 = vmatprep.subr.mxu0 0.0
    %v2092 = vand.u32 %v904, 4294901760
    %2093 = vmatpush1.msra.mxu0 %v2092
    %2094 = vmatprep.subr.mxu0 0.0
    %v2095 = vand.u32 %v905, 4294901760
    %2096 = vmatpush1.msra.mxu0 %v2095
    %2097 = vmatprep.subr.mxu0 0.0
    %v2098 = vand.u32 %v906, 4294901760
    %2099 = vmatpush1.msra.mxu0 %v2098
    %2100 = vmatprep.subr.mxu0 0.0
    %v2101 = vand.u32 %v907, 4294901760
    %2102 = vmatpush1.msra.mxu0 %v2101
    %2103 = vmatprep.subr.mxu0 0.0
    %2104 = vmatpush1.msra.mxu0 0.0
    %2105 = vmatprep.subr.mxu0 0.0
    %2106 = vmatpush1.msra.mxu0 0.0
    %2107 = vmatprep.subr.mxu0 0.0
    %2108 = vmatpush1.msra.mxu0 0.0
    %2109 = vmatprep.subr.mxu0 0.0
    %2110 = vmatpush1.msra.mxu0 0.0
    %2111 = vmatprep.subr.mxu0 0.0
    %2112 = vmatpush1.msra.mxu0 0.0
    %2113 = vmatprep.subr.mxu0 0.0
    %2114 = vmatpush1.msra.mxu0 0.0
    %2115 = vmatprep.subr.mxu0 0.0
    %2116 = vmatpush1.msra.mxu0 0.0
    %2117 = vmatprep.subr.mxu0 0.0
    %2118 = vmatpush1.msra.mxu0 0.0
    %2119 = vmatprep.subr.mxu0 0.0
    %2120 = vmatpush1.msra.mxu0 0.0
    %2121 = vmatprep.subr.mxu0 0.0
    %2122 = vmatpush1.msra.mxu0 0.0
    %2123 = vmatprep.subr.mxu0 0.0
    %2124 = vmatpush1.msra.mxu0 0.0
    %2125 = vmatprep.subr.mxu0 0.0
    %2126 = vmatpush1.msra.mxu0 0.0
    %2127 = vmatprep.subr.mxu0 0.0
    %2128 = vmatpush1.msra.mxu0 0.0
    %2129 = vmatprep.subr.mxu0 0.0
    %2130 = vmatpush1.msra.mxu0 0.0
    %2131 = vmatprep.subr.mxu0 0.0
    %2132 = vmatpush1.msra.mxu0 0.0
    %2133 = vmatprep.subr.mxu0 0.0
    %2134 = vmatpush1.msra.mxu0 0.0
    %2135 = vmatprep.subr.mxu0 0.0
    %2136 = vmatpush1.msra.mxu0 0.0
    %2137 = vmatprep.subr.mxu0 0.0
    %2138 = vmatpush1.msra.mxu0 0.0
    %2139 = vmatprep.subr.mxu0 0.0
    %2140 = vmatpush1.msra.mxu0 0.0
    %2141 = vmatprep.subr.mxu0 0.0
    %2142 = vmatpush1.msra.mxu0 0.0
    %2143 = vmatprep.subr.mxu0 0.0
    %2144 = vmatpush1.msra.mxu0 0.0
    %2145 = vmatprep.subr.mxu0 0.0
    %2146 = vmatpush1.msra.mxu0 0.0
    %2147 = vmatprep.subr.mxu0 0.0
    %2148 = vmatpush1.msra.mxu0 0.0
    %2149 = vmatprep.subr.mxu0 0.0
    %2150 = vmatpush1.msra.mxu0 0.0
    %2151 = vmatprep.mubr.f32.mxu0 0.0
    %v2152 = vand.u32 %v933, 4294901760
    %v2153 = vsub.f32 %v933, %v2152
    %v2154 = vand.u32 %v2153, 4294901760
    %2155 = vmatmul.mubr.f32.gmra.mrb[0].mxu0 %v2154
    %v2156 = vpop.f32.mrb[0].mxu0
    %v2157 = vadd.f32 %v2076, %v2156
    %v2158 = vpop.f32.mrb[0].mxu0
    %2159 = vdwg.mxu0
    %2160 = vmatprep.subr.mxu0 0.0
    %v2161 = vand.u32 %v900, 4294901760
    %v2162 = vsub.f32 %v900, %v2161
    %v2163 = vand.u32 %v2162, 4294901760
    %2164 = vmatpush1.msra.mxu0 %v2163
    %2165 = vmatprep.subr.mxu0 0.0
    %v2166 = vand.u32 %v901, 4294901760
    %v2167 = vsub.f32 %v901, %v2166
    %v2168 = vand.u32 %v2167, 4294901760
    %2169 = vmatpush1.msra.mxu0 %v2168
    %2170 = vmatprep.subr.mxu0 0.0
    %v2171 = vand.u32 %v902, 4294901760
    %v2172 = vsub.f32 %v902, %v2171
    %v2173 = vand.u32 %v2172, 4294901760
    %2174 = vmatpush1.msra.mxu0 %v2173
    %2175 = vmatprep.subr.mxu0 0.0
    %v2176 = vand.u32 %v903, 4294901760
    %v2177 = vsub.f32 %v903, %v2176
    %v2178 = vand.u32 %v2177, 4294901760
    %2179 = vmatpush1.msra.mxu0 %v2178
    %2180 = vmatprep.subr.mxu0 0.0
    %v2181 = vand.u32 %v904, 4294901760
    %v2182 = vsub.f32 %v904, %v2181
    %v2183 = vand.u32 %v2182, 4294901760
    %2184 = vmatpush1.msra.mxu0 %v2183
    %2185 = vmatprep.subr.mxu0 0.0
    %v2186 = vand.u32 %v905, 4294901760
    %v2187 = vsub.f32 %v905, %v2186
    %v2188 = vand.u32 %v2187, 4294901760
    %2189 = vmatpush1.msra.mxu0 %v2188
    %2190 = vmatprep.subr.mxu0 0.0
    %v2191 = vand.u32 %v906, 4294901760
    %v2192 = vsub.f32 %v906, %v2191
    %v2193 = vand.u32 %v2192, 4294901760
    %2194 = vmatpush1.msra.mxu0 %v2193
    %2195 = vmatprep.subr.mxu0 0.0
    %v2196 = vand.u32 %v907, 4294901760
    %v2197 = vsub.f32 %v907, %v2196
    %v2198 = vand.u32 %v2197, 4294901760
    %2199 = vmatpush1.msra.mxu0 %v2198
    %2200 = vmatprep.subr.mxu0 0.0
    %2201 = vmatpush1.msra.mxu0 0.0
    %2202 = vmatprep.subr.mxu0 0.0
    %2203 = vmatpush1.msra.mxu0 0.0
    %2204 = vmatprep.subr.mxu0 0.0
    %2205 = vmatpush1.msra.mxu0 0.0
    %2206 = vmatprep.subr.mxu0 0.0
    %2207 = vmatpush1.msra.mxu0 0.0
    %2208 = vmatprep.subr.mxu0 0.0
    %2209 = vmatpush1.msra.mxu0 0.0
    %2210 = vmatprep.subr.mxu0 0.0
    %2211 = vmatpush1.msra.mxu0 0.0
    %2212 = vmatprep.subr.mxu0 0.0
    %2213 = vmatpush1.msra.mxu0 0.0
    %2214 = vmatprep.subr.mxu0 0.0
    %2215 = vmatpush1.msra.mxu0 0.0
    %2216 = vmatprep.subr.mxu0 0.0
    %2217 = vmatpush1.msra.mxu0 0.0
    %2218 = vmatprep.subr.mxu0 0.0
    %2219 = vmatpush1.msra.mxu0 0.0
    %2220 = vmatprep.subr.mxu0 0.0
    %2221 = vmatpush1.msra.mxu0 0.0
    %2222 = vmatprep.subr.mxu0 0.0
    %2223 = vmatpush1.msra.mxu0 0.0
    %2224 = vmatprep.subr.mxu0 0.0
    %2225 = vmatpush1.msra.mxu0 0.0
    %2226 = vmatprep.subr.mxu0 0.0
    %2227 = vmatpush1.msra.mxu0 0.0
    %2228 = vmatprep.subr.mxu0 0.0
    %2229 = vmatpush1.msra.mxu0 0.0
    %2230 = vmatprep.subr.mxu0 0.0
    %2231 = vmatpush1.msra.mxu0 0.0
    %2232 = vmatprep.subr.mxu0 0.0
    %2233 = vmatpush1.msra.mxu0 0.0
    %2234 = vmatprep.subr.mxu0 0.0
    %2235 = vmatpush1.msra.mxu0 0.0
    %2236 = vmatprep.subr.mxu0 0.0
    %2237 = vmatpush1.msra.mxu0 0.0
    %2238 = vmatprep.subr.mxu0 0.0
    %2239 = vmatpush1.msra.mxu0 0.0
    %2240 = vmatprep.subr.mxu0 0.0
    %2241 = vmatpush1.msra.mxu0 0.0
    %2242 = vmatprep.subr.mxu0 0.0
    %2243 = vmatpush1.msra.mxu0 0.0
    %2244 = vmatprep.subr.mxu0 0.0
    %2245 = vmatpush1.msra.mxu0 0.0
    %2246 = vmatprep.subr.mxu0 0.0
    %2247 = vmatpush1.msra.mxu0 0.0
    %2248 = vmatprep.mubr.f32.mxu0 0.0
    %v2249 = vand.u32 %v933, 4294901760
    %2250 = vmatmul.mubr.f32.gmra.mrb[0].mxu0 %v2249
    %v2251 = vpop.f32.mrb[0].mxu0
    %v2252 = vadd.f32 %v2157, %v2251
    %v2253 = vpop.f32.mrb[0].mxu0
    %2254 = vdwg.mxu0
    %2255 = vmatprep.subr.mxu0 0.0
    %v2256 = vand.u32 %v900, 4294901760
    %2257 = vmatpush1.msra.mxu0 %v2256
    %2258 = vmatprep.subr.mxu0 0.0
    %v2259 = vand.u32 %v901, 4294901760
    %2260 = vmatpush1.msra.mxu0 %v2259
    %2261 = vmatprep.subr.mxu0 0.0
    %v2262 = vand.u32 %v902, 4294901760
    %2263 = vmatpush1.msra.mxu0 %v2262
    %2264 = vmatprep.subr.mxu0 0.0
    %v2265 = vand.u32 %v903, 4294901760
    %2266 = vmatpush1.msra.mxu0 %v2265
    %2267 = vmatprep.subr.mxu0 0.0
    %v2268 = vand.u32 %v904, 4294901760
    %2269 = vmatpush1.msra.mxu0 %v2268
    %2270 = vmatprep.subr.mxu0 0.0
    %v2271 = vand.u32 %v905, 4294901760
    %2272 = vmatpush1.msra.mxu0 %v2271
    %2273 = vmatprep.subr.mxu0 0.0
    %v2274 = vand.u32 %v906, 4294901760
    %2275 = vmatpush1.msra.mxu0 %v2274
    %2276 = vmatprep.subr.mxu0 0.0
    %v2277 = vand.u32 %v907, 4294901760
    %2278 = vmatpush1.msra.mxu0 %v2277
    %2279 = vmatprep.subr.mxu0 0.0
    %2280 = vmatpush1.msra.mxu0 0.0
    %2281 = vmatprep.subr.mxu0 0.0
    %2282 = vmatpush1.msra.mxu0 0.0
    %2283 = vmatprep.subr.mxu0 0.0
    %2284 = vmatpush1.msra.mxu0 0.0
    %2285 = vmatprep.subr.mxu0 0.0
    %2286 = vmatpush1.msra.mxu0 0.0
    %2287 = vmatprep.subr.mxu0 0.0
    %2288 = vmatpush1.msra.mxu0 0.0
    %2289 = vmatprep.subr.mxu0 0.0
    %2290 = vmatpush1.msra.mxu0 0.0
    %2291 = vmatprep.subr.mxu0 0.0
    %2292 = vmatpush1.msra.mxu0 0.0
    %2293 = vmatprep.subr.mxu0 0.0
    %2294 = vmatpush1.msra.mxu0 0.0
    %2295 = vmatprep.subr.mxu0 0.0
    %2296 = vmatpush1.msra.mxu0 0.0
    %2297 = vmatprep.subr.mxu0 0.0
    %2298 = vmatpush1.msra.mxu0 0.0
    %2299 = vmatprep.subr.mxu0 0.0
    %2300 = vmatpush1.msra.mxu0 0.0
    %2301 = vmatprep.subr.mxu0 0.0
    %2302 = vmatpush1.msra.mxu0 0.0
    %2303 = vmatprep.subr.mxu0 0.0
    %2304 = vmatpush1.msra.mxu0 0.0
    %2305 = vmatprep.subr.mxu0 0.0
    %2306 = vmatpush1.msra.mxu0 0.0
    %2307 = vmatprep.subr.mxu0 0.0
    %2308 = vmatpush1.msra.mxu0 0.0
    %2309 = vmatprep.subr.mxu0 0.0
    %2310 = vmatpush1.msra.mxu0 0.0
    %2311 = vmatprep.subr.mxu0 0.0
    %2312 = vmatpush1.msra.mxu0 0.0
    %2313 = vmatprep.subr.mxu0 0.0
    %2314 = vmatpush1.msra.mxu0 0.0
    %2315 = vmatprep.subr.mxu0 0.0
    %2316 = vmatpush1.msra.mxu0 0.0
    %2317 = vmatprep.subr.mxu0 0.0
    %2318 = vmatpush1.msra.mxu0 0.0
    %2319 = vmatprep.subr.mxu0 0.0
    %2320 = vmatpush1.msra.mxu0 0.0
    %2321 = vmatprep.subr.mxu0 0.0
    %2322 = vmatpush1.msra.mxu0 0.0
    %2323 = vmatprep.subr.mxu0 0.0
    %2324 = vmatpush1.msra.mxu0 0.0
    %2325 = vmatprep.subr.mxu0 0.0
    %2326 = vmatpush1.msra.mxu0 0.0
    %2327 = vmatprep.mubr.f32.mxu0 0.0
    %v2328 = vand.u32 %v933, 4294901760
    %2329 = vmatmul.mubr.f32.gmra.mrb[0].mxu0 %v2328
    %v2330 = vpop.f32.mrb[0].mxu0
    %v2331 = vadd.f32 %v2252, %v2330
    %v2332 = vpop.f32.mrb[0].mxu0
    %2333 = vdwg.mxu0
    %v2334 = vadd.f32 %v930, %v2331
    %vm2335 = vcmask 125952
    %2336 = vst.msk [vmem:[#allocation3] sm:$0xf] %vm2335, %v2334
    // Predicated region
    $region50: #{tpu_custom_call.1} parent=1 // pred_check
      %p2337 = pneg %p39
    $region51: #{tpu_custom_call.1} parent=1 // pred_check_branch
      %2339 = sbr.rel (%p2337) target = $region53
    $region52: #{tpu_custom_call.1} parent=1 // pred_region
      %v2340 = vld [vmem:[#allocation2] sm:$0xf]
      %v2341 = vld [vmem:[%s5] sm:$0xff]
      %v2342 = vld [vmem:[%s5 + $0x8] sm:$0xf]
      %v2343 = vld [vmem:[#allocation3] sm:$0xf]
      %v2344 = vld [vmem:[%s6] sm:$0xff]
      %v2345 = vld [vmem:[%s6 + $0x8] sm:$0xff]
      %vm2346 = vcmask 130048
      %v2348 = vsel %vm2346, %v2343, 0
      %2350 = vmatprep.subr.mxu0 0.0
      %v2351 = vand.u32 %v2344, 4294901760
      %2352 = vmatpush1.msra.mxu0 %v2351
      %2353 = vmatprep.subr.mxu0 0.0
      %v2354 = vand.u32 %v2345, 4294901760
      %2355 = vmatpush1.msra.mxu0 %v2354
      %2356 = vmatprep.subr.mxu0 0.0
      %2357 = vmatpush1.msra.mxu0 0.0
      %2358 = vmatprep.subr.mxu0 0.0
      %2359 = vmatpush1.msra.mxu0 0.0
      %2360 = vmatprep.subr.mxu0 0.0
      %2361 = vmatpush1.msra.mxu0 0.0
      %2362 = vmatprep.subr.mxu0 0.0
      %2363 = vmatpush1.msra.mxu0 0.0
      %2364 = vmatprep.subr.mxu0 0.0
      %2365 = vmatpush1.msra.mxu0 0.0
      %2366 = vmatprep.subr.mxu0 0.0
      %2367 = vmatpush1.msra.mxu0 0.0
      %2368 = vmatprep.subr.mxu0 0.0
      %2369 = vmatpush1.msra.mxu0 0.0
      %2370 = vmatprep.subr.mxu0 0.0
      %2371 = vmatpush1.msra.mxu0 0.0
      %2372 = vmatprep.subr.mxu0 0.0
      %2373 = vmatpush1.msra.mxu0 0.0
      %2374 = vmatprep.subr.mxu0 0.0
      %2375 = vmatpush1.msra.mxu0 0.0
      %2376 = vmatprep.subr.mxu0 0.0
      %2377 = vmatpush1.msra.mxu0 0.0
      %2378 = vmatprep.subr.mxu0 0.0
      %2379 = vmatpush1.msra.mxu0 0.0
      %2380 = vmatprep.subr.mxu0 0.0
      %2381 = vmatpush1.msra.mxu0 0.0
      %2382 = vmatprep.subr.mxu0 0.0
      %2383 = vmatpush1.msra.mxu0 0.0
      %2384 = vmatprep.subr.mxu0 0.0
      %2385 = vmatpush1.msra.mxu0 0.0
      %2386 = vmatprep.subr.mxu0 0.0
      %2387 = vmatpush1.msra.mxu0 0.0
      %2388 = vmatprep.subr.mxu0 0.0
      %2389 = vmatpush1.msra.mxu0 0.0
      %2390 = vmatprep.subr.mxu0 0.0
      %2391 = vmatpush1.msra.mxu0 0.0
      %2392 = vmatprep.subr.mxu0 0.0
      %2393 = vmatpush1.msra.mxu0 0.0
      %2394 = vmatprep.subr.mxu0 0.0
      %2395 = vmatpush1.msra.mxu0 0.0
      %2396 = vmatprep.subr.mxu0 0.0
      %2397 = vmatpush1.msra.mxu0 0.0
      %2398 = vmatprep.subr.mxu0 0.0
      %2399 = vmatpush1.msra.mxu0 0.0
      %2400 = vmatprep.subr.mxu0 0.0
      %2401 = vmatpush1.msra.mxu0 0.0
      %2402 = vmatprep.subr.mxu0 0.0
      %2403 = vmatpush1.msra.mxu0 0.0
      %2404 = vmatprep.subr.mxu0 0.0
      %2405 = vmatpush1.msra.mxu0 0.0
      %2406 = vmatprep.subr.mxu0 0.0
      %2407 = vmatpush1.msra.mxu0 0.0
      %2408 = vmatprep.subr.mxu0 0.0
      %2409 = vmatpush1.msra.mxu0 0.0
      %2410 = vmatprep.subr.mxu0 0.0
      %2411 = vmatpush1.msra.mxu0 0.0
      %2412 = vmatprep.subr.mxu0 0.0
      %2413 = vmatpush1.msra.mxu0 0.0
      %2414 = vmatprep.subr.mxu0 0.0
      %2415 = vmatpush1.msra.mxu0 0.0
      %2416 = vmatprep.mubr.f32.mxu0 0.0
      %v2417 = vand.u32 %v2348, 4294901760
      %v2418 = vsub.f32 %v2348, %v2417
      %v2419 = vand.u32 %v2418, 4294901760
      %v2420 = vsub.f32 %v2418, %v2419
      %v2421 = vand.u32 %v2420, 4294901760
      %2422 = vmatmul.mubr.f32.gmra.mrb[0].mxu0 %v2421
      %v2423 = vpop.f32.mrb[0].mxu0
      %v2424 = vadd.f32 0.0, %v2423
      %v2425 = vpop.f32.mrb[0].mxu0
      %2426 = vdwg.mxu0
      %2427 = vmatprep.subr.mxu0 0.0
      %v2428 = vand.u32 %v2344, 4294901760
      %v2429 = vsub.f32 %v2344, %v2428
      %v2430 = vand.u32 %v2429, 4294901760
      %v2431 = vsub.f32 %v2429, %v2430
      %v2432 = vand.u32 %v2431, 4294901760
      %2433 = vmatpush1.msra.mxu0 %v2432
      %2434 = vmatprep.subr.mxu0 0.0
      %v2435 = vand.u32 %v2345, 4294901760
      %v2436 = vsub.f32 %v2345, %v2435
      %v2437 = vand.u32 %v2436, 4294901760
      %v2438 = vsub.f32 %v2436, %v2437
      %v2439 = vand.u32 %v2438, 4294901760
      %2440 = vmatpush1.msra.mxu0 %v2439
      %2441 = vmatprep.subr.mxu0 0.0
      %2442 = vmatpush1.msra.mxu0 0.0
      %2443 = vmatprep.subr.mxu0 0.0
      %2444 = vmatpush1.msra.mxu0 0.0
      %2445 = vmatprep.subr.mxu0 0.0
      %2446 = vmatpush1.msra.mxu0 0.0
      %2447 = vmatprep.subr.mxu0 0.0
      %2448 = vmatpush1.msra.mxu0 0.0
      %2449 = vmatprep.subr.mxu0 0.0
      %2450 = vmatpush1.msra.mxu0 0.0
      %2451 = vmatprep.subr.mxu0 0.0
      %2452 = vmatpush1.msra.mxu0 0.0
      %2453 = vmatprep.subr.mxu0 0.0
      %2454 = vmatpush1.msra.mxu0 0.0
      %2455 = vmatprep.subr.mxu0 0.0
      %2456 = vmatpush1.msra.mxu0 0.0
      %2457 = vmatprep.subr.mxu0 0.0
      %2458 = vmatpush1.msra.mxu0 0.0
      %2459 = vmatprep.subr.mxu0 0.0
      %2460 = vmatpush1.msra.mxu0 0.0
      %2461 = vmatprep.subr.mxu0 0.0
      %2462 = vmatpush1.msra.mxu0 0.0
      %2463 = vmatprep.subr.mxu0 0.0
      %2464 = vmatpush1.msra.mxu0 0.0
      %2465 = vmatprep.subr.mxu0 0.0
      %2466 = vmatpush1.msra.mxu0 0.0
      %2467 = vmatprep.subr.mxu0 0.0
      %2468 = vmatpush1.msra.mxu0 0.0
      %2469 = vmatprep.subr.mxu0 0.0
      %2470 = vmatpush1.msra.mxu0 0.0
      %2471 = vmatprep.subr.mxu0 0.0
      %2472 = vmatpush1.msra.mxu0 0.0
      %2473 = vmatprep.subr.mxu0 0.0
      %2474 = vmatpush1.msra.mxu0 0.0
      %2475 = vmatprep.subr.mxu0 0.0
      %2476 = vmatpush1.msra.mxu0 0.0
      %2477 = vmatprep.subr.mxu0 0.0
      %2478 = vmatpush1.msra.mxu0 0.0
      %2479 = vmatprep.subr.mxu0 0.0
      %2480 = vmatpush1.msra.mxu0 0.0
      %2481 = vmatprep.subr.mxu0 0.0
      %2482 = vmatpush1.msra.mxu0 0.0
      %2483 = vmatprep.subr.mxu0 0.0
      %2484 = vmatpush1.msra.mxu0 0.0
      %2485 = vmatprep.subr.mxu0 0.0
      %2486 = vmatpush1.msra.mxu0 0.0
      %2487 = vmatprep.subr.mxu0 0.0
      %2488 = vmatpush1.msra.mxu0 0.0
      %2489 = vmatprep.subr.mxu0 0.0
      %2490 = vmatpush1.msra.mxu0 0.0
      %2491 = vmatprep.subr.mxu0 0.0
      %2492 = vmatpush1.msra.mxu0 0.0
      %2493 = vmatprep.subr.mxu0 0.0
      %2494 = vmatpush1.msra.mxu0 0.0
      %2495 = vmatprep.subr.mxu0 0.0
      %2496 = vmatpush1.msra.mxu0 0.0
      %2497 = vmatprep.subr.mxu0 0.0
      %2498 = vmatpush1.msra.mxu0 0.0
      %2499 = vmatprep.subr.mxu0 0.0
      %2500 = vmatpush1.msra.mxu0 0.0
      %2501 = vmatprep.mubr.f32.mxu0 0.0
      %v2502 = vand.u32 %v2348, 4294901760
      %2503 = vmatmul.mubr.f32.gmra.mrb[0].mxu0 %v2502
      %v2504 = vpop.f32.mrb[0].mxu0
      %v2505 = vadd.f32 %v2424, %v2504
      %v2506 = vpop.f32.mrb[0].mxu0
      %2507 = vdwg.mxu0
      %2508 = vmatprep.subr.mxu0 0.0
      %v2509 = vand.u32 %v2344, 4294901760
      %v2510 = vsub.f32 %v2344, %v2509
      %2511 = vmatpush1.msra.mxu0 %v2510
      %2512 = vmatprep.subr.mxu0 0.0
      %v2513 = vand.u32 %v2345, 4294901760
      %v2514 = vsub.f32 %v2345, %v2513
      %2515 = vmatpush1.msra.mxu0 %v2514
      %2516 = vmatprep.subr.mxu0 0.0
      %2517 = vmatpush1.msra.mxu0 0.0
      %2518 = vmatprep.subr.mxu0 0.0
      %2519 = vmatpush1.msra.mxu0 0.0
      %2520 = vmatprep.subr.mxu0 0.0
      %2521 = vmatpush1.msra.mxu0 0.0
      %2522 = vmatprep.subr.mxu0 0.0
      %2523 = vmatpush1.msra.mxu0 0.0
      %2524 = vmatprep.subr.mxu0 0.0
      %2525 = vmatpush1.msra.mxu0 0.0
      %2526 = vmatprep.subr.mxu0 0.0
      %2527 = vmatpush1.msra.mxu0 0.0
      %2528 = vmatprep.subr.mxu0 0.0
      %2529 = vmatpush1.msra.mxu0 0.0
      %2530 = vmatprep.subr.mxu0 0.0
      %2531 = vmatpush1.msra.mxu0 0.0
      %2532 = vmatprep.subr.mxu0 0.0
      %2533 = vmatpush1.msra.mxu0 0.0
      %2534 = vmatprep.subr.mxu0 0.0
      %2535 = vmatpush1.msra.mxu0 0.0
      %2536 = vmatprep.subr.mxu0 0.0
      %2537 = vmatpush1.msra.mxu0 0.0
      %2538 = vmatprep.subr.mxu0 0.0
      %2539 = vmatpush1.msra.mxu0 0.0
      %2540 = vmatprep.subr.mxu0 0.0
      %2541 = vmatpush1.msra.mxu0 0.0
      %2542 = vmatprep.subr.mxu0 0.0
      %2543 = vmatpush1.msra.mxu0 0.0
      %2544 = vmatprep.subr.mxu0 0.0
      %2545 = vmatpush1.msra.mxu0 0.0
      %2546 = vmatprep.subr.mxu0 0.0
      %2547 = vmatpush1.msra.mxu0 0.0
      %2548 = vmatprep.subr.mxu0 0.0
      %2549 = vmatpush1.msra.mxu0 0.0
      %2550 = vmatprep.subr.mxu0 0.0
      %2551 = vmatpush1.msra.mxu0 0.0
      %2552 = vmatprep.subr.mxu0 0.0
      %2553 = vmatpush1.msra.mxu0 0.0
      %2554 = vmatprep.subr.mxu0 0.0
      %2555 = vmatpush1.msra.mxu0 0.0
      %2556 = vmatprep.subr.mxu0 0.0
      %2557 = vmatpush1.msra.mxu0 0.0
      %2558 = vmatprep.subr.mxu0 0.0
      %2559 = vmatpush1.msra.mxu0 0.0
      %2560 = vmatprep.subr.mxu0 0.0
      %2561 = vmatpush1.msra.mxu0 0.0
      %2562 = vmatprep.subr.mxu0 0.0
      %2563 = vmatpush1.msra.mxu0 0.0
      %2564 = vmatprep.subr.mxu0 0.0
      %2565 = vmatpush1.msra.mxu0 0.0
      %2566 = vmatprep.subr.mxu0 0.0
      %2567 = vmatpush1.msra.mxu0 0.0
      %2568 = vmatprep.subr.mxu0 0.0
      %2569 = vmatpush1.msra.mxu0 0.0
      %2570 = vmatprep.subr.mxu0 0.0
      %2571 = vmatpush1.msra.mxu0 0.0
      %2572 = vmatprep.subr.mxu0 0.0
      %2573 = vmatpush1.msra.mxu0 0.0
      %2574 = vmatprep.subr.mxu0 0.0
      %2575 = vmatpush1.msra.mxu0 0.0
      %2576 = vmatprep.mubr.f32.mxu0 0.0
      %v2577 = vand.u32 %v2348, 4294901760
      %v2578 = vsub.f32 %v2348, %v2577
      %2579 = vmatmul.mubr.f32.gmra.mrb[0].mxu0 %v2578
      %v2580 = vpop.f32.mrb[0].mxu0
      %v2581 = vadd.f32 %v2505, %v2580
      %v2582 = vpop.f32.mrb[0].mxu0
      %2583 = vdwg.mxu0
      %2584 = vmatprep.subr.mxu0 0.0
      %v2585 = vand.u32 %v2344, 4294901760
      %2586 = vmatpush1.msra.mxu0 %v2585
      %2587 = vmatprep.subr.mxu0 0.0
      %v2588 = vand.u32 %v2345, 4294901760
      %2589 = vmatpush1.msra.mxu0 %v2588
      %2590 = vmatprep.subr.mxu0 0.0
      %2591 = vmatpush1.msra.mxu0 0.0
      %2592 = vmatprep.subr.mxu0 0.0
      %2593 = vmatpush1.msra.mxu0 0.0
      %2594 = vmatprep.subr.mxu0 0.0
      %2595 = vmatpush1.msra.mxu0 0.0
      %2596 = vmatprep.subr.mxu0 0.0
      %2597 = vmatpush1.msra.mxu0 0.0
      %2598 = vmatprep.subr.mxu0 0.0
      %2599 = vmatpush1.msra.mxu0 0.0
      %2600 = vmatprep.subr.mxu0 0.0
      %2601 = vmatpush1.msra.mxu0 0.0
      %2602 = vmatprep.subr.mxu0 0.0
      %2603 = vmatpush1.msra.mxu0 0.0
      %2604 = vmatprep.subr.mxu0 0.0
      %2605 = vmatpush1.msra.mxu0 0.0
      %2606 = vmatprep.subr.mxu0 0.0
      %2607 = vmatpush1.msra.mxu0 0.0
      %2608 = vmatprep.subr.mxu0 0.0
      %2609 = vmatpush1.msra.mxu0 0.0
      %2610 = vmatprep.subr.mxu0 0.0
      %2611 = vmatpush1.msra.mxu0 0.0
      %2612 = vmatprep.subr.mxu0 0.0
      %2613 = vmatpush1.msra.mxu0 0.0
      %2614 = vmatprep.subr.mxu0 0.0
      %2615 = vmatpush1.msra.mxu0 0.0
      %2616 = vmatprep.subr.mxu0 0.0
      %2617 = vmatpush1.msra.mxu0 0.0
      %2618 = vmatprep.subr.mxu0 0.0
      %2619 = vmatpush1.msra.mxu0 0.0
      %2620 = vmatprep.subr.mxu0 0.0
      %2621 = vmatpush1.msra.mxu0 0.0
      %2622 = vmatprep.subr.mxu0 0.0
      %2623 = vmatpush1.msra.mxu0 0.0
      %2624 = vmatprep.subr.mxu0 0.0
      %2625 = vmatpush1.msra.mxu0 0.0
      %2626 = vmatprep.subr.mxu0 0.0
      %2627 = vmatpush1.msra.mxu0 0.0
      %2628 = vmatprep.subr.mxu0 0.0
      %2629 = vmatpush1.msra.mxu0 0.0
      %2630 = vmatprep.subr.mxu0 0.0
      %2631 = vmatpush1.msra.mxu0 0.0
      %2632 = vmatprep.subr.mxu0 0.0
      %2633 = vmatpush1.msra.mxu0 0.0
      %2634 = vmatprep.subr.mxu0 0.0
      %2635 = vmatpush1.msra.mxu0 0.0
      %2636 = vmatprep.subr.mxu0 0.0
      %2637 = vmatpush1.msra.mxu0 0.0
      %2638 = vmatprep.subr.mxu0 0.0
      %2639 = vmatpush1.msra.mxu0 0.0
      %2640 = vmatprep.subr.mxu0 0.0
      %2641 = vmatpush1.msra.mxu0 0.0
      %2642 = vmatprep.subr.mxu0 0.0
      %2643 = vmatpush1.msra.mxu0 0.0
      %2644 = vmatprep.subr.mxu0 0.0
      %2645 = vmatpush1.msra.mxu0 0.0
      %2646 = vmatprep.subr.mxu0 0.0
      %2647 = vmatpush1.msra.mxu0 0.0
      %2648 = vmatprep.subr.mxu0 0.0
      %2649 = vmatpush1.msra.mxu0 0.0
      %2650 = vmatprep.mubr.f32.mxu0 0.0
      %v2651 = vand.u32 %v2348, 4294901760
      %v2652 = vsub.f32 %v2348, %v2651
      %v2653 = vand.u32 %v2652, 4294901760
      %2654 = vmatmul.mubr.f32.gmra.mrb[0].mxu0 %v2653
      %v2655 = vpop.f32.mrb[0].mxu0
      %v2656 = vadd.f32 %v2581, %v2655
      %v2657 = vpop.f32.mrb[0].mxu0
      %2658 = vdwg.mxu0
      %2659 = vmatprep.subr.mxu0 0.0
      %v2660 = vand.u32 %v2344, 4294901760
      %v2661 = vsub.f32 %v2344, %v2660
      %v2662 = vand.u32 %v2661, 4294901760
      %2663 = vmatpush1.msra.mxu0 %v2662
      %2664 = vmatprep.subr.mxu0 0.0
      %v2665 = vand.u32 %v2345, 4294901760
      %v2666 = vsub.f32 %v2345, %v2665
      %v2667 = vand.u32 %v2666, 4294901760
      %2668 = vmatpush1.msra.mxu0 %v2667
      %2669 = vmatprep.subr.mxu0 0.0
      %2670 = vmatpush1.msra.mxu0 0.0
      %2671 = vmatprep.subr.mxu0 0.0
      %2672 = vmatpush1.msra.mxu0 0.0
      %2673 = vmatprep.subr.mxu0 0.0
      %2674 = vmatpush1.msra.mxu0 0.0
      %2675 = vmatprep.subr.mxu0 0.0
      %2676 = vmatpush1.msra.mxu0 0.0
      %2677 = vmatprep.subr.mxu0 0.0
      %2678 = vmatpush1.msra.mxu0 0.0
      %2679 = vmatprep.subr.mxu0 0.0
      %2680 = vmatpush1.msra.mxu0 0.0
      %2681 = vmatprep.subr.mxu0 0.0
      %2682 = vmatpush1.msra.mxu0 0.0
      %2683 = vmatprep.subr.mxu0 0.0
      %2684 = vmatpush1.msra.mxu0 0.0
      %2685 = vmatprep.subr.mxu0 0.0
      %2686 = vmatpush1.msra.mxu0 0.0
      %2687 = vmatprep.subr.mxu0 0.0
      %2688 = vmatpush1.msra.mxu0 0.0
      %2689 = vmatprep.subr.mxu0 0.0
      %2690 = vmatpush1.msra.mxu0 0.0
      %2691 = vmatprep.subr.mxu0 0.0
      %2692 = vmatpush1.msra.mxu0 0.0
      %2693 = vmatprep.subr.mxu0 0.0
      %2694 = vmatpush1.msra.mxu0 0.0
      %2695 = vmatprep.subr.mxu0 0.0
      %2696 = vmatpush1.msra.mxu0 0.0
      %2697 = vmatprep.subr.mxu0 0.0
      %2698 = vmatpush1.msra.mxu0 0.0
      %2699 = vmatprep.subr.mxu0 0.0
      %2700 = vmatpush1.msra.mxu0 0.0
      %2701 = vmatprep.subr.mxu0 0.0
      %2702 = vmatpush1.msra.mxu0 0.0
      %2703 = vmatprep.subr.mxu0 0.0
      %2704 = vmatpush1.msra.mxu0 0.0
      %2705 = vmatprep.subr.mxu0 0.0
      %2706 = vmatpush1.msra.mxu0 0.0
      %2707 = vmatprep.subr.mxu0 0.0
      %2708 = vmatpush1.msra.mxu0 0.0
      %2709 = vmatprep.subr.mxu0 0.0
      %2710 = vmatpush1.msra.mxu0 0.0
      %2711 = vmatprep.subr.mxu0 0.0
      %2712 = vmatpush1.msra.mxu0 0.0
      %2713 = vmatprep.subr.mxu0 0.0
      %2714 = vmatpush1.msra.mxu0 0.0
      %2715 = vmatprep.subr.mxu0 0.0
      %2716 = vmatpush1.msra.mxu0 0.0
      %2717 = vmatprep.subr.mxu0 0.0
      %2718 = vmatpush1.msra.mxu0 0.0
      %2719 = vmatprep.subr.mxu0 0.0
      %2720 = vmatpush1.msra.mxu0 0.0
      %2721 = vmatprep.subr.mxu0 0.0
      %2722 = vmatpush1.msra.mxu0 0.0
      %2723 = vmatprep.subr.mxu0 0.0
      %2724 = vmatpush1.msra.mxu0 0.0
      %2725 = vmatprep.subr.mxu0 0.0
      %2726 = vmatpush1.msra.mxu0 0.0
      %2727 = vmatprep.subr.mxu0 0.0
      %2728 = vmatpush1.msra.mxu0 0.0
      %2729 = vmatprep.mubr.f32.mxu0 0.0
      %v2730 = vand.u32 %v2348, 4294901760
      %2731 = vmatmul.mubr.f32.gmra.mrb[0].mxu0 %v2730
      %v2732 = vpop.f32.mrb[0].mxu0
      %v2733 = vadd.f32 %v2656, %v2732
      %v2734 = vpop.f32.mrb[0].mxu0
      %2735 = vdwg.mxu0
      %2736 = vmatprep.subr.mxu0 0.0
      %v2737 = vand.u32 %v2344, 4294901760
      %2738 = vmatpush1.msra.mxu0 %v2737
      %2739 = vmatprep.subr.mxu0 0.0
      %v2740 = vand.u32 %v2345, 4294901760
      %2741 = vmatpush1.msra.mxu0 %v2740
      %2742 = vmatprep.subr.mxu0 0.0
      %2743 = vmatpush1.msra.mxu0 0.0
      %2744 = vmatprep.subr.mxu0 0.0
      %2745 = vmatpush1.msra.mxu0 0.0
      %2746 = vmatprep.subr.mxu0 0.0
      %2747 = vmatpush1.msra.mxu0 0.0
      %2748 = vmatprep.subr.mxu0 0.0
      %2749 = vmatpush1.msra.mxu0 0.0
      %2750 = vmatprep.subr.mxu0 0.0
      %2751 = vmatpush1.msra.mxu0 0.0
      %2752 = vmatprep.subr.mxu0 0.0
      %2753 = vmatpush1.msra.mxu0 0.0
      %2754 = vmatprep.subr.mxu0 0.0
      %2755 = vmatpush1.msra.mxu0 0.0
      %2756 = vmatprep.subr.mxu0 0.0
      %2757 = vmatpush1.msra.mxu0 0.0
      %2758 = vmatprep.subr.mxu0 0.0
      %2759 = vmatpush1.msra.mxu0 0.0
      %2760 = vmatprep.subr.mxu0 0.0
      %2761 = vmatpush1.msra.mxu0 0.0
      %2762 = vmatprep.subr.mxu0 0.0
      %2763 = vmatpush1.msra.mxu0 0.0
      %2764 = vmatprep.subr.mxu0 0.0
      %2765 = vmatpush1.msra.mxu0 0.0
      %2766 = vmatprep.subr.mxu0 0.0
      %2767 = vmatpush1.msra.mxu0 0.0
      %2768 = vmatprep.subr.mxu0 0.0
      %2769 = vmatpush1.msra.mxu0 0.0
      %2770 = vmatprep.subr.mxu0 0.0
      %2771 = vmatpush1.msra.mxu0 0.0
      %2772 = vmatprep.subr.mxu0 0.0
      %2773 = vmatpush1.msra.mxu0 0.0
      %2774 = vmatprep.subr.mxu0 0.0
      %2775 = vmatpush1.msra.mxu0 0.0
      %2776 = vmatprep.subr.mxu0 0.0
      %2777 = vmatpush1.msra.mxu0 0.0
      %2778 = vmatprep.subr.mxu0 0.0
      %2779 = vmatpush1.msra.mxu0 0.0
      %2780 = vmatprep.subr.mxu0 0.0
      %2781 = vmatpush1.msra.mxu0 0.0
      %2782 = vmatprep.subr.mxu0 0.0
      %2783 = vmatpush1.msra.mxu0 0.0
      %2784 = vmatprep.subr.mxu0 0.0
      %2785 = vmatpush1.msra.mxu0 0.0
      %2786 = vmatprep.subr.mxu0 0.0
      %2787 = vmatpush1.msra.mxu0 0.0
      %2788 = vmatprep.subr.mxu0 0.0
      %2789 = vmatpush1.msra.mxu0 0.0
      %2790 = vmatprep.subr.mxu0 0.0
      %2791 = vmatpush1.msra.mxu0 0.0
      %2792 = vmatprep.subr.mxu0 0.0
      %2793 = vmatpush1.msra.mxu0 0.0
      %2794 = vmatprep.subr.mxu0 0.0
      %2795 = vmatpush1.msra.mxu0 0.0
      %2796 = vmatprep.subr.mxu0 0.0
      %2797 = vmatpush1.msra.mxu0 0.0
      %2798 = vmatprep.subr.mxu0 0.0
      %2799 = vmatpush1.msra.mxu0 0.0
      %2800 = vmatprep.subr.mxu0 0.0
      %2801 = vmatpush1.msra.mxu0 0.0
      %2802 = vmatprep.mubr.f32.mxu0 0.0
      %v2803 = vand.u32 %v2348, 4294901760
      %2804 = vmatmul.mubr.f32.gmra.mrb[0].mxu0 %v2803
      %v2805 = vpop.f32.mrb[0].mxu0
      %v2806 = vadd.f32 %v2733, %v2805
      %v2807 = vpop.f32.mrb[0].mxu0
      %2808 = vdwg.mxu0
      %vm2809 = vcmask 97280
      %v2811 = vsel %vm2809, %v2340, 0
      %vm2813 = vcmask 1043456
      %v2815 = vsel %vm2813, %v2342, 0
      %2817 = vmatprep.subr.mxu0 0.0
      %v2818 = vand.u32 %v2341, 4294901760
      %2819 = vmatpush1.msra.mxu0 %v2818
      %2820 = vmatprep.subr.mxu0 0.0
      %v2821 = vand.u32 %v2815, 4294901760
      %2822 = vmatpush1.msra.mxu0 %v2821
      %2823 = vmatprep.subr.mxu0 0.0
      %2824 = vmatpush1.msra.mxu0 0.0
      %2825 = vmatprep.subr.mxu0 0.0
      %2826 = vmatpush1.msra.mxu0 0.0
      %2827 = vmatprep.subr.mxu0 0.0
      %2828 = vmatpush1.msra.mxu0 0.0
      %2829 = vmatprep.subr.mxu0 0.0
      %2830 = vmatpush1.msra.mxu0 0.0
      %2831 = vmatprep.subr.mxu0 0.0
      %2832 = vmatpush1.msra.mxu0 0.0
      %2833 = vmatprep.subr.mxu0 0.0
      %2834 = vmatpush1.msra.mxu0 0.0
      %2835 = vmatprep.subr.mxu0 0.0
      %2836 = vmatpush1.msra.mxu0 0.0
      %2837 = vmatprep.subr.mxu0 0.0
      %2838 = vmatpush1.msra.mxu0 0.0
      %2839 = vmatprep.subr.mxu0 0.0
      %2840 = vmatpush1.msra.mxu0 0.0
      %2841 = vmatprep.subr.mxu0 0.0
      %2842 = vmatpush1.msra.mxu0 0.0
      %2843 = vmatprep.subr.mxu0 0.0
      %2844 = vmatpush1.msra.mxu0 0.0
      %2845 = vmatprep.subr.mxu0 0.0
      %2846 = vmatpush1.msra.mxu0 0.0
      %2847 = vmatprep.subr.mxu0 0.0
      %2848 = vmatpush1.msra.mxu0 0.0
      %2849 = vmatprep.subr.mxu0 0.0
      %2850 = vmatpush1.msra.mxu0 0.0
      %2851 = vmatprep.subr.mxu0 0.0
      %2852 = vmatpush1.msra.mxu0 0.0
      %2853 = vmatprep.subr.mxu0 0.0
      %2854 = vmatpush1.msra.mxu0 0.0
      %2855 = vmatprep.subr.mxu0 0.0
      %2856 = vmatpush1.msra.mxu0 0.0
      %2857 = vmatprep.subr.mxu0 0.0
      %2858 = vmatpush1.msra.mxu0 0.0
      %2859 = vmatprep.subr.mxu0 0.0
      %2860 = vmatpush1.msra.mxu0 0.0
      %2861 = vmatprep.subr.mxu0 0.0
      %2862 = vmatpush1.msra.mxu0 0.0
      %2863 = vmatprep.subr.mxu0 0.0
      %2864 = vmatpush1.msra.mxu0 0.0
      %2865 = vmatprep.subr.mxu0 0.0
      %2866 = vmatpush1.msra.mxu0 0.0
      %2867 = vmatprep.subr.mxu0 0.0
      %2868 = vmatpush1.msra.mxu0 0.0
      %2869 = vmatprep.subr.mxu0 0.0
      %2870 = vmatpush1.msra.mxu0 0.0
      %2871 = vmatprep.subr.mxu0 0.0
      %2872 = vmatpush1.msra.mxu0 0.0
      %2873 = vmatprep.subr.mxu0 0.0
      %2874 = vmatpush1.msra.mxu0 0.0
      %2875 = vmatprep.subr.mxu0 0.0
      %2876 = vmatpush1.msra.mxu0 0.0
      %2877 = vmatprep.subr.mxu0 0.0
      %2878 = vmatpush1.msra.mxu0 0.0
      %2879 = vmatprep.subr.mxu0 0.0
      %2880 = vmatpush1.msra.mxu0 0.0
      %2881 = vmatprep.subr.mxu0 0.0
      %2882 = vmatpush1.msra.mxu0 0.0
      %2883 = vmatprep.mubr.f32.mxu0 0.0
      %v2884 = vand.u32 %v2811, 4294901760
      %v2885 = vsub.f32 %v2811, %v2884
      %v2886 = vand.u32 %v2885, 4294901760
      %v2887 = vsub.f32 %v2885, %v2886
      %v2888 = vand.u32 %v2887, 4294901760
      %2889 = vmatmul.mubr.f32.gmra.mrb[0].mxu0 %v2888
      %v2890 = vpop.f32.mrb[0].mxu0
      %v2891 = vadd.f32 %v2806, %v2890
      %v2892 = vpop.f32.mrb[0].mxu0
      %2893 = vdwg.mxu0
      %2894 = vmatprep.subr.mxu0 0.0
      %v2895 = vand.u32 %v2341, 4294901760
      %v2896 = vsub.f32 %v2341, %v2895
      %v2897 = vand.u32 %v2896, 4294901760
      %v2898 = vsub.f32 %v2896, %v2897
      %v2899 = vand.u32 %v2898, 4294901760
      %2900 = vmatpush1.msra.mxu0 %v2899
      %2901 = vmatprep.subr.mxu0 0.0
      %v2902 = vand.u32 %v2815, 4294901760
      %v2903 = vsub.f32 %v2815, %v2902
      %v2904 = vand.u32 %v2903, 4294901760
      %v2905 = vsub.f32 %v2903, %v2904
      %v2906 = vand.u32 %v2905, 4294901760
      %2907 = vmatpush1.msra.mxu0 %v2906
      %2908 = vmatprep.subr.mxu0 0.0
      %2909 = vmatpush1.msra.mxu0 0.0
      %2910 = vmatprep.subr.mxu0 0.0
      %2911 = vmatpush1.msra.mxu0 0.0
      %2912 = vmatprep.subr.mxu0 0.0
      %2913 = vmatpush1.msra.mxu0 0.0
      %2914 = vmatprep.subr.mxu0 0.0
      %2915 = vmatpush1.msra.mxu0 0.0
      %2916 = vmatprep.subr.mxu0 0.0
      %2917 = vmatpush1.msra.mxu0 0.0
      %2918 = vmatprep.subr.mxu0 0.0
      %2919 = vmatpush1.msra.mxu0 0.0
      %2920 = vmatprep.subr.mxu0 0.0
      %2921 = vmatpush1.msra.mxu0 0.0
      %2922 = vmatprep.subr.mxu0 0.0
      %2923 = vmatpush1.msra.mxu0 0.0
      %2924 = vmatprep.subr.mxu0 0.0
      %2925 = vmatpush1.msra.mxu0 0.0
      %2926 = vmatprep.subr.mxu0 0.0
      %2927 = vmatpush1.msra.mxu0 0.0
      %2928 = vmatprep.subr.mxu0 0.0
      %2929 = vmatpush1.msra.mxu0 0.0
      %2930 = vmatprep.subr.mxu0 0.0
      %2931 = vmatpush1.msra.mxu0 0.0
      %2932 = vmatprep.subr.mxu0 0.0
      %2933 = vmatpush1.msra.mxu0 0.0
      %2934 = vmatprep.subr.mxu0 0.0
      %2935 = vmatpush1.msra.mxu0 0.0
      %2936 = vmatprep.subr.mxu0 0.0
      %2937 = vmatpush1.msra.mxu0 0.0
      %2938 = vmatprep.subr.mxu0 0.0
      %2939 = vmatpush1.msra.mxu0 0.0
      %2940 = vmatprep.subr.mxu0 0.0
      %2941 = vmatpush1.msra.mxu0 0.0
      %2942 = vmatprep.subr.mxu0 0.0
      %2943 = vmatpush1.msra.mxu0 0.0
      %2944 = vmatprep.subr.mxu0 0.0
      %2945 = vmatpush1.msra.mxu0 0.0
      %2946 = vmatprep.subr.mxu0 0.0
      %2947 = vmatpush1.msra.mxu0 0.0
      %2948 = vmatprep.subr.mxu0 0.0
      %2949 = vmatpush1.msra.mxu0 0.0
      %2950 = vmatprep.subr.mxu0 0.0
      %2951 = vmatpush1.msra.mxu0 0.0
      %2952 = vmatprep.subr.mxu0 0.0
      %2953 = vmatpush1.msra.mxu0 0.0
      %2954 = vmatprep.subr.mxu0 0.0
      %2955 = vmatpush1.msra.mxu0 0.0
      %2956 = vmatprep.subr.mxu0 0.0
      %2957 = vmatpush1.msra.mxu0 0.0
      %2958 = vmatprep.subr.mxu0 0.0
      %2959 = vmatpush1.msra.mxu0 0.0
      %2960 = vmatprep.subr.mxu0 0.0
      %2961 = vmatpush1.msra.mxu0 0.0
      %2962 = vmatprep.subr.mxu0 0.0
      %2963 = vmatpush1.msra.mxu0 0.0
      %2964 = vmatprep.subr.mxu0 0.0
      %2965 = vmatpush1.msra.mxu0 0.0
      %2966 = vmatprep.subr.mxu0 0.0
      %2967 = vmatpush1.msra.mxu0 0.0
      %2968 = vmatprep.mubr.f32.mxu0 0.0
      %v2969 = vand.u32 %v2811, 4294901760
      %2970 = vmatmul.mubr.f32.gmra.mrb[0].mxu0 %v2969
      %v2971 = vpop.f32.mrb[0].mxu0
      %v2972 = vadd.f32 %v2891, %v2971
      %v2973 = vpop.f32.mrb[0].mxu0
      %2974 = vdwg.mxu0
      %2975 = vmatprep.subr.mxu0 0.0
      %v2976 = vand.u32 %v2341, 4294901760
      %v2977 = vsub.f32 %v2341, %v2976
      %2978 = vmatpush1.msra.mxu0 %v2977
      %2979 = vmatprep.subr.mxu0 0.0
      %v2980 = vand.u32 %v2815, 4294901760
      %v2981 = vsub.f32 %v2815, %v2980
      %2982 = vmatpush1.msra.mxu0 %v2981
      %2983 = vmatprep.subr.mxu0 0.0
      %2984 = vmatpush1.msra.mxu0 0.0
      %2985 = vmatprep.subr.mxu0 0.0
      %2986 = vmatpush1.msra.mxu0 0.0
      %2987 = vmatprep.subr.mxu0 0.0
      %2988 = vmatpush1.msra.mxu0 0.0
      %2989 = vmatprep.subr.mxu0 0.0
      %2990 = vmatpush1.msra.mxu0 0.0
      %2991 = vmatprep.subr.mxu0 0.0
      %2992 = vmatpush1.msra.mxu0 0.0
      %2993 = vmatprep.subr.mxu0 0.0
      %2994 = vmatpush1.msra.mxu0 0.0
      %2995 = vmatprep.subr.mxu0 0.0
      %2996 = vmatpush1.msra.mxu0 0.0
      %2997 = vmatprep.subr.mxu0 0.0
      %2998 = vmatpush1.msra.mxu0 0.0
      %2999 = vmatprep.subr.mxu0 0.0
      %3000 = vmatpush1.msra.mxu0 0.0
      %3001 = vmatprep.subr.mxu0 0.0
      %3002 = vmatpush1.msra.mxu0 0.0
      %3003 = vmatprep.subr.mxu0 0.0
      %3004 = vmatpush1.msra.mxu0 0.0
      %3005 = vmatprep.subr.mxu0 0.0
      %3006 = vmatpush1.msra.mxu0 0.0
      %3007 = vmatprep.subr.mxu0 0.0
      %3008 = vmatpush1.msra.mxu0 0.0
      %3009 = vmatprep.subr.mxu0 0.0
      %3010 = vmatpush1.msra.mxu0 0.0
      %3011 = vmatprep.subr.mxu0 0.0
      %3012 = vmatpush1.msra.mxu0 0.0
      %3013 = vmatprep.subr.mxu0 0.0
      %3014 = vmatpush1.msra.mxu0 0.0
      %3015 = vmatprep.subr.mxu0 0.0
      %3016 = vmatpush1.msra.mxu0 0.0
      %3017 = vmatprep.subr.mxu0 0.0
      %3018 = vmatpush1.msra.mxu0 0.0
      %3019 = vmatprep.subr.mxu0 0.0
      %3020 = vmatpush1.msra.mxu0 0.0
      %3021 = vmatprep.subr.mxu0 0.0
      %3022 = vmatpush1.msra.mxu0 0.0
      %3023 = vmatprep.subr.mxu0 0.0
      %3024 = vmatpush1.msra.mxu0 0.0
      %3025 = vmatprep.subr.mxu0 0.0
      %3026 = vmatpush1.msra.mxu0 0.0
      %3027 = vmatprep.subr.mxu0 0.0
      %3028 = vmatpush1.msra.mxu0 0.0
      %3029 = vmatprep.subr.mxu0 0.0
      %3030 = vmatpush1.msra.mxu0 0.0
      %3031 = vmatprep.subr.mxu0 0.0
      %3032 = vmatpush1.msra.mxu0 0.0
      %3033 = vmatprep.subr.mxu0 0.0
      %3034 = vmatpush1.msra.mxu0 0.0
      %3035 = vmatprep.subr.mxu0 0.0
      %3036 = vmatpush1.msra.mxu0 0.0
      %3037 = vmatprep.subr.mxu0 0.0
      %3038 = vmatpush1.msra.mxu0 0.0
      %3039 = vmatprep.subr.mxu0 0.0
      %3040 = vmatpush1.msra.mxu0 0.0
      %3041 = vmatprep.subr.mxu0 0.0
      %3042 = vmatpush1.msra.mxu0 0.0
      %3043 = vmatprep.mubr.f32.mxu0 0.0
      %v3044 = vand.u32 %v2811, 4294901760
      %v3045 = vsub.f32 %v2811, %v3044
      %3046 = vmatmul.mubr.f32.gmra.mrb[0].mxu0 %v3045
      %v3047 = vpop.f32.mrb[0].mxu0
      %v3048 = vadd.f32 %v2972, %v3047
      %v3049 = vpop.f32.mrb[0].mxu0
      %3050 = vdwg.mxu0
      %3051 = vmatprep.subr.mxu0 0.0
      %v3052 = vand.u32 %v2341, 4294901760
      %3053 = vmatpush1.msra.mxu0 %v3052
      %3054 = vmatprep.subr.mxu0 0.0
      %v3055 = vand.u32 %v2815, 4294901760
      %3056 = vmatpush1.msra.mxu0 %v3055
      %3057 = vmatprep.subr.mxu0 0.0
      %3058 = vmatpush1.msra.mxu0 0.0
      %3059 = vmatprep.subr.mxu0 0.0
      %3060 = vmatpush1.msra.mxu0 0.0
      %3061 = vmatprep.subr.mxu0 0.0
      %3062 = vmatpush1.msra.mxu0 0.0
      %3063 = vmatprep.subr.mxu0 0.0
      %3064 = vmatpush1.msra.mxu0 0.0
      %3065 = vmatprep.subr.mxu0 0.0
      %3066 = vmatpush1.msra.mxu0 0.0
      %3067 = vmatprep.subr.mxu0 0.0
      %3068 = vmatpush1.msra.mxu0 0.0
      %3069 = vmatprep.subr.mxu0 0.0
      %3070 = vmatpush1.msra.mxu0 0.0
      %3071 = vmatprep.subr.mxu0 0.0
      %3072 = vmatpush1.msra.mxu0 0.0
      %3073 = vmatprep.subr.mxu0 0.0
      %3074 = vmatpush1.msra.mxu0 0.0
      %3075 = vmatprep.subr.mxu0 0.0
      %3076 = vmatpush1.msra.mxu0 0.0
      %3077 = vmatprep.subr.mxu0 0.0
      %3078 = vmatpush1.msra.mxu0 0.0
      %3079 = vmatprep.subr.mxu0 0.0
      %3080 = vmatpush1.msra.mxu0 0.0
      %3081 = vmatprep.subr.mxu0 0.0
      %3082 = vmatpush1.msra.mxu0 0.0
      %3083 = vmatprep.subr.mxu0 0.0
      %3084 = vmatpush1.msra.mxu0 0.0
      %3085 = vmatprep.subr.mxu0 0.0
      %3086 = vmatpush1.msra.mxu0 0.0
      %3087 = vmatprep.subr.mxu0 0.0
      %3088 = vmatpush1.msra.mxu0 0.0
      %3089 = vmatprep.subr.mxu0 0.0
      %3090 = vmatpush1.msra.mxu0 0.0
      %3091 = vmatprep.subr.mxu0 0.0
      %3092 = vmatpush1.msra.mxu0 0.0
      %3093 = vmatprep.subr.mxu0 0.0
      %3094 = vmatpush1.msra.mxu0 0.0
      %3095 = vmatprep.subr.mxu0 0.0
      %3096 = vmatpush1.msra.mxu0 0.0
      %3097 = vmatprep.subr.mxu0 0.0
      %3098 = vmatpush1.msra.mxu0 0.0
      %3099 = vmatprep.subr.mxu0 0.0
      %3100 = vmatpush1.msra.mxu0 0.0
      %3101 = vmatprep.subr.mxu0 0.0
      %3102 = vmatpush1.msra.mxu0 0.0
      %3103 = vmatprep.subr.mxu0 0.0
      %3104 = vmatpush1.msra.mxu0 0.0
      %3105 = vmatprep.subr.mxu0 0.0
      %3106 = vmatpush1.msra.mxu0 0.0
      %3107 = vmatprep.subr.mxu0 0.0
      %3108 = vmatpush1.msra.mxu0 0.0
      %3109 = vmatprep.subr.mxu0 0.0
      %3110 = vmatpush1.msra.mxu0 0.0
      %3111 = vmatprep.subr.mxu0 0.0
      %3112 = vmatpush1.msra.mxu0 0.0
      %3113 = vmatprep.subr.mxu0 0.0
      %3114 = vmatpush1.msra.mxu0 0.0
      %3115 = vmatprep.subr.mxu0 0.0
      %3116 = vmatpush1.msra.mxu0 0.0
      %3117 = vmatprep.mubr.f32.mxu0 0.0
      %v3118 = vand.u32 %v2811, 4294901760
      %v3119 = vsub.f32 %v2811, %v3118
      %v3120 = vand.u32 %v3119, 4294901760
      %3121 = vmatmul.mubr.f32.gmra.mrb[0].mxu0 %v3120
      %v3122 = vpop.f32.mrb[0].mxu0
      %v3123 = vadd.f32 %v3048, %v3122
      %v3124 = vpop.f32.mrb[0].mxu0
      %3125 = vdwg.mxu0
      %3126 = vmatprep.subr.mxu0 0.0
      %v3127 = vand.u32 %v2341, 4294901760
      %v3128 = vsub.f32 %v2341, %v3127
      %v3129 = vand.u32 %v3128, 4294901760
      %3130 = vmatpush1.msra.mxu0 %v3129
      %3131 = vmatprep.subr.mxu0 0.0
      %v3132 = vand.u32 %v2815, 4294901760
      %v3133 = vsub.f32 %v2815, %v3132
      %v3134 = vand.u32 %v3133, 4294901760
      %3135 = vmatpush1.msra.mxu0 %v3134
      %3136 = vmatprep.subr.mxu0 0.0
      %3137 = vmatpush1.msra.mxu0 0.0
      %3138 = vmatprep.subr.mxu0 0.0
      %3139 = vmatpush1.msra.mxu0 0.0
      %3140 = vmatprep.subr.mxu0 0.0
      %3141 = vmatpush1.msra.mxu0 0.0
      %3142 = vmatprep.subr.mxu0 0.0
      %3143 = vmatpush1.msra.mxu0 0.0
      %3144 = vmatprep.subr.mxu0 0.0
      %3145 = vmatpush1.msra.mxu0 0.0
      %3146 = vmatprep.subr.mxu0 0.0
      %3147 = vmatpush1.msra.mxu0 0.0
      %3148 = vmatprep.subr.mxu0 0.0
      %3149 = vmatpush1.msra.mxu0 0.0
      %3150 = vmatprep.subr.mxu0 0.0
      %3151 = vmatpush1.msra.mxu0 0.0
      %3152 = vmatprep.subr.mxu0 0.0
      %3153 = vmatpush1.msra.mxu0 0.0
      %3154 = vmatprep.subr.mxu0 0.0
      %3155 = vmatpush1.msra.mxu0 0.0
      %3156 = vmatprep.subr.mxu0 0.0
      %3157 = vmatpush1.msra.mxu0 0.0
      %3158 = vmatprep.subr.mxu0 0.0
      %3159 = vmatpush1.msra.mxu0 0.0
      %3160 = vmatprep.subr.mxu0 0.0
      %3161 = vmatpush1.msra.mxu0 0.0
      %3162 = vmatprep.subr.mxu0 0.0
      %3163 = vmatpush1.msra.mxu0 0.0
      %3164 = vmatprep.subr.mxu0 0.0
      %3165 = vmatpush1.msra.mxu0 0.0
      %3166 = vmatprep.subr.mxu0 0.0
      %3167 = vmatpush1.msra.mxu0 0.0
      %3168 = vmatprep.subr.mxu0 0.0
      %3169 = vmatpush1.msra.mxu0 0.0
      %3170 = vmatprep.subr.mxu0 0.0
      %3171 = vmatpush1.msra.mxu0 0.0
      %3172 = vmatprep.subr.mxu0 0.0
      %3173 = vmatpush1.msra.mxu0 0.0
      %3174 = vmatprep.subr.mxu0 0.0
      %3175 = vmatpush1.msra.mxu0 0.0
      %3176 = vmatprep.subr.mxu0 0.0
      %3177 = vmatpush1.msra.mxu0 0.0
      %3178 = vmatprep.subr.mxu0 0.0
      %3179 = vmatpush1.msra.mxu0 0.0
      %3180 = vmatprep.subr.mxu0 0.0
      %3181 = vmatpush1.msra.mxu0 0.0
      %3182 = vmatprep.subr.mxu0 0.0
      %3183 = vmatpush1.msra.mxu0 0.0
      %3184 = vmatprep.subr.mxu0 0.0
      %3185 = vmatpush1.msra.mxu0 0.0
      %3186 = vmatprep.subr.mxu0 0.0
      %3187 = vmatpush1.msra.mxu0 0.0
      %3188 = vmatprep.subr.mxu0 0.0
      %3189 = vmatpush1.msra.mxu0 0.0
      %3190 = vmatprep.subr.mxu0 0.0
      %3191 = vmatpush1.msra.mxu0 0.0
      %3192 = vmatprep.subr.mxu0 0.0
      %3193 = vmatpush1.msra.mxu0 0.0
      %3194 = vmatprep.subr.mxu0 0.0
      %3195 = vmatpush1.msra.mxu0 0.0
      %3196 = vmatprep.mubr.f32.mxu0 0.0
      %v3197 = vand.u32 %v2811, 4294901760
      %3198 = vmatmul.mubr.f32.gmra.mrb[0].mxu0 %v3197
      %v3199 = vpop.f32.mrb[0].mxu0
      %v3200 = vadd.f32 %v3123, %v3199
      %v3201 = vpop.f32.mrb[0].mxu0
      %3202 = vdwg.mxu0
      %3203 = vmatprep.subr.mxu0 0.0
      %v3204 = vand.u32 %v2341, 4294901760
      %3205 = vmatpush1.msra.mxu0 %v3204
      %3206 = vmatprep.subr.mxu0 0.0
      %v3207 = vand.u32 %v2815, 4294901760
      %3208 = vmatpush1.msra.mxu0 %v3207
      %3209 = vmatprep.subr.mxu0 0.0
      %3210 = vmatpush1.msra.mxu0 0.0
      %3211 = vmatprep.subr.mxu0 0.0
      %3212 = vmatpush1.msra.mxu0 0.0
      %3213 = vmatprep.subr.mxu0 0.0
      %3214 = vmatpush1.msra.mxu0 0.0
      %3215 = vmatprep.subr.mxu0 0.0
      %3216 = vmatpush1.msra.mxu0 0.0
      %3217 = vmatprep.subr.mxu0 0.0
      %3218 = vmatpush1.msra.mxu0 0.0
      %3219 = vmatprep.subr.mxu0 0.0
      %3220 = vmatpush1.msra.mxu0 0.0
      %3221 = vmatprep.subr.mxu0 0.0
      %3222 = vmatpush1.msra.mxu0 0.0
      %3223 = vmatprep.subr.mxu0 0.0
      %3224 = vmatpush1.msra.mxu0 0.0
      %3225 = vmatprep.subr.mxu0 0.0
      %3226 = vmatpush1.msra.mxu0 0.0
      %3227 = vmatprep.subr.mxu0 0.0
      %3228 = vmatpush1.msra.mxu0 0.0
      %3229 = vmatprep.subr.mxu0 0.0
      %3230 = vmatpush1.msra.mxu0 0.0
      %3231 = vmatprep.subr.mxu0 0.0
      %3232 = vmatpush1.msra.mxu0 0.0
      %3233 = vmatprep.subr.mxu0 0.0
      %3234 = vmatpush1.msra.mxu0 0.0
      %3235 = vmatprep.subr.mxu0 0.0
      %3236 = vmatpush1.msra.mxu0 0.0
      %3237 = vmatprep.subr.mxu0 0.0
      %3238 = vmatpush1.msra.mxu0 0.0
      %3239 = vmatprep.subr.mxu0 0.0
      %3240 = vmatpush1.msra.mxu0 0.0
      %3241 = vmatprep.subr.mxu0 0.0
      %3242 = vmatpush1.msra.mxu0 0.0
      %3243 = vmatprep.subr.mxu0 0.0
      %3244 = vmatpush1.msra.mxu0 0.0
      %3245 = vmatprep.subr.mxu0 0.0
      %3246 = vmatpush1.msra.mxu0 0.0
      %3247 = vmatprep.subr.mxu0 0.0
      %3248 = vmatpush1.msra.mxu0 0.0
      %3249 = vmatprep.subr.mxu0 0.0
      %3250 = vmatpush1.msra.mxu0 0.0
      %3251 = vmatprep.subr.mxu0 0.0
      %3252 = vmatpush1.msra.mxu0 0.0
      %3253 = vmatprep.subr.mxu0 0.0
      %3254 = vmatpush1.msra.mxu0 0.0
      %3255 = vmatprep.subr.mxu0 0.0
      %3256 = vmatpush1.msra.mxu0 0.0
      %3257 = vmatprep.subr.mxu0 0.0
      %3258 = vmatpush1.msra.mxu0 0.0
      %3259 = vmatprep.subr.mxu0 0.0
      %3260 = vmatpush1.msra.mxu0 0.0
      %3261 = vmatprep.subr.mxu0 0.0
      %3262 = vmatpush1.msra.mxu0 0.0
      %3263 = vmatprep.subr.mxu0 0.0
      %3264 = vmatpush1.msra.mxu0 0.0
      %3265 = vmatprep.subr.mxu0 0.0
      %3266 = vmatpush1.msra.mxu0 0.0
      %3267 = vmatprep.subr.mxu0 0.0
      %3268 = vmatpush1.msra.mxu0 0.0
      %3269 = vmatprep.mubr.f32.mxu0 0.0
      %v3270 = vand.u32 %v2811, 4294901760
      %3271 = vmatmul.mubr.f32.gmra.mrb[0].mxu0 %v3270
      %v3272 = vpop.f32.mrb[0].mxu0
      %v3273 = vadd.f32 %v3200, %v3272
      %v3274 = vpop.f32.mrb[0].mxu0
      %3275 = vdwg.mxu0
      %v3276 = vld [vmem:[%s4] sm:$0xf]
      %v3277 = vld [vmem:[%s7] sm:$0xff]
      %vm3278 = vcmask 64512
      %v3280 = vsel %vm3278, %v3276, 0
      %3282 = vmatprep.subr.mxu0 0.0
      %v3283 = vand.u32 %v3277, 4294901760
      %3284 = vmatpush1.msra.mxu0 %v3283
      %3285 = vmatprep.subr.mxu0 0.0
      %3286 = vmatpush1.msra.mxu0 0.0
      %3287 = vmatprep.subr.mxu0 0.0
      %3288 = vmatpush1.msra.mxu0 0.0
      %3289 = vmatprep.subr.mxu0 0.0
      %3290 = vmatpush1.msra.mxu0 0.0
      %3291 = vmatprep.subr.mxu0 0.0
      %3292 = vmatpush1.msra.mxu0 0.0
      %3293 = vmatprep.subr.mxu0 0.0
      %3294 = vmatpush1.msra.mxu0 0.0
      %3295 = vmatprep.subr.mxu0 0.0
      %3296 = vmatpush1.msra.mxu0 0.0
      %3297 = vmatprep.subr.mxu0 0.0
      %3298 = vmatpush1.msra.mxu0 0.0
      %3299 = vmatprep.subr.mxu0 0.0
      %3300 = vmatpush1.msra.mxu0 0.0
      %3301 = vmatprep.subr.mxu0 0.0
      %3302 = vmatpush1.msra.mxu0 0.0
      %3303 = vmatprep.subr.mxu0 0.0
      %3304 = vmatpush1.msra.mxu0 0.0
      %3305 = vmatprep.subr.mxu0 0.0
      %3306 = vmatpush1.msra.mxu0 0.0
      %3307 = vmatprep.subr.mxu0 0.0
      %3308 = vmatpush1.msra.mxu0 0.0
      %3309 = vmatprep.subr.mxu0 0.0
      %3310 = vmatpush1.msra.mxu0 0.0
      %3311 = vmatprep.subr.mxu0 0.0
      %3312 = vmatpush1.msra.mxu0 0.0
      %3313 = vmatprep.subr.mxu0 0.0
      %3314 = vmatpush1.msra.mxu0 0.0
      %3315 = vmatprep.subr.mxu0 0.0
      %3316 = vmatpush1.msra.mxu0 0.0
      %3317 = vmatprep.subr.mxu0 0.0
      %3318 = vmatpush1.msra.mxu0 0.0
      %3319 = vmatprep.subr.mxu0 0.0
      %3320 = vmatpush1.msra.mxu0 0.0
      %3321 = vmatprep.subr.mxu0 0.0
      %3322 = vmatpush1.msra.mxu0 0.0
      %3323 = vmatprep.subr.mxu0 0.0
      %3324 = vmatpush1.msra.mxu0 0.0
      %3325 = vmatprep.subr.mxu0 0.0
      %3326 = vmatpush1.msra.mxu0 0.0
      %3327 = vmatprep.subr.mxu0 0.0
      %3328 = vmatpush1.msra.mxu0 0.0
      %3329 = vmatprep.subr.mxu0 0.0
      %3330 = vmatpush1.msra.mxu0 0.0
      %3331 = vmatprep.subr.mxu0 0.0
      %3332 = vmatpush1.msra.mxu0 0.0
      %3333 = vmatprep.subr.mxu0 0.0
      %3334 = vmatpush1.msra.mxu0 0.0
      %3335 = vmatprep.subr.mxu0 0.0
      %3336 = vmatpush1.msra.mxu0 0.0
      %3337 = vmatprep.subr.mxu0 0.0
      %3338 = vmatpush1.msra.mxu0 0.0
      %3339 = vmatprep.subr.mxu0 0.0
      %3340 = vmatpush1.msra.mxu0 0.0
      %3341 = vmatprep.subr.mxu0 0.0
      %3342 = vmatpush1.msra.mxu0 0.0
      %3343 = vmatprep.subr.mxu0 0.0
      %3344 = vmatpush1.msra.mxu0 0.0
      %3345 = vmatprep.subr.mxu0 0.0
      %3346 = vmatpush1.msra.mxu0 0.0
      %3347 = vmatprep.mubr.f32.mxu0 0.0
      %v3348 = vand.u32 %v3280, 4294901760
      %v3349 = vsub.f32 %v3280, %v3348
      %v3350 = vand.u32 %v3349, 4294901760
      %v3351 = vsub.f32 %v3349, %v3350
      %v3352 = vand.u32 %v3351, 4294901760
      %3353 = vmatmul.mubr.f32.gmra.mrb[0].mxu0 %v3352
      %v3354 = vpop.f32.mrb[0].mxu0
      %v3355 = vadd.f32 0.0, %v3354
      %v3356 = vpop.f32.mrb[0].mxu0
      %3357 = vdwg.mxu0
      %3358 = vmatprep.subr.mxu0 0.0
      %v3359 = vand.u32 %v3277, 4294901760
      %v3360 = vsub.f32 %v3277, %v3359
      %v3361 = vand.u32 %v3360, 4294901760
      %v3362 = vsub.f32 %v3360, %v3361
      %v3363 = vand.u32 %v3362, 4294901760
      %3364 = vmatpush1.msra.mxu0 %v3363
      %3365 = vmatprep.subr.mxu0 0.0
      %3366 = vmatpush1.msra.mxu0 0.0
      %3367 = vmatprep.subr.mxu0 0.0
      %3368 = vmatpush1.msra.mxu0 0.0
      %3369 = vmatprep.subr.mxu0 0.0
      %3370 = vmatpush1.msra.mxu0 0.0
      %3371 = vmatprep.subr.mxu0 0.0
      %3372 = vmatpush1.msra.mxu0 0.0
      %3373 = vmatprep.subr.mxu0 0.0
      %3374 = vmatpush1.msra.mxu0 0.0
      %3375 = vmatprep.subr.mxu0 0.0
      %3376 = vmatpush1.msra.mxu0 0.0
      %3377 = vmatprep.subr.mxu0 0.0
      %3378 = vmatpush1.msra.mxu0 0.0
      %3379 = vmatprep.subr.mxu0 0.0
      %3380 = vmatpush1.msra.mxu0 0.0
      %3381 = vmatprep.subr.mxu0 0.0
      %3382 = vmatpush1.msra.mxu0 0.0
      %3383 = vmatprep.subr.mxu0 0.0
      %3384 = vmatpush1.msra.mxu0 0.0
      %3385 = vmatprep.subr.mxu0 0.0
      %3386 = vmatpush1.msra.mxu0 0.0
      %3387 = vmatprep.subr.mxu0 0.0
      %3388 = vmatpush1.msra.mxu0 0.0
      %3389 = vmatprep.subr.mxu0 0.0
      %3390 = vmatpush1.msra.mxu0 0.0
      %3391 = vmatprep.subr.mxu0 0.0
      %3392 = vmatpush1.msra.mxu0 0.0
      %3393 = vmatprep.subr.mxu0 0.0
      %3394 = vmatpush1.msra.mxu0 0.0
      %3395 = vmatprep.subr.mxu0 0.0
      %3396 = vmatpush1.msra.mxu0 0.0
      %3397 = vmatprep.subr.mxu0 0.0
      %3398 = vmatpush1.msra.mxu0 0.0
      %3399 = vmatprep.subr.mxu0 0.0
      %3400 = vmatpush1.msra.mxu0 0.0
      %3401 = vmatprep.subr.mxu0 0.0
      %3402 = vmatpush1.msra.mxu0 0.0
      %3403 = vmatprep.subr.mxu0 0.0
      %3404 = vmatpush1.msra.mxu0 0.0
      %3405 = vmatprep.subr.mxu0 0.0
      %3406 = vmatpush1.msra.mxu0 0.0
      %3407 = vmatprep.subr.mxu0 0.0
      %3408 = vmatpush1.msra.mxu0 0.0
      %3409 = vmatprep.subr.mxu0 0.0
      %3410 = vmatpush1.msra.mxu0 0.0
      %3411 = vmatprep.subr.mxu0 0.0
      %3412 = vmatpush1.msra.mxu0 0.0
      %3413 = vmatprep.subr.mxu0 0.0
      %3414 = vmatpush1.msra.mxu0 0.0
      %3415 = vmatprep.subr.mxu0 0.0
      %3416 = vmatpush1.msra.mxu0 0.0
      %3417 = vmatprep.subr.mxu0 0.0
      %3418 = vmatpush1.msra.mxu0 0.0
      %3419 = vmatprep.subr.mxu0 0.0
      %3420 = vmatpush1.msra.mxu0 0.0
      %3421 = vmatprep.subr.mxu0 0.0
      %3422 = vmatpush1.msra.mxu0 0.0
      %3423 = vmatprep.subr.mxu0 0.0
      %3424 = vmatpush1.msra.mxu0 0.0
      %3425 = vmatprep.subr.mxu0 0.0
      %3426 = vmatpush1.msra.mxu0 0.0
      %3427 = vmatprep.mubr.f32.mxu0 0.0
      %v3428 = vand.u32 %v3280, 4294901760
      %3429 = vmatmul.mubr.f32.gmra.mrb[0].mxu0 %v3428
      %v3430 = vpop.f32.mrb[0].mxu0
      %v3431 = vadd.f32 %v3355, %v3430
      %v3432 = vpop.f32.mrb[0].mxu0
      %3433 = vdwg.mxu0
      %3434 = vmatprep.subr.mxu0 0.0
      %v3435 = vand.u32 %v3277, 4294901760
      %v3436 = vsub.f32 %v3277, %v3435
      %3437 = vmatpush1.msra.mxu0 %v3436
      %3438 = vmatprep.subr.mxu0 0.0
      %3439 = vmatpush1.msra.mxu0 0.0
      %3440 = vmatprep.subr.mxu0 0.0
      %3441 = vmatpush1.msra.mxu0 0.0
      %3442 = vmatprep.subr.mxu0 0.0
      %3443 = vmatpush1.msra.mxu0 0.0
      %3444 = vmatprep.subr.mxu0 0.0
      %3445 = vmatpush1.msra.mxu0 0.0
      %3446 = vmatprep.subr.mxu0 0.0
      %3447 = vmatpush1.msra.mxu0 0.0
      %3448 = vmatprep.subr.mxu0 0.0
      %3449 = vmatpush1.msra.mxu0 0.0
      %3450 = vmatprep.subr.mxu0 0.0
      %3451 = vmatpush1.msra.mxu0 0.0
      %3452 = vmatprep.subr.mxu0 0.0
      %3453 = vmatpush1.msra.mxu0 0.0
      %3454 = vmatprep.subr.mxu0 0.0
      %3455 = vmatpush1.msra.mxu0 0.0
      %3456 = vmatprep.subr.mxu0 0.0
      %3457 = vmatpush1.msra.mxu0 0.0
      %3458 = vmatprep.subr.mxu0 0.0
      %3459 = vmatpush1.msra.mxu0 0.0
      %3460 = vmatprep.subr.mxu0 0.0
      %3461 = vmatpush1.msra.mxu0 0.0
      %3462 = vmatprep.subr.mxu0 0.0
      %3463 = vmatpush1.msra.mxu0 0.0
      %3464 = vmatprep.subr.mxu0 0.0
      %3465 = vmatpush1.msra.mxu0 0.0
      %3466 = vmatprep.subr.mxu0 0.0
      %3467 = vmatpush1.msra.mxu0 0.0
      %3468 = vmatprep.subr.mxu0 0.0
      %3469 = vmatpush1.msra.mxu0 0.0
      %3470 = vmatprep.subr.mxu0 0.0
      %3471 = vmatpush1.msra.mxu0 0.0
      %3472 = vmatprep.subr.mxu0 0.0
      %3473 = vmatpush1.msra.mxu0 0.0
      %3474 = vmatprep.subr.mxu0 0.0
      %3475 = vmatpush1.msra.mxu0 0.0
      %3476 = vmatprep.subr.mxu0 0.0
      %3477 = vmatpush1.msra.mxu0 0.0
      %3478 = vmatprep.subr.mxu0 0.0
      %3479 = vmatpush1.msra.mxu0 0.0
      %3480 = vmatprep.subr.mxu0 0.0
      %3481 = vmatpush1.msra.mxu0 0.0
      %3482 = vmatprep.subr.mxu0 0.0
      %3483 = vmatpush1.msra.mxu0 0.0
      %3484 = vmatprep.subr.mxu0 0.0
      %3485 = vmatpush1.msra.mxu0 0.0
      %3486 = vmatprep.subr.mxu0 0.0
      %3487 = vmatpush1.msra.mxu0 0.0
      %3488 = vmatprep.subr.mxu0 0.0
      %3489 = vmatpush1.msra.mxu0 0.0
      %3490 = vmatprep.subr.mxu0 0.0
      %3491 = vmatpush1.msra.mxu0 0.0
      %3492 = vmatprep.subr.mxu0 0.0
      %3493 = vmatpush1.msra.mxu0 0.0
      %3494 = vmatprep.subr.mxu0 0.0
      %3495 = vmatpush1.msra.mxu0 0.0
      %3496 = vmatprep.subr.mxu0 0.0
      %3497 = vmatpush1.msra.mxu0 0.0
      %3498 = vmatprep.subr.mxu0 0.0
      %3499 = vmatpush1.msra.mxu0 0.0
      %3500 = vmatprep.mubr.f32.mxu0 0.0
      %v3501 = vand.u32 %v3280, 4294901760
      %v3502 = vsub.f32 %v3280, %v3501
      %3503 = vmatmul.mubr.f32.gmra.mrb[0].mxu0 %v3502
      %v3504 = vpop.f32.mrb[0].mxu0
      %v3505 = vadd.f32 %v3431, %v3504
      %v3506 = vpop.f32.mrb[0].mxu0
      %3507 = vdwg.mxu0
      %3508 = vmatprep.subr.mxu0 0.0
      %v3509 = vand.u32 %v3277, 4294901760
      %3510 = vmatpush1.msra.mxu0 %v3509
      %3511 = vmatprep.subr.mxu0 0.0
      %3512 = vmatpush1.msra.mxu0 0.0
      %3513 = vmatprep.subr.mxu0 0.0
      %3514 = vmatpush1.msra.mxu0 0.0
      %3515 = vmatprep.subr.mxu0 0.0
      %3516 = vmatpush1.msra.mxu0 0.0
      %3517 = vmatprep.subr.mxu0 0.0
      %3518 = vmatpush1.msra.mxu0 0.0
      %3519 = vmatprep.subr.mxu0 0.0
      %3520 = vmatpush1.msra.mxu0 0.0
      %3521 = vmatprep.subr.mxu0 0.0
      %3522 = vmatpush1.msra.mxu0 0.0
      %3523 = vmatprep.subr.mxu0 0.0
      %3524 = vmatpush1.msra.mxu0 0.0
      %3525 = vmatprep.subr.mxu0 0.0
      %3526 = vmatpush1.msra.mxu0 0.0
      %3527 = vmatprep.subr.mxu0 0.0
      %3528 = vmatpush1.msra.mxu0 0.0
      %3529 = vmatprep.subr.mxu0 0.0
      %3530 = vmatpush1.msra.mxu0 0.0
      %3531 = vmatprep.subr.mxu0 0.0
      %3532 = vmatpush1.msra.mxu0 0.0
      %3533 = vmatprep.subr.mxu0 0.0
      %3534 = vmatpush1.msra.mxu0 0.0
      %3535 = vmatprep.subr.mxu0 0.0
      %3536 = vmatpush1.msra.mxu0 0.0
      %3537 = vmatprep.subr.mxu0 0.0
      %3538 = vmatpush1.msra.mxu0 0.0
      %3539 = vmatprep.subr.mxu0 0.0
      %3540 = vmatpush1.msra.mxu0 0.0
      %3541 = vmatprep.subr.mxu0 0.0
      %3542 = vmatpush1.msra.mxu0 0.0
      %3543 = vmatprep.subr.mxu0 0.0
      %3544 = vmatpush1.msra.mxu0 0.0
      %3545 = vmatprep.subr.mxu0 0.0
      %3546 = vmatpush1.msra.mxu0 0.0
      %3547 = vmatprep.subr.mxu0 0.0
      %3548 = vmatpush1.msra.mxu0 0.0
      %3549 = vmatprep.subr.mxu0 0.0
      %3550 = vmatpush1.msra.mxu0 0.0
      %3551 = vmatprep.subr.mxu0 0.0
      %3552 = vmatpush1.msra.mxu0 0.0
      %3553 = vmatprep.subr.mxu0 0.0
      %3554 = vmatpush1.msra.mxu0 0.0
      %3555 = vmatprep.subr.mxu0 0.0
      %3556 = vmatpush1.msra.mxu0 0.0
      %3557 = vmatprep.subr.mxu0 0.0
      %3558 = vmatpush1.msra.mxu0 0.0
      %3559 = vmatprep.subr.mxu0 0.0
      %3560 = vmatpush1.msra.mxu0 0.0
      %3561 = vmatprep.subr.mxu0 0.0
      %3562 = vmatpush1.msra.mxu0 0.0
      %3563 = vmatprep.subr.mxu0 0.0
      %3564 = vmatpush1.msra.mxu0 0.0
      %3565 = vmatprep.subr.mxu0 0.0
      %3566 = vmatpush1.msra.mxu0 0.0
      %3567 = vmatprep.subr.mxu0 0.0
      %3568 = vmatpush1.msra.mxu0 0.0
      %3569 = vmatprep.subr.mxu0 0.0
      %3570 = vmatpush1.msra.mxu0 0.0
      %3571 = vmatprep.subr.mxu0 0.0
      %3572 = vmatpush1.msra.mxu0 0.0
      %3573 = vmatprep.mubr.f32.mxu0 0.0
      %v3574 = vand.u32 %v3280, 4294901760
      %v3575 = vsub.f32 %v3280, %v3574
      %v3576 = vand.u32 %v3575, 4294901760
      %3577 = vmatmul.mubr.f32.gmra.mrb[0].mxu0 %v3576
      %v3578 = vpop.f32.mrb[0].mxu0
      %v3579 = vadd.f32 %v3505, %v3578
      %v3580 = vpop.f32.mrb[0].mxu0
      %3581 = vdwg.mxu0
      %3582 = vmatprep.subr.mxu0 0.0
      %v3583 = vand.u32 %v3277, 4294901760
      %v3584 = vsub.f32 %v3277, %v3583
      %v3585 = vand.u32 %v3584, 4294901760
      %3586 = vmatpush1.msra.mxu0 %v3585
      %3587 = vmatprep.subr.mxu0 0.0
      %3588 = vmatpush1.msra.mxu0 0.0
      %3589 = vmatprep.subr.mxu0 0.0
      %3590 = vmatpush1.msra.mxu0 0.0
      %3591 = vmatprep.subr.mxu0 0.0
      %3592 = vmatpush1.msra.mxu0 0.0
      %3593 = vmatprep.subr.mxu0 0.0
      %3594 = vmatpush1.msra.mxu0 0.0
      %3595 = vmatprep.subr.mxu0 0.0
      %3596 = vmatpush1.msra.mxu0 0.0
      %3597 = vmatprep.subr.mxu0 0.0
      %3598 = vmatpush1.msra.mxu0 0.0
      %3599 = vmatprep.subr.mxu0 0.0
      %3600 = vmatpush1.msra.mxu0 0.0
      %3601 = vmatprep.subr.mxu0 0.0
      %3602 = vmatpush1.msra.mxu0 0.0
      %3603 = vmatprep.subr.mxu0 0.0
      %3604 = vmatpush1.msra.mxu0 0.0
      %3605 = vmatprep.subr.mxu0 0.0
      %3606 = vmatpush1.msra.mxu0 0.0
      %3607 = vmatprep.subr.mxu0 0.0
      %3608 = vmatpush1.msra.mxu0 0.0
      %3609 = vmatprep.subr.mxu0 0.0
      %3610 = vmatpush1.msra.mxu0 0.0
      %3611 = vmatprep.subr.mxu0 0.0
      %3612 = vmatpush1.msra.mxu0 0.0
      %3613 = vmatprep.subr.mxu0 0.0
      %3614 = vmatpush1.msra.mxu0 0.0
      %3615 = vmatprep.subr.mxu0 0.0
      %3616 = vmatpush1.msra.mxu0 0.0
      %3617 = vmatprep.subr.mxu0 0.0
      %3618 = vmatpush1.msra.mxu0 0.0
      %3619 = vmatprep.subr.mxu0 0.0
      %3620 = vmatpush1.msra.mxu0 0.0
      %3621 = vmatprep.subr.mxu0 0.0
      %3622 = vmatpush1.msra.mxu0 0.0
      %3623 = vmatprep.subr.mxu0 0.0
      %3624 = vmatpush1.msra.mxu0 0.0
      %3625 = vmatprep.subr.mxu0 0.0
      %3626 = vmatpush1.msra.mxu0 0.0
      %3627 = vmatprep.subr.mxu0 0.0
      %3628 = vmatpush1.msra.mxu0 0.0
      %3629 = vmatprep.subr.mxu0 0.0
      %3630 = vmatpush1.msra.mxu0 0.0
      %3631 = vmatprep.subr.mxu0 0.0
      %3632 = vmatpush1.msra.mxu0 0.0
      %3633 = vmatprep.subr.mxu0 0.0
      %3634 = vmatpush1.msra.mxu0 0.0
      %3635 = vmatprep.subr.mxu0 0.0
      %3636 = vmatpush1.msra.mxu0 0.0
      %3637 = vmatprep.subr.mxu0 0.0
      %3638 = vmatpush1.msra.mxu0 0.0
      %3639 = vmatprep.subr.mxu0 0.0
      %3640 = vmatpush1.msra.mxu0 0.0
      %3641 = vmatprep.subr.mxu0 0.0
      %3642 = vmatpush1.msra.mxu0 0.0
      %3643 = vmatprep.subr.mxu0 0.0
      %3644 = vmatpush1.msra.mxu0 0.0
      %3645 = vmatprep.subr.mxu0 0.0
      %3646 = vmatpush1.msra.mxu0 0.0
      %3647 = vmatprep.subr.mxu0 0.0
      %3648 = vmatpush1.msra.mxu0 0.0
      %3649 = vmatprep.mubr.f32.mxu0 0.0
      %v3650 = vand.u32 %v3280, 4294901760
      %3651 = vmatmul.mubr.f32.gmra.mrb[0].mxu0 %v3650
      %v3652 = vpop.f32.mrb[0].mxu0
      %v3653 = vadd.f32 %v3579, %v3652
      %v3654 = vpop.f32.mrb[0].mxu0
      %3655 = vdwg.mxu0
      %3656 = vmatprep.subr.mxu0 0.0
      %v3657 = vand.u32 %v3277, 4294901760
      %3658 = vmatpush1.msra.mxu0 %v3657
      %3659 = vmatprep.subr.mxu0 0.0
      %3660 = vmatpush1.msra.mxu0 0.0
      %3661 = vmatprep.subr.mxu0 0.0
      %3662 = vmatpush1.msra.mxu0 0.0
      %3663 = vmatprep.subr.mxu0 0.0
      %3664 = vmatpush1.msra.mxu0 0.0
      %3665 = vmatprep.subr.mxu0 0.0
      %3666 = vmatpush1.msra.mxu0 0.0
      %3667 = vmatprep.subr.mxu0 0.0
      %3668 = vmatpush1.msra.mxu0 0.0
      %3669 = vmatprep.subr.mxu0 0.0
      %3670 = vmatpush1.msra.mxu0 0.0
      %3671 = vmatprep.subr.mxu0 0.0
      %3672 = vmatpush1.msra.mxu0 0.0
      %3673 = vmatprep.subr.mxu0 0.0
      %3674 = vmatpush1.msra.mxu0 0.0
      %3675 = vmatprep.subr.mxu0 0.0
      %3676 = vmatpush1.msra.mxu0 0.0
      %3677 = vmatprep.subr.mxu0 0.0
      %3678 = vmatpush1.msra.mxu0 0.0
      %3679 = vmatprep.subr.mxu0 0.0
      %3680 = vmatpush1.msra.mxu0 0.0
      %3681 = vmatprep.subr.mxu0 0.0
      %3682 = vmatpush1.msra.mxu0 0.0
      %3683 = vmatprep.subr.mxu0 0.0
      %3684 = vmatpush1.msra.mxu0 0.0
      %3685 = vmatprep.subr.mxu0 0.0
      %3686 = vmatpush1.msra.mxu0 0.0
      %3687 = vmatprep.subr.mxu0 0.0
      %3688 = vmatpush1.msra.mxu0 0.0
      %3689 = vmatprep.subr.mxu0 0.0
      %3690 = vmatpush1.msra.mxu0 0.0
      %3691 = vmatprep.subr.mxu0 0.0
      %3692 = vmatpush1.msra.mxu0 0.0
      %3693 = vmatprep.subr.mxu0 0.0
      %3694 = vmatpush1.msra.mxu0 0.0
      %3695 = vmatprep.subr.mxu0 0.0
      %3696 = vmatpush1.msra.mxu0 0.0
      %3697 = vmatprep.subr.mxu0 0.0
      %3698 = vmatpush1.msra.mxu0 0.0
      %3699 = vmatprep.subr.mxu0 0.0
      %3700 = vmatpush1.msra.mxu0 0.0
      %3701 = vmatprep.subr.mxu0 0.0
      %3702 = vmatpush1.msra.mxu0 0.0
      %3703 = vmatprep.subr.mxu0 0.0
      %3704 = vmatpush1.msra.mxu0 0.0
      %3705 = vmatprep.subr.mxu0 0.0
      %3706 = vmatpush1.msra.mxu0 0.0
      %3707 = vmatprep.subr.mxu0 0.0
      %3708 = vmatpush1.msra.mxu0 0.0
      %3709 = vmatprep.subr.mxu0 0.0
      %3710 = vmatpush1.msra.mxu0 0.0
      %3711 = vmatprep.subr.mxu0 0.0
      %3712 = vmatpush1.msra.mxu0 0.0
      %3713 = vmatprep.subr.mxu0 0.0
      %3714 = vmatpush1.msra.mxu0 0.0
      %3715 = vmatprep.subr.mxu0 0.0
      %3716 = vmatpush1.msra.mxu0 0.0
      %3717 = vmatprep.subr.mxu0 0.0
      %3718 = vmatpush1.msra.mxu0 0.0
      %3719 = vmatprep.subr.mxu0 0.0
      %3720 = vmatpush1.msra.mxu0 0.0
      %3721 = vmatprep.mubr.f32.mxu0 0.0
      %v3722 = vand.u32 %v3280, 4294901760
      %3723 = vmatmul.mubr.f32.gmra.mrb[0].mxu0 %v3722
      %v3724 = vpop.f32.mrb[0].mxu0
      %v3725 = vadd.f32 %v3653, %v3724
      %v3726 = vpop.f32.mrb[0].mxu0
      %3727 = vdwg.mxu0
      %v3728 = vadd.f32 %v3273, %v3725
      %v3729 = vld [vmem:[%s8] sm:$0x1]
      %v3731 = vlaneseq
      %v3732 = vshrl.u32 %v3731, 7
      %v3733 = vsub.s32 0, %v3732
      %v3734 = vrot.slane %v3729, %v3733
      %v3736 = vadd.f32 %v3728, %v3734
      %v3737 = vmax.f32 %v3736, 0.0
      %v3738 = vld [vmem:[%s9] sm:$0xff]
      %v3739 = vld [vmem:[%s9 + $0x8] sm:$0xff]
      %v3740 = vld [vmem:[%s9 + $0x10] sm:$0xff]
      %v3741 = vld [vmem:[%s9 + $0x18] sm:$0xff]
      %v3742 = vld [vmem:[%s10] sm:$0x1]
      %v3744 = vlaneseq
      %v3745 = vshrl.u32 %v3744, 7
      %v3746 = vsub.s32 0, %v3745
      %v3747 = vrot.slane %v3742, %v3746
      %vm3749 = vcmask 261120
      %v3751 = vsel %vm3749, %v3737, 0
      %3753 = vmatprep.subr.mxu0 0.0
      %v3754 = vand.u32 %v3738, 4294901760
      %3755 = vmatpush1.msra.mxu0 %v3754
      %3756 = vmatprep.subr.mxu0 0.0
      %v3757 = vand.u32 %v3739, 4294901760
      %3758 = vmatpush1.msra.mxu0 %v3757
      %3759 = vmatprep.subr.mxu0 0.0
      %v3760 = vand.u32 %v3740, 4294901760
      %3761 = vmatpush1.msra.mxu0 %v3760
      %3762 = vmatprep.subr.mxu0 0.0
      %v3763 = vand.u32 %v3741, 4294901760
      %3764 = vmatpush1.msra.mxu0 %v3763
      %3765 = vmatprep.subr.mxu0 0.0
      %3766 = vmatpush1.msra.mxu0 0.0
      %3767 = vmatprep.subr.mxu0 0.0
      %3768 = vmatpush1.msra.mxu0 0.0
      %3769 = vmatprep.subr.mxu0 0.0
      %3770 = vmatpush1.msra.mxu0 0.0
      %3771 = vmatprep.subr.mxu0 0.0
      %3772 = vmatpush1.msra.mxu0 0.0
      %3773 = vmatprep.subr.mxu0 0.0
      %3774 = vmatpush1.msra.mxu0 0.0
      %3775 = vmatprep.subr.mxu0 0.0
      %3776 = vmatpush1.msra.mxu0 0.0
      %3777 = vmatprep.subr.mxu0 0.0
      %3778 = vmatpush1.msra.mxu0 0.0
      %3779 = vmatprep.subr.mxu0 0.0
      %3780 = vmatpush1.msra.mxu0 0.0
      %3781 = vmatprep.subr.mxu0 0.0
      %3782 = vmatpush1.msra.mxu0 0.0
      %3783 = vmatprep.subr.mxu0 0.0
      %3784 = vmatpush1.msra.mxu0 0.0
      %3785 = vmatprep.subr.mxu0 0.0
      %3786 = vmatpush1.msra.mxu0 0.0
      %3787 = vmatprep.subr.mxu0 0.0
      %3788 = vmatpush1.msra.mxu0 0.0
      %3789 = vmatprep.subr.mxu0 0.0
      %3790 = vmatpush1.msra.mxu0 0.0
      %3791 = vmatprep.subr.mxu0 0.0
      %3792 = vmatpush1.msra.mxu0 0.0
      %3793 = vmatprep.subr.mxu0 0.0
      %3794 = vmatpush1.msra.mxu0 0.0
      %3795 = vmatprep.subr.mxu0 0.0
      %3796 = vmatpush1.msra.mxu0 0.0
      %3797 = vmatprep.subr.mxu0 0.0
      %3798 = vmatpush1.msra.mxu0 0.0
      %3799 = vmatprep.subr.mxu0 0.0
      %3800 = vmatpush1.msra.mxu0 0.0
      %3801 = vmatprep.subr.mxu0 0.0
      %3802 = vmatpush1.msra.mxu0 0.0
      %3803 = vmatprep.subr.mxu0 0.0
      %3804 = vmatpush1.msra.mxu0 0.0
      %3805 = vmatprep.subr.mxu0 0.0
      %3806 = vmatpush1.msra.mxu0 0.0
      %3807 = vmatprep.subr.mxu0 0.0
      %3808 = vmatpush1.msra.mxu0 0.0
      %3809 = vmatprep.subr.mxu0 0.0
      %3810 = vmatpush1.msra.mxu0 0.0
      %3811 = vmatprep.subr.mxu0 0.0
      %3812 = vmatpush1.msra.mxu0 0.0
      %3813 = vmatprep.subr.mxu0 0.0
      %3814 = vmatpush1.msra.mxu0 0.0
      %3815 = vmatprep.subr.mxu0 0.0
      %3816 = vmatpush1.msra.mxu0 0.0
      %3817 = vmatprep.subr.mxu0 0.0
      %3818 = vmatpush1.msra.mxu0 0.0
      %3819 = vmatprep.subr.mxu0 0.0
      %3820 = vmatpush1.msra.mxu0 0.0
      %3821 = vmatprep.mubr.f32.mxu0 0.0
      %v3822 = vand.u32 %v3751, 4294901760
      %v3823 = vsub.f32 %v3751, %v3822
      %v3824 = vand.u32 %v3823, 4294901760
      %v3825 = vsub.f32 %v3823, %v3824
      %v3826 = vand.u32 %v3825, 4294901760
      %3827 = vmatmul.mubr.f32.gmra.mrb[0].mxu0 %v3826
      %v3828 = vpop.f32.mrb[0].mxu0
      %v3829 = vadd.f32 %v3747, %v3828
      %v3830 = vpop.f32.mrb[0].mxu0
      %3831 = vdwg.mxu0
      %3832 = vmatprep.subr.mxu0 0.0
      %v3833 = vand.u32 %v3738, 4294901760
      %v3834 = vsub.f32 %v3738, %v3833
      %v3835 = vand.u32 %v3834, 4294901760
      %v3836 = vsub.f32 %v3834, %v3835
      %v3837 = vand.u32 %v3836, 4294901760
      %3838 = vmatpush1.msra.mxu0 %v3837
      %3839 = vmatprep.subr.mxu0 0.0
      %v3840 = vand.u32 %v3739, 4294901760
      %v3841 = vsub.f32 %v3739, %v3840
      %v3842 = vand.u32 %v3841, 4294901760
      %v3843 = vsub.f32 %v3841, %v3842
      %v3844 = vand.u32 %v3843, 4294901760
      %3845 = vmatpush1.msra.mxu0 %v3844
      %3846 = vmatprep.subr.mxu0 0.0
      %v3847 = vand.u32 %v3740, 4294901760
      %v3848 = vsub.f32 %v3740, %v3847
      %v3849 = vand.u32 %v3848, 4294901760
      %v3850 = vsub.f32 %v3848, %v3849
      %v3851 = vand.u32 %v3850, 4294901760
      %3852 = vmatpush1.msra.mxu0 %v3851
      %3853 = vmatprep.subr.mxu0 0.0
      %v3854 = vand.u32 %v3741, 4294901760
      %v3855 = vsub.f32 %v3741, %v3854
      %v3856 = vand.u32 %v3855, 4294901760
      %v3857 = vsub.f32 %v3855, %v3856
      %v3858 = vand.u32 %v3857, 4294901760
      %3859 = vmatpush1.msra.mxu0 %v3858
      %3860 = vmatprep.subr.mxu0 0.0
      %3861 = vmatpush1.msra.mxu0 0.0
      %3862 = vmatprep.subr.mxu0 0.0
      %3863 = vmatpush1.msra.mxu0 0.0
      %3864 = vmatprep.subr.mxu0 0.0
      %3865 = vmatpush1.msra.mxu0 0.0
      %3866 = vmatprep.subr.mxu0 0.0
      %3867 = vmatpush1.msra.mxu0 0.0
      %3868 = vmatprep.subr.mxu0 0.0
      %3869 = vmatpush1.msra.mxu0 0.0
      %3870 = vmatprep.subr.mxu0 0.0
      %3871 = vmatpush1.msra.mxu0 0.0
      %3872 = vmatprep.subr.mxu0 0.0
      %3873 = vmatpush1.msra.mxu0 0.0
      %3874 = vmatprep.subr.mxu0 0.0
      %3875 = vmatpush1.msra.mxu0 0.0
      %3876 = vmatprep.subr.mxu0 0.0
      %3877 = vmatpush1.msra.mxu0 0.0
      %3878 = vmatprep.subr.mxu0 0.0
      %3879 = vmatpush1.msra.mxu0 0.0
      %3880 = vmatprep.subr.mxu0 0.0
      %3881 = vmatpush1.msra.mxu0 0.0
      %3882 = vmatprep.subr.mxu0 0.0
      %3883 = vmatpush1.msra.mxu0 0.0
      %3884 = vmatprep.subr.mxu0 0.0
      %3885 = vmatpush1.msra.mxu0 0.0
      %3886 = vmatprep.subr.mxu0 0.0
      %3887 = vmatpush1.msra.mxu0 0.0
      %3888 = vmatprep.subr.mxu0 0.0
      %3889 = vmatpush1.msra.mxu0 0.0
      %3890 = vmatprep.subr.mxu0 0.0
      %3891 = vmatpush1.msra.mxu0 0.0
      %3892 = vmatprep.subr.mxu0 0.0
      %3893 = vmatpush1.msra.mxu0 0.0
      %3894 = vmatprep.subr.mxu0 0.0
      %3895 = vmatpush1.msra.mxu0 0.0
      %3896 = vmatprep.subr.mxu0 0.0
      %3897 = vmatpush1.msra.mxu0 0.0
      %3898 = vmatprep.subr.mxu0 0.0
      %3899 = vmatpush1.msra.mxu0 0.0
      %3900 = vmatprep.subr.mxu0 0.0
      %3901 = vmatpush1.msra.mxu0 0.0
      %3902 = vmatprep.subr.mxu0 0.0
      %3903 = vmatpush1.msra.mxu0 0.0
      %3904 = vmatprep.subr.mxu0 0.0
      %3905 = vmatpush1.msra.mxu0 0.0
      %3906 = vmatprep.subr.mxu0 0.0
      %3907 = vmatpush1.msra.mxu0 0.0
      %3908 = vmatprep.subr.mxu0 0.0
      %3909 = vmatpush1.msra.mxu0 0.0
      %3910 = vmatprep.subr.mxu0 0.0
      %3911 = vmatpush1.msra.mxu0 0.0
      %3912 = vmatprep.subr.mxu0 0.0
      %3913 = vmatpush1.msra.mxu0 0.0
      %3914 = vmatprep.subr.mxu0 0.0
      %3915 = vmatpush1.msra.mxu0 0.0
      %3916 = vmatprep.mubr.f32.mxu0 0.0
      %v3917 = vand.u32 %v3751, 4294901760
      %3918 = vmatmul.mubr.f32.gmra.mrb[0].mxu0 %v3917
      %v3919 = vpop.f32.mrb[0].mxu0
      %v3920 = vadd.f32 %v3829, %v3919
      %v3921 = vpop.f32.mrb[0].mxu0
      %3922 = vdwg.mxu0
      %3923 = vmatprep.subr.mxu0 0.0
      %v3924 = vand.u32 %v3738, 4294901760
      %v3925 = vsub.f32 %v3738, %v3924
      %3926 = vmatpush1.msra.mxu0 %v3925
      %3927 = vmatprep.subr.mxu0 0.0
      %v3928 = vand.u32 %v3739, 4294901760
      %v3929 = vsub.f32 %v3739, %v3928
      %3930 = vmatpush1.msra.mxu0 %v3929
      %3931 = vmatprep.subr.mxu0 0.0
      %v3932 = vand.u32 %v3740, 4294901760
      %v3933 = vsub.f32 %v3740, %v3932
      %3934 = vmatpush1.msra.mxu0 %v3933
      %3935 = vmatprep.subr.mxu0 0.0
      %v3936 = vand.u32 %v3741, 4294901760
      %v3937 = vsub.f32 %v3741, %v3936
      %3938 = vmatpush1.msra.mxu0 %v3937
      %3939 = vmatprep.subr.mxu0 0.0
      %3940 = vmatpush1.msra.mxu0 0.0
      %3941 = vmatprep.subr.mxu0 0.0
      %3942 = vmatpush1.msra.mxu0 0.0
      %3943 = vmatprep.subr.mxu0 0.0
      %3944 = vmatpush1.msra.mxu0 0.0
      %3945 = vmatprep.subr.mxu0 0.0
      %3946 = vmatpush1.msra.mxu0 0.0
      %3947 = vmatprep.subr.mxu0 0.0
      %3948 = vmatpush1.msra.mxu0 0.0
      %3949 = vmatprep.subr.mxu0 0.0
      %3950 = vmatpush1.msra.mxu0 0.0
      %3951 = vmatprep.subr.mxu0 0.0
      %3952 = vmatpush1.msra.mxu0 0.0
      %3953 = vmatprep.subr.mxu0 0.0
      %3954 = vmatpush1.msra.mxu0 0.0
      %3955 = vmatprep.subr.mxu0 0.0
      %3956 = vmatpush1.msra.mxu0 0.0
      %3957 = vmatprep.subr.mxu0 0.0
      %3958 = vmatpush1.msra.mxu0 0.0
      %3959 = vmatprep.subr.mxu0 0.0
      %3960 = vmatpush1.msra.mxu0 0.0
      %3961 = vmatprep.subr.mxu0 0.0
      %3962 = vmatpush1.msra.mxu0 0.0
      %3963 = vmatprep.subr.mxu0 0.0
      %3964 = vmatpush1.msra.mxu0 0.0
      %3965 = vmatprep.subr.mxu0 0.0
      %3966 = vmatpush1.msra.mxu0 0.0
      %3967 = vmatprep.subr.mxu0 0.0
      %3968 = vmatpush1.msra.mxu0 0.0
      %3969 = vmatprep.subr.mxu0 0.0
      %3970 = vmatpush1.msra.mxu0 0.0
      %3971 = vmatprep.subr.mxu0 0.0
      %3972 = vmatpush1.msra.mxu0 0.0
      %3973 = vmatprep.subr.mxu0 0.0
      %3974 = vmatpush1.msra.mxu0 0.0
      %3975 = vmatprep.subr.mxu0 0.0
      %3976 = vmatpush1.msra.mxu0 0.0
      %3977 = vmatprep.subr.mxu0 0.0
      %3978 = vmatpush1.msra.mxu0 0.0
      %3979 = vmatprep.subr.mxu0 0.0
      %3980 = vmatpush1.msra.mxu0 0.0
      %3981 = vmatprep.subr.mxu0 0.0
      %3982 = vmatpush1.msra.mxu0 0.0
      %3983 = vmatprep.subr.mxu0 0.0
      %3984 = vmatpush1.msra.mxu0 0.0
      %3985 = vmatprep.subr.mxu0 0.0
      %3986 = vmatpush1.msra.mxu0 0.0
      %3987 = vmatprep.subr.mxu0 0.0
      %3988 = vmatpush1.msra.mxu0 0.0
      %3989 = vmatprep.subr.mxu0 0.0
      %3990 = vmatpush1.msra.mxu0 0.0
      %3991 = vmatprep.subr.mxu0 0.0
      %3992 = vmatpush1.msra.mxu0 0.0
      %3993 = vmatprep.subr.mxu0 0.0
      %3994 = vmatpush1.msra.mxu0 0.0
      %3995 = vmatprep.mubr.f32.mxu0 0.0
      %v3996 = vand.u32 %v3751, 4294901760
      %v3997 = vsub.f32 %v3751, %v3996
      %3998 = vmatmul.mubr.f32.gmra.mrb[0].mxu0 %v3997
      %v3999 = vpop.f32.mrb[0].mxu0
      %v4000 = vadd.f32 %v3920, %v3999
      %v4001 = vpop.f32.mrb[0].mxu0
      %4002 = vdwg.mxu0
      %4003 = vmatprep.subr.mxu0 0.0
      %v4004 = vand.u32 %v3738, 4294901760
      %4005 = vmatpush1.msra.mxu0 %v4004
      %4006 = vmatprep.subr.mxu0 0.0
      %v4007 = vand.u32 %v3739, 4294901760
      %4008 = vmatpush1.msra.mxu0 %v4007
      %4009 = vmatprep.subr.mxu0 0.0
      %v4010 = vand.u32 %v3740, 4294901760
      %4011 = vmatpush1.msra.mxu0 %v4010
      %4012 = vmatprep.subr.mxu0 0.0
      %v4013 = vand.u32 %v3741, 4294901760
      %4014 = vmatpush1.msra.mxu0 %v4013
      %4015 = vmatprep.subr.mxu0 0.0
      %4016 = vmatpush1.msra.mxu0 0.0
      %4017 = vmatprep.subr.mxu0 0.0
      %4018 = vmatpush1.msra.mxu0 0.0
      %4019 = vmatprep.subr.mxu0 0.0
      %4020 = vmatpush1.msra.mxu0 0.0
      %4021 = vmatprep.subr.mxu0 0.0
      %4022 = vmatpush1.msra.mxu0 0.0
      %4023 = vmatprep.subr.mxu0 0.0
      %4024 = vmatpush1.msra.mxu0 0.0
      %4025 = vmatprep.subr.mxu0 0.0
      %4026 = vmatpush1.msra.mxu0 0.0
      %4027 = vmatprep.subr.mxu0 0.0
      %4028 = vmatpush1.msra.mxu0 0.0
      %4029 = vmatprep.subr.mxu0 0.0
      %4030 = vmatpush1.msra.mxu0 0.0
      %4031 = vmatprep.subr.mxu0 0.0
      %4032 = vmatpush1.msra.mxu0 0.0
      %4033 = vmatprep.subr.mxu0 0.0
      %4034 = vmatpush1.msra.mxu0 0.0
      %4035 = vmatprep.subr.mxu0 0.0
      %4036 = vmatpush1.msra.mxu0 0.0
      %4037 = vmatprep.subr.mxu0 0.0
      %4038 = vmatpush1.msra.mxu0 0.0
      %4039 = vmatprep.subr.mxu0 0.0
      %4040 = vmatpush1.msra.mxu0 0.0
      %4041 = vmatprep.subr.mxu0 0.0
      %4042 = vmatpush1.msra.mxu0 0.0
      %4043 = vmatprep.subr.mxu0 0.0
      %4044 = vmatpush1.msra.mxu0 0.0
      %4045 = vmatprep.subr.mxu0 0.0
      %4046 = vmatpush1.msra.mxu0 0.0
      %4047 = vmatprep.subr.mxu0 0.0
      %4048 = vmatpush1.msra.mxu0 0.0
      %4049 = vmatprep.subr.mxu0 0.0
      %4050 = vmatpush1.msra.mxu0 0.0
      %4051 = vmatprep.subr.mxu0 0.0
      %4052 = vmatpush1.msra.mxu0 0.0
      %4053 = vmatprep.subr.mxu0 0.0
      %4054 = vmatpush1.msra.mxu0 0.0
      %4055 = vmatprep.subr.mxu0 0.0
      %4056 = vmatpush1.msra.mxu0 0.0
      %4057 = vmatprep.subr.mxu0 0.0
      %4058 = vmatpush1.msra.mxu0 0.0
      %4059 = vmatprep.subr.mxu0 0.0
      %4060 = vmatpush1.msra.mxu0 0.0
      %4061 = vmatprep.subr.mxu0 0.0
      %4062 = vmatpush1.msra.mxu0 0.0
      %4063 = vmatprep.subr.mxu0 0.0
      %4064 = vmatpush1.msra.mxu0 0.0
      %4065 = vmatprep.subr.mxu0 0.0
      %4066 = vmatpush1.msra.mxu0 0.0
      %4067 = vmatprep.subr.mxu0 0.0
      %4068 = vmatpush1.msra.mxu0 0.0
      %4069 = vmatprep.subr.mxu0 0.0
      %4070 = vmatpush1.msra.mxu0 0.0
      %4071 = vmatprep.mubr.f32.mxu0 0.0
      %v4072 = vand.u32 %v3751, 4294901760
      %v4073 = vsub.f32 %v3751, %v4072
      %v4074 = vand.u32 %v4073, 4294901760
      %4075 = vmatmul.mubr.f32.gmra.mrb[0].mxu0 %v4074
      %v4076 = vpop.f32.mrb[0].mxu0
      %v4077 = vadd.f32 %v4000, %v4076
      %v4078 = vpop.f32.mrb[0].mxu0
      %4079 = vdwg.mxu0
      %4080 = vmatprep.subr.mxu0 0.0
      %v4081 = vand.u32 %v3738, 4294901760
      %v4082 = vsub.f32 %v3738, %v4081
      %v4083 = vand.u32 %v4082, 4294901760
      %4084 = vmatpush1.msra.mxu0 %v4083
      %4085 = vmatprep.subr.mxu0 0.0
      %v4086 = vand.u32 %v3739, 4294901760
      %v4087 = vsub.f32 %v3739, %v4086
      %v4088 = vand.u32 %v4087, 4294901760
      %4089 = vmatpush1.msra.mxu0 %v4088
      %4090 = vmatprep.subr.mxu0 0.0
      %v4091 = vand.u32 %v3740, 4294901760
      %v4092 = vsub.f32 %v3740, %v4091
      %v4093 = vand.u32 %v4092, 4294901760
      %4094 = vmatpush1.msra.mxu0 %v4093
      %4095 = vmatprep.subr.mxu0 0.0
      %v4096 = vand.u32 %v3741, 4294901760
      %v4097 = vsub.f32 %v3741, %v4096
      %v4098 = vand.u32 %v4097, 4294901760
      %4099 = vmatpush1.msra.mxu0 %v4098
      %4100 = vmatprep.subr.mxu0 0.0
      %4101 = vmatpush1.msra.mxu0 0.0
      %4102 = vmatprep.subr.mxu0 0.0
      %4103 = vmatpush1.msra.mxu0 0.0
      %4104 = vmatprep.subr.mxu0 0.0
      %4105 = vmatpush1.msra.mxu0 0.0
      %4106 = vmatprep.subr.mxu0 0.0
      %4107 = vmatpush1.msra.mxu0 0.0
      %4108 = vmatprep.subr.mxu0 0.0
      %4109 = vmatpush1.msra.mxu0 0.0
      %4110 = vmatprep.subr.mxu0 0.0
      %4111 = vmatpush1.msra.mxu0 0.0
      %4112 = vmatprep.subr.mxu0 0.0
      %4113 = vmatpush1.msra.mxu0 0.0
      %4114 = vmatprep.subr.mxu0 0.0
      %4115 = vmatpush1.msra.mxu0 0.0
      %4116 = vmatprep.subr.mxu0 0.0
      %4117 = vmatpush1.msra.mxu0 0.0
      %4118 = vmatprep.subr.mxu0 0.0
      %4119 = vmatpush1.msra.mxu0 0.0
      %4120 = vmatprep.subr.mxu0 0.0
      %4121 = vmatpush1.msra.mxu0 0.0
      %4122 = vmatprep.subr.mxu0 0.0
      %4123 = vmatpush1.msra.mxu0 0.0
      %4124 = vmatprep.subr.mxu0 0.0
      %4125 = vmatpush1.msra.mxu0 0.0
      %4126 = vmatprep.subr.mxu0 0.0
      %4127 = vmatpush1.msra.mxu0 0.0
      %4128 = vmatprep.subr.mxu0 0.0
      %4129 = vmatpush1.msra.mxu0 0.0
      %4130 = vmatprep.subr.mxu0 0.0
      %4131 = vmatpush1.msra.mxu0 0.0
      %4132 = vmatprep.subr.mxu0 0.0
      %4133 = vmatpush1.msra.mxu0 0.0
      %4134 = vmatprep.subr.mxu0 0.0
      %4135 = vmatpush1.msra.mxu0 0.0
      %4136 = vmatprep.subr.mxu0 0.0
      %4137 = vmatpush1.msra.mxu0 0.0
      %4138 = vmatprep.subr.mxu0 0.0
      %4139 = vmatpush1.msra.mxu0 0.0
      %4140 = vmatprep.subr.mxu0 0.0
      %4141 = vmatpush1.msra.mxu0 0.0
      %4142 = vmatprep.subr.mxu0 0.0
      %4143 = vmatpush1.msra.mxu0 0.0
      %4144 = vmatprep.subr.mxu0 0.0
      %4145 = vmatpush1.msra.mxu0 0.0
      %4146 = vmatprep.subr.mxu0 0.0
      %4147 = vmatpush1.msra.mxu0 0.0
      %4148 = vmatprep.subr.mxu0 0.0
      %4149 = vmatpush1.msra.mxu0 0.0
      %4150 = vmatprep.subr.mxu0 0.0
      %4151 = vmatpush1.msra.mxu0 0.0
      %4152 = vmatprep.subr.mxu0 0.0
      %4153 = vmatpush1.msra.mxu0 0.0
      %4154 = vmatprep.subr.mxu0 0.0
      %4155 = vmatpush1.msra.mxu0 0.0
      %4156 = vmatprep.mubr.f32.mxu0 0.0
      %v4157 = vand.u32 %v3751, 4294901760
      %4158 = vmatmul.mubr.f32.gmra.mrb[0].mxu0 %v4157
      %v4159 = vpop.f32.mrb[0].mxu0
      %v4160 = vadd.f32 %v4077, %v4159
      %v4161 = vpop.f32.mrb[0].mxu0
      %4162 = vdwg.mxu0
      %4163 = vmatprep.subr.mxu0 0.0
      %v4164 = vand.u32 %v3738, 4294901760
      %4165 = vmatpush1.msra.mxu0 %v4164
      %4166 = vmatprep.subr.mxu0 0.0
      %v4167 = vand.u32 %v3739, 4294901760
      %4168 = vmatpush1.msra.mxu0 %v4167
      %4169 = vmatprep.subr.mxu0 0.0
      %v4170 = vand.u32 %v3740, 4294901760
      %4171 = vmatpush1.msra.mxu0 %v4170
      %4172 = vmatprep.subr.mxu0 0.0
      %v4173 = vand.u32 %v3741, 4294901760
      %4174 = vmatpush1.msra.mxu0 %v4173
      %4175 = vmatprep.subr.mxu0 0.0
      %4176 = vmatpush1.msra.mxu0 0.0
      %4177 = vmatprep.subr.mxu0 0.0
      %4178 = vmatpush1.msra.mxu0 0.0
      %4179 = vmatprep.subr.mxu0 0.0
      %4180 = vmatpush1.msra.mxu0 0.0
      %4181 = vmatprep.subr.mxu0 0.0
      %4182 = vmatpush1.msra.mxu0 0.0
      %4183 = vmatprep.subr.mxu0 0.0
      %4184 = vmatpush1.msra.mxu0 0.0
      %4185 = vmatprep.subr.mxu0 0.0
      %4186 = vmatpush1.msra.mxu0 0.0
      %4187 = vmatprep.subr.mxu0 0.0
      %4188 = vmatpush1.msra.mxu0 0.0
      %4189 = vmatprep.subr.mxu0 0.0
      %4190 = vmatpush1.msra.mxu0 0.0
      %4191 = vmatprep.subr.mxu0 0.0
      %4192 = vmatpush1.msra.mxu0 0.0
      %4193 = vmatprep.subr.mxu0 0.0
      %4194 = vmatpush1.msra.mxu0 0.0
      %4195 = vmatprep.subr.mxu0 0.0
      %4196 = vmatpush1.msra.mxu0 0.0
      %4197 = vmatprep.subr.mxu0 0.0
      %4198 = vmatpush1.msra.mxu0 0.0
      %4199 = vmatprep.subr.mxu0 0.0
      %4200 = vmatpush1.msra.mxu0 0.0
      %4201 = vmatprep.subr.mxu0 0.0
      %4202 = vmatpush1.msra.mxu0 0.0
      %4203 = vmatprep.subr.mxu0 0.0
      %4204 = vmatpush1.msra.mxu0 0.0
      %4205 = vmatprep.subr.mxu0 0.0
      %4206 = vmatpush1.msra.mxu0 0.0
      %4207 = vmatprep.subr.mxu0 0.0
      %4208 = vmatpush1.msra.mxu0 0.0
      %4209 = vmatprep.subr.mxu0 0.0
      %4210 = vmatpush1.msra.mxu0 0.0
      %4211 = vmatprep.subr.mxu0 0.0
      %4212 = vmatpush1.msra.mxu0 0.0
      %4213 = vmatprep.subr.mxu0 0.0
      %4214 = vmatpush1.msra.mxu0 0.0
      %4215 = vmatprep.subr.mxu0 0.0
      %4216 = vmatpush1.msra.mxu0 0.0
      %4217 = vmatprep.subr.mxu0 0.0
      %4218 = vmatpush1.msra.mxu0 0.0
      %4219 = vmatprep.subr.mxu0 0.0
      %4220 = vmatpush1.msra.mxu0 0.0
      %4221 = vmatprep.subr.mxu0 0.0
      %4222 = vmatpush1.msra.mxu0 0.0
      %4223 = vmatprep.subr.mxu0 0.0
      %4224 = vmatpush1.msra.mxu0 0.0
      %4225 = vmatprep.subr.mxu0 0.0
      %4226 = vmatpush1.msra.mxu0 0.0
      %4227 = vmatprep.subr.mxu0 0.0
      %4228 = vmatpush1.msra.mxu0 0.0
      %4229 = vmatprep.subr.mxu0 0.0
      %4230 = vmatpush1.msra.mxu0 0.0
      %4231 = vmatprep.mubr.f32.mxu0 0.0
      %v4232 = vand.u32 %v3751, 4294901760
      %4233 = vmatmul.mubr.f32.gmra.mrb[0].mxu0 %v4232
      %v4234 = vpop.f32.mrb[0].mxu0
      %v4235 = vadd.f32 %v4160, %v4234
      %v4236 = vpop.f32.mrb[0].mxu0
      %4237 = vdwg.mxu0
      %vm4238 = vcmask 257024
      %4239 = vst.msk [vmem:[#allocation4] sm:$0xf] %vm4238, %v4235
    $region53: #{tpu_custom_call.1} parent=1 // pred_fallthru
      _
    // Predicated region
    $region54: #{tpu_custom_call.1} parent=1 // pred_check
      _
    $region55: #{tpu_custom_call.1} parent=1 // pred_check_branch
      %4241 = sbr.rel (0) target = $region57
    $region56: #{tpu_custom_call.1} parent=1 // pred_region
      %s4243 = ssub.s32 64, 64
      %4244 = vsyncadd [#allocation5], %s4243
      %s4246 = sshll.u32 [#allocation4], 4
      %s4247 = int_to_ptr.vmem [resolvable:$true] %s4246
      %4249 = dma.vmem_to_hbm [thread:$0]  %s4247, 64, %s11, [#allocation5]
    $region57: #{tpu_custom_call.1} parent=1 // pred_fallthru
      _
    // Predicated region
    $region58: #{tpu_custom_call.1} parent=1 // pred_check
      _
    $region59: #{tpu_custom_call.1} parent=1 // pred_check_branch
      %4251 = sbr.rel (0) target = $region61
    $region60: #{tpu_custom_call.1} parent=1 // pred_region
      %4252 = dma.done [#allocation5], 64
    $region61: #{tpu_custom_call.1} parent=1 // pred_fallthru
      _
    %4253 = vsyncpa [#allocation5], 1

</llo_original>
